<compile_context>
chip_gen: v7x
topology: tpu7x:2x2x1
jax: 0.10.0
libtpu: 0.0.40
codegen_flags: <defaults>
</compile_context>

<pallas_src>
import functools

import jax
import jax.numpy as jnp
import numpy as np
from jax import lax
from jax.experimental import pallas as pl
from jax.experimental.pallas import tpu as pltpu

LRELU_SLOPE = 0.1
KERNEL_SIZE = 3
DILATIONS = (1, 3, 5)

# Cumulative one-sided receptive field of the 6-conv chain: (1+1)+(3+1)+(5+1) = 12.
_RECEPTIVE_FIELD = sum(((KERNEL_SIZE - 1) // 2) * (d + 1) for d in DILATIONS)
HALO = 16                      # halo rows on each side of a time tile

# Static safety margins (a future change to DILATIONS/KERNEL_SIZE must keep these true).
assert KERNEL_SIZE == 3, "tap math below assumes kernel_size == 3"
assert HALO >= _RECEPTIVE_FIELD, "HALO must cover the chain's one-sided receptive field"
assert HALO % 8 == 0, "HALO must be sublane aligned"

_TSTEP = 2 * HALO              # t_tile granularity (so the halo tile offset is a block index)


def _round_up(n, m):
    return ((n + m - 1) // m) * m


def _leaky_relu(x):
    return jnp.where(x >= 0, x, LRELU_SLOPE * x)


# ---------------------------------------------------------------------------
# Kernel
# ---------------------------------------------------------------------------
def _resblock1_kernel(*refs, t_tile, t_orig, has_mask, fuse_taps, mxu_dtype):
    """One grid step == one (batch, time-tile) pair.

    The overlapping (TP, C) window, TP = t_tile + 2*HALO, arrives as two auto-pipelined
    Blocked tiles of the SAME halo-padded HBM array (no windows materialized in HBM):
      xa_ref : (1, t_tile, C)   padded rows [t*t_tile, (t+1)*t_tile)
      xb_ref : (1, 2*HALO, C)   padded rows [(t+1)*t_tile, (t+1)*t_tile + 2*HALO)
    ma_ref/mb_ref : same tiling of the zero-extended user mask (masked variant only)
    w1_ref : (3, 3C, C) fused or (3, 3, C, C) unfused convs1 weights (mxu_dtype)
    b1_ref : (3, 1, C)  convs1 biases (f32);  w2_ref / b2_ref analogous for convs2
    out_ref: (1, t_tile, C) central rows of the window
    """
    if has_mask:
        (xa_ref, xb_ref, ma_ref, mb_ref,
         w1_ref, b1_ref, w2_ref, b2_ref, out_ref) = refs
    else:
        xa_ref, xb_ref, w1_ref, b1_ref, w2_ref, b2_ref, out_ref = refs

    TP = t_tile + 2 * HALO
    C = xa_ref.shape[-1]

    # Full overlapping window as an f32 value (residual carried in f32).
    x = jnp.concatenate([xa_ref[0], xb_ref[0]], axis=0).astype(jnp.float32)    # (TP, C)

    # The reference's per-conv zero padding == zero everything outside the valid global
    # time range before every conv.  Build the (TP, C) mask ONCE (broadcasts are not
    # CSE'd by JAX) and reuse it at all six pre-conv sites.
    if has_mask:
        m = jnp.concatenate([ma_ref[0], mb_ref[0]], axis=0).astype(jnp.float32)  # (TP, 1)
    else:
        g = jax.lax.broadcasted_iota(jnp.int32, (TP, 1), 0) + (
            pl.program_id(1) * t_tile - HALO)
        m = ((g >= 0) & (g < t_orig)).astype(jnp.float32)
    m_b = jnp.broadcast_to(m, (TP, C))
    # TODO(synk): for has_mask=False, fully interior tiles (the vast majority for long T)
    # could skip the six mask multiplies behind a "tile fully interior" cond.

    def dilated_conv(xt, w_ref, b_ref, layer, dil):
        # Tap shifts go through the XLU (pltpu.roll) instead of a scratch store + two
        # misaligned shifted reloads.  Wrapped rows are garbage, but garbage only grows
        # by the receptive field (12) <= HALO (16) from each window edge, so it never
        # reaches the central output rows.
        a_m = pltpu.roll(xt, dil, 0)          # row i <- xt[i - dil]  (tap 0)
        a_p = pltpu.roll(xt, TP - dil, 0)     # row i <- xt[i + dil]  (tap 2)
        if fuse_taps:
            # Single (TP, 3C) @ (3C, C) MXU matmul per conv; only used when C % 128 == 0
            # so the lane concatenation is vreg-aligned.
            a3 = jnp.concatenate([a_m, xt, a_p], axis=1).astype(mxu_dtype)
            acc = jnp.dot(a3, w_ref[layer], preferred_element_type=jnp.float32)
        else:
            acc = jnp.dot(xt.astype(mxu_dtype), w_ref[layer, 1],
                          preferred_element_type=jnp.float32)
            acc = acc + jnp.dot(a_m.astype(mxu_dtype), w_ref[layer, 0],
                                preferred_element_type=jnp.float32)
            acc = acc + jnp.dot(a_p.astype(mxu_dtype), w_ref[layer, 2],
                                preferred_element_type=jnp.float32)
        return acc + b_ref[layer]             # (TP, C) f32

    for i, dil in enumerate(DILATIONS):
        xt = _leaky_relu(x) * m_b
        xt = dilated_conv(xt, w1_ref, b1_ref, i, dil)
        xt = _leaky_relu(xt) * m_b
        xt = dilated_conv(xt, w2_ref, b2_ref, i, 1)
        x = x + xt

    if has_mask:
        x = x * m_b

    out_ref[0] = x[HALO:HALO + t_tile, :].astype(out_ref.dtype)


# ---------------------------------------------------------------------------
# Generation-aware VMEM budgeting
# ---------------------------------------------------------------------------
@functools.lru_cache(maxsize=None)
def _vmem_capacity_bytes():
    # 128 MiB on v5e/v6e, 64 MiB per TensorCore on v7x; conservative fallback if the
    # query is unavailable.
    try:
        return int(pltpu.get_tpu_info().vmem_capacity_bytes)
    except Exception:
        return 64 * 1024 * 1024


def _vmem_estimate(C, t_tile, has_mask, weight_buffers):
    cp = _round_up(max(C, 128), 128)          # lane dim pads to 128 in VMEM
    c8 = _round_up(max(C, 8), 8)
    tp = t_tile + 2 * HALO
    est = 2 * t_tile * cp * 4                 # input center tile, double-buffered (f32)
    est += 2 * (2 * HALO) * cp * 4            # input halo tile, double-buffered
    est += 2 * t_tile * cp * 4                # output tile, double-buffered (f32)
    if has_mask:
        est += 2 * tp * 128 * 4               # mask tiles (lane-padded)
    est += weight_buffers * (2 * 3 * KERNEL_SIZE * c8 * cp * 2   # w1 + w2 (bf16)
                             + 2 * 3 * 8 * cp * 4)               # b1 + b2 (f32)
    est += 8 * tp * cp * 4                    # live f32/bf16 temporaries of the chain
    return est


def _choose_t_tile(T, C, has_mask, budget, weight_buffers):
    t = min(2048, _round_up(T, _TSTEP))
    while t > _TSTEP and _vmem_estimate(C, t, has_mask, weight_buffers) > budget:
        t = _round_up(t // 2, _TSTEP)
    return max(_TSTEP, t)


def _vmem_limit_bytes(est):
    cap = _vmem_capacity_bytes()
    return int(min(max(est * 3 // 2, 32 * 1024 * 1024), cap * 3 // 4))


# ---------------------------------------------------------------------------
# One-time capability probe for single-buffered (constant index map) weights.
# ---------------------------------------------------------------------------
@functools.lru_cache(maxsize=None)
def _buffered_supported():
    """Compile a trivial 2-step kernel once to check BlockSpec(pipeline_mode=Buffered(1)).

    Cached, so the real kernel build never needs a silent, error-masking try/except.
    """
    try:
        def _copy(x_ref, o_ref):
            o_ref[...] = x_ref[...]
        out = pl.pallas_call(
            _copy,
            out_shape=jax.ShapeDtypeStruct((16, 128), jnp.float32),
            grid=(2,),
            in_specs=[pl.BlockSpec((8, 128), lambda i: (0, 0),
                                   pipeline_mode=pl.Buffered(1))],
            out_specs=pl.BlockSpec((8, 128), lambda i: (i, 0)),
        )(jnp.zeros((8, 128), jnp.float32))
        jax.block_until_ready(out)
        return True
    except Exception:
        return False


# ---------------------------------------------------------------------------
# pallas_call builder + wrappers
# ---------------------------------------------------------------------------
def _resblock1_call(xp, mp, w1, b1, w2, b2, *, t_tile, t_orig, out_dtype,
                    fuse_taps, mxu_dtype, buffered_weights, vmem_limit):
    B, rows, C = xp.shape
    nt = (rows - 2 * HALO) // t_tile
    has_mask = mp is not None
    ratio = t_tile // (2 * HALO)              # halo-tile block index multiplier

    def const_spec(shape):
        zeros = (0,) * len(shape)
        kw = {"pipeline_mode": pl.Buffered(1)} if buffered_weights else {}
        return pl.BlockSpec(shape, lambda b, t, _z=zeros: _z, **kw)

    def center_spec(last):
        return pl.BlockSpec((1, t_tile, last), lambda b, t: (b, t, 0))

    def halo_spec(last):
        return pl.BlockSpec((1, 2 * HALO, last), lambda b, t: (b, (t + 1) * ratio, 0))

    in_specs = [center_spec(C), halo_spec(C)]
    inputs = [xp, xp]                         # same HBM buffer, two tilings (no copy)
    if has_mask:
        in_specs += [center_spec(1), halo_spec(1)]
        inputs += [mp, mp]
    in_specs += [const_spec(w1.shape), const_spec(b1.shape),
                 const_spec(w2.shape), const_spec(b2.shape)]
    inputs += [w1, b1, w2, b2]

    kernel = functools.partial(
        _resblock1_kernel, t_tile=t_tile, t_orig=t_orig, has_mask=has_mask,
        fuse_taps=fuse_taps, mxu_dtype=mxu_dtype)

    return pl.pallas_call(
        kernel,
        out_shape=jax.ShapeDtypeStruct((B, nt * t_tile, C), out_dtype),
        grid_spec=pltpu.PrefetchScalarGridSpec(
            num_scalar_prefetch=0,
            grid=(B, nt),
            in_specs=in_specs,
            out_specs=pl.BlockSpec((1, t_tile, C), lambda b, t: (b, t, 0)),
        ),
        compiler_params=pltpu.CompilerParams(
            dimension_semantics=("parallel", "parallel"),   # fully independent tiles
            vmem_limit_bytes=vmem_limit,
        ),
    )(*inputs)


def resblock1_forward_ntc(x_ntc, params, x_mask_ntc=None, t_tile=None,
                          mxu_dtype=jnp.bfloat16):
    """Channels-last entry point: x_ntc (B, T, C), optional x_mask_ntc (B, T, 1).

    Weights/activations feed the MXU in `mxu_dtype` (bf16 default, ~1e-2 relative error
    vs the f32 PyTorch reference; pass mxu_dtype=jnp.float32 for a full-precision path).
    """
    w1, b1, w2, b2 = params
    B, T, C = x_ntc.shape
    has_mask = x_mask_ntc is not None

    weight_buffers = 1 if _buffered_supported() else 2
    budget = _vmem_capacity_bytes() // 2
    if t_tile is None:
        t_tile = _choose_t_tile(T, C, has_mask, budget, weight_buffers)
    t_tile = max(_TSTEP, _round_up(min(t_tile, _round_up(T, _TSTEP)), _TSTEP))
    nt = -(-T // t_tile)
    t_pad = nt * t_tile

    # HALO-pad the time axis once (a single HBM pass, fused by XLA with the transpose in
    # the NCT wrapper).  Overlapping windows are NOT materialized: the kernel reads each
    # input row at most twice (its own center tile + the previous window's halo tile).
    xp = jnp.pad(x_ntc, ((0, 0), (HALO, HALO + t_pad - T), (0, 0)))
    if has_mask:
        mp = jnp.pad(x_mask_ntc.astype(jnp.float32),
                     ((0, 0), (HALO, HALO + t_pad - T), (0, 0)))
    else:
        mp = None

    # Fused (TP, 3C) @ (3C, C) tap matmul when the lane concatenation is vreg-aligned.
    fuse_taps = (C % 128 == 0)
    if fuse_taps:
        w1k = w1.reshape(3, KERNEL_SIZE * C, C).astype(mxu_dtype)   # tap-major rows
        w2k = w2.reshape(3, KERNEL_SIZE * C, C).astype(mxu_dtype)
    else:
        w1k = w1.astype(mxu_dtype)
        w2k = w2.astype(mxu_dtype)
    b1f = b1.astype(jnp.float32)
    b2f = b2.astype(jnp.float32)

    est = _vmem_estimate(C, t_tile, has_mask, weight_buffers)
    out = _resblock1_call(
        xp, mp, w1k, b1f, w2k, b2f,
        t_tile=t_tile, t_orig=T, out_dtype=x_ntc.dtype,
        fuse_taps=fuse_taps, mxu_dtype=mxu_dtype,
        buffered_weights=(weight_buffers == 1),
        vmem_limit=_vmem_limit_bytes(est))
    return out[:, :T, :]


def resblock1_forward(x_nct, params, x_mask=None, t_tile=None, mxu_dtype=jnp.bfloat16):
    """x_nct: (B, C, T) float32, x_mask: optional (B, 1, T). Returns (B, C, T).

    The NCT<->NTC transposes here are fused by XLA with the halo pad / final slice (one
    HBM pass each).  When stacking several ResBlocks keep activations channels-last and
    call resblock1_forward_ntc directly to avoid them entirely.
    """
    # TODO(synk): add a time-on-lanes kernel variant for C < 128 so the NCT layout needs
    # no flip at all and the output store is lane-dense.
    x_ntc = jnp.transpose(x_nct, (0, 2, 1))
    m_ntc = jnp.transpose(x_mask, (0, 2, 1)) if x_mask is not None else None
    out = resblock1_forward_ntc(x_ntc, params, m_ntc, t_tile=t_tile, mxu_dtype=mxu_dtype)
    return jnp.transpose(out, (0, 2, 1))


# ---------------------------------------------------------------------------
# Pure-JAX reference (NCT layout, mirrors the PyTorch forward) for validation.
# ---------------------------------------------------------------------------
def _conv1d_ref(x_nct, w_kio, b_o, dil):
    # w_kio: (K, Cin, Cout) -> torch OIH layout (Cout, Cin, K)
    w_oih = jnp.transpose(w_kio, (2, 1, 0))
    y = lax.conv_general_dilated(
        x_nct, w_oih,
        window_strides=(1,),
        padding=[(dil, dil)],
        rhs_dilation=(dil,),
        dimension_numbers=("NCH", "OIH", "NCH"),
    )
    return y + b_o[None, :, None]


def resblock1_reference(x_nct, params, x_mask=None):
    w1, b1, w2, b2 = params
    x = x_nct
    for i in range(3):
        xt = jnp.where(x >= 0, x, LRELU_SLOPE * x)
        if x_mask is not None:
            xt = xt * x_mask
        xt = _conv1d_ref(xt, w1[i], b1[i, 0], DILATIONS[i])
        xt = jnp.where(xt >= 0, xt, LRELU_SLOPE * xt)
        if x_mask is not None:
            xt = xt * x_mask
        xt = _conv1d_ref(xt, w2[i], b2[i, 0], 1)
        x = xt + x
    if x_mask is not None:
        x = x * x_mask
    return x


def init_params(key, channels):
    # Deterministic synthetic init (mimics init_weights: N(0, 0.01) for weights).
    # weight_norm is folded into the plain conv weights (remove_weight_norm semantics).
    k1, k2, k3, k4 = jax.random.split(key, 4)
    w1 = 0.01 * jax.random.normal(k1, (3, KERNEL_SIZE, channels, channels), jnp.float32)
    w2 = 0.01 * jax.random.normal(k2, (3, KERNEL_SIZE, channels, channels), jnp.float32)
    b1 = 0.01 * jax.random.normal(k3, (3, 1, channels), jnp.float32)
    b2 = 0.01 * jax.random.normal(k4, (3, 1, channels), jnp.float32)
    return (w1, b1, w2, b2)


if __name__ == "__main__":
    key = jax.random.PRNGKey(0)
    k_x1, k_p1, k_x2, k_p2, k_x3, k_p3 = jax.random.split(key, 6)

    # Test 1: module-default path (x_mask=None), single time tile, tiny channels.
    B, C, T = 2, 4, 16
    x1 = jax.random.normal(k_x1, (B, C, T), jnp.float32)
    params1 = init_params(k_p1, C)
    out1 = jax.block_until_ready(resblock1_forward(x1, params1, x_mask=None))
    ref1 = resblock1_reference(x1, params1, x_mask=None)
    np.testing.assert_allclose(np.asarray(out1), np.asarray(ref1), rtol=2e-2, atol=5e-3)

    # Test 2: masked path with several overlapping time tiles (exercises the halo tiles).
    B2, C2, T2 = 2, 8, 40
    x2 = jax.random.normal(k_x2, (B2, C2, T2), jnp.float32)
    params2 = init_params(k_p2, C2)
    lengths = jnp.array([T2, 29])
    mask2 = (jnp.arange(T2)[None, None, :] < lengths[:, None, None]).astype(jnp.float32)
    out2 = jax.block_until_ready(resblock1_forward(x2, params2, x_mask=mask2, t_tile=32))
    ref2 = resblock1_reference(x2, params2, x_mask=mask2)
    np.testing.assert_allclose(np.asarray(out2), np.asarray(ref2), rtol=2e-2, atol=5e-3)

    # Test 3: lane-aligned channels -> fused (TP, 3C) @ (3C, C) tap matmul, several tiles.
    B3, C3, T3 = 2, 128, 200
    x3 = jax.random.normal(k_x3, (B3, C3, T3), jnp.float32)
    params3 = init_params(k_p3, C3)
    out3 = jax.block_until_ready(resblock1_forward(x3, params3, x_mask=None, t_tile=64))
    ref3 = resblock1_reference(x3, params3, x_mask=None)
    np.testing.assert_allclose(np.asarray(out3), np.asarray(ref3), rtol=2e-2, atol=5e-3)

    print("KERNEL_OK")
</pallas_src>

<mosaic_0001>
module attributes {stable_mosaic.version = 11 : i64} {
  func.func @_copy(%arg0: i32, %arg1: memref<8x128xf32, #tpu.memory_space<vmem>>, %arg2: memref<8x128xf32, #tpu.memory_space<vmem>>) attributes {dimension_semantics = [#tpu.dimension_semantics<arbitrary>], iteration_bounds = array<i64: 2>, scalar_prefetch = 0 : i64, scratch_operands = 0 : i64, tpu.core_type = #tpu.core_type<tc>, window_params = [{pipeline_mode = #tpu.pipeline_mode<synchronous>, transform_indices = @transform_0, window_bounds = array<i64: 8, 128>}, {transform_indices = @transform_1, window_bounds = array<i64: 8, 128>}]} {
    %c0 = arith.constant 0 : index
    %c0_0 = arith.constant 0 : index
    %0 = vector.load %arg1[%c0, %c0_0] : memref<8x128xf32, #tpu.memory_space<vmem>>, vector<8x128xf32>
    %c0_1 = arith.constant 0 : index
    %c0_2 = arith.constant 0 : index
    %1 = vector.load %arg2[%c0_1, %c0_2] : memref<8x128xf32, #tpu.memory_space<vmem>>, vector<8x128xf32>
    tpu.vector_store %arg2[%c0_1, %c0_2], %0 {strides = array<i32>} : memref<8x128xf32, #tpu.memory_space<vmem>>, vector<8x128xf32>,
    return
  }
  func.func @transform_0(%arg0: i32) -> (i32, i32) {
    %c0_i32 = arith.constant 0 : i32
    %c0_i32_0 = arith.constant 0 : i32
    %c0_i32_1 = arith.constant 0 : i32
    return %c0_i32, %c0_i32_0 : i32, i32
  }
  func.func @transform_1(%arg0: i32) -> (i32, i32) {
    %c0_i32 = arith.constant 0 : i32
    %c0_i32_0 = arith.constant 0 : i32
    return %arg0, %c0_i32 : i32, i32
  }
}

module attributes {stable_mosaic.version = 11 : i64} {
  func.func @_resblock1_kernel(%arg0: i32, %arg1: i32, %arg2: memref<1x32x4xf32, #tpu.memory_space<vmem>>, %arg3: memref<1x32x4xf32, #tpu.memory_space<vmem>>, %arg4: memref<3x3x4x4xbf16, #tpu.memory_space<vmem>>, %arg5: memref<3x1x4xf32, #tpu.memory_space<vmem>>, %arg6: memref<3x3x4x4xbf16, #tpu.memory_space<vmem>>, %arg7: memref<3x1x4xf32, #tpu.memory_space<vmem>>, %arg8: memref<1x32x4xf32, #tpu.memory_space<vmem>>) attributes {dimension_semantics = [#tpu.dimension_semantics<parallel>, #tpu.dimension_semantics<parallel>], iteration_bounds = array<i64: 2, 1>, scalar_prefetch = 0 : i64, scratch_operands = 0 : i64, tpu.core_type = #tpu.core_type<tc>, window_params = [{transform_indices = @transform_0, window_bounds = array<i64: 1, 32, 4>}, {transform_indices = @transform_1, window_bounds = array<i64: 1, 32, 4>}, {pipeline_mode = #tpu.pipeline_mode<synchronous>, transform_indices = @transform_2, window_bounds = array<i64: 3, 3, 4, 4>}, {pipeline_mode = #tpu.pipeline_mode<synchronous>, transform_indices = @transform_3, window_bounds = array<i64: 3, 1, 4>}, {pipeline_mode = #tpu.pipeline_mode<synchronous>, transform_indices = @transform_4, window_bounds = array<i64: 3, 3, 4, 4>}, {pipeline_mode = #tpu.pipeline_mode<synchronous>, transform_indices = @transform_5, window_bounds = array<i64: 3, 1, 4>}, {transform_indices = @transform_6, window_bounds = array<i64: 1, 32, 4>}]} {
    %c0 = arith.constant 0 : index
    %c0_0 = arith.constant 0 : index
    %c0_1 = arith.constant 0 : index
    %0 = vector.load %arg2[%c0, %c0_0, %c0_1] : memref<1x32x4xf32, #tpu.memory_space<vmem>>, vector<1x32x4xf32>
    %1 = vector.shape_cast %0 : vector<1x32x4xf32> to vector<32x4xf32>
    %c0_2 = arith.constant 0 : index
    %c0_3 = arith.constant 0 : index
    %c0_4 = arith.constant 0 : index
    %2 = vector.load %arg3[%c0_2, %c0_3, %c0_4] : memref<1x32x4xf32, #tpu.memory_space<vmem>>, vector<1x32x4xf32>
    %3 = vector.shape_cast %2 : vector<1x32x4xf32> to vector<32x4xf32>
    %4 = tpu.concatenate %1, %3 in 0 : vector<32x4xf32>, vector<32x4xf32> -> vector<64x4xf32>
    %5 = tpu.iota {dimensions = array<i32: 0>} : vector<64x1xi32>
    %c32_i32 = arith.constant 32 : i32
    %6 = arith.muli %arg1, %c32_i32 : i32
    %c16_i32 = arith.constant 16 : i32
    %7 = arith.subi %6, %c16_i32 : i32
    %8 = vector.broadcast %7 : i32 to vector<64x1xi32>
    %9 = arith.addi %5, %8 : vector<64x1xi32>
    %c0_i32 = arith.constant 0 : i32
    %10 = vector.broadcast %c0_i32 : i32 to vector<64x1xi32>
    %11 = arith.cmpi sge, %9, %10 : vector<64x1xi32>
    %c16_i32_5 = arith.constant 16 : i32
    %12 = vector.broadcast %c16_i32_5 : i32 to vector<64x1xi32>
    %13 = arith.cmpi slt, %9, %12 : vector<64x1xi32>
    %14 = arith.andi %11, %13 : vector<64x1xi1>
    %15 = arith.extui %14 : vector<64x1xi1> to vector<64x1xi32>
    %16 = arith.sitofp %15 : vector<64x1xi32> to vector<64x1xf32>
    %17 = vector.shape_cast %16 : vector<64x1xf32> to vector<64x1xf32>
    %18 = vector.broadcast %17 : vector<64x1xf32> to vector<64x4xf32>
    %cst = arith.constant 0.000000e+00 : f32
    %19 = vector.broadcast %cst : f32 to vector<64x4xf32>
    %20 = arith.cmpf oge, %4, %19 : vector<64x4xf32>
    %cst_6 = arith.constant 1.000000e-01 : f32
    %21 = vector.broadcast %cst_6 : f32 to vector<64x4xf32>
    %22 = arith.mulf %21, %4 : vector<64x4xf32>
    %23 = arith.select %20, %4, %22 : vector<64x4xi1>, vector<64x4xf32>
    %24 = arith.mulf %23, %18 : vector<64x4xf32>
    %c1_i32 = arith.constant 1 : i32
    %25 = tpu.dynamic_rotate %24 by %c1_i32 dim 0 : vector<64x4xf32>, i32 -> vector<64x4xf32>
    %c63_i32 = arith.constant 63 : i32
    %26 = tpu.dynamic_rotate %24 by %c63_i32 dim 0 : vector<64x4xf32>, i32 -> vector<64x4xf32>
    %27 = arith.truncf %24 : vector<64x4xf32> to vector<64x4xbf16>
    %c0_7 = arith.constant 0 : index
    %c1 = arith.constant 1 : index
    %c0_8 = arith.constant 0 : index
    %c0_9 = arith.constant 0 : index
    %28 = vector.load %arg4[%c0_7, %c1, %c0_8, %c0_9] : memref<3x3x4x4xbf16, #tpu.memory_space<vmem>>, vector<1x1x4x4xbf16>
    %29 = vector.shape_cast %28 : vector<1x1x4x4xbf16> to vector<4x4xbf16>
    %cst_10 = arith.constant dense<0.000000e+00> : vector<64x4xf32>
    %30 = tpu.matmul %27, %29, %cst_10 {dimension_numbers = #tpu.dot_dimension_numbers<[1], [0], [0], [1], [0, 0, 1, 1], [], []>} : vector<64x4xbf16>, vector<4x4xbf16>, vector<64x4xf32> -> vector<64x4xf32>
    %31 = arith.truncf %25 : vector<64x4xf32> to vector<64x4xbf16>
    %c0_11 = arith.constant 0 : index
    %c0_12 = arith.constant 0 : index
    %c0_13 = arith.constant 0 : index
    %c0_14 = arith.constant 0 : index
    %32 = vector.load %arg4[%c0_11, %c0_12, %c0_13, %c0_14] : memref<3x3x4x4xbf16, #tpu.memory_space<vmem>>, vector<1x1x4x4xbf16>
    %33 = vector.shape_cast %32 : vector<1x1x4x4xbf16> to vector<4x4xbf16>
    %cst_15 = arith.constant dense<0.000000e+00> : vector<64x4xf32>
    %34 = tpu.matmul %31, %33, %cst_15 {dimension_numbers = #tpu.dot_dimension_numbers<[1], [0], [0], [1], [0, 0, 1, 1], [], []>} : vector<64x4xbf16>, vector<4x4xbf16>, vector<64x4xf32> -> vector<64x4xf32>
    %35 = arith.addf %30, %34 : vector<64x4xf32>
    %36 = arith.truncf %26 : vector<64x4xf32> to vector<64x4xbf16>
    %c0_16 = arith.constant 0 : index
    %c2 = arith.constant 2 : index
    %c0_17 = arith.constant 0 : index
    %c0_18 = arith.constant 0 : index
    %37 = vector.load %arg4[%c0_16, %c2, %c0_17, %c0_18] : memref<3x3x4x4xbf16, #tpu.memory_space<vmem>>, vector<1x1x4x4xbf16>
    %38 = vector.shape_cast %37 : vector<1x1x4x4xbf16> to vector<4x4xbf16>
    %cst_19 = arith.constant dense<0.000000e+00> : vector<64x4xf32>
    %39 = tpu.matmul %36, %38, %cst_19 {dimension_numbers = #tpu.dot_dimension_numbers<[1], [0], [0], [1], [0, 0, 1, 1], [], []>} : vector<64x4xbf16>, vector<4x4xbf16>, vector<64x4xf32> -> vector<64x4xf32>
    %40 = arith.addf %35, %39 : vector<64x4xf32>
    %c0_20 = arith.constant 0 : index
    %c0_21 = arith.constant 0 : index
    %c0_22 = arith.constant 0 : index
    %41 = vector.load %arg5[%c0_20, %c0_21, %c0_22] : memref<3x1x4xf32, #tpu.memory_space<vmem>>, vector<1x1x4xf32>
    %42 = vector.shape_cast %41 : vector<1x1x4xf32> to vector<1x4xf32>
    %43 = vector.broadcast %42 : vector<1x4xf32> to vector<64x4xf32>
    %44 = arith.addf %40, %43 : vector<64x4xf32>
    %cst_23 = arith.constant 0.000000e+00 : f32
    %45 = vector.broadcast %cst_23 : f32 to vector<64x4xf32>
    %46 = arith.cmpf oge, %44, %45 : vector<64x4xf32>
    %cst_24 = arith.constant 1.000000e-01 : f32
    %47 = vector.broadcast %cst_24 : f32 to vector<64x4xf32>
    %48 = arith.mulf %47, %44 : vector<64x4xf32>
    %49 = arith.select %46, %44, %48 : vector<64x4xi1>, vector<64x4xf32>
    %50 = arith.mulf %49, %18 : vector<64x4xf32>
    %c1_i32_25 = arith.constant 1 : i32
    %51 = tpu.dynamic_rotate %50 by %c1_i32_25 dim 0 : vector<64x4xf32>, i32 -> vector<64x4xf32>
    %c63_i32_26 = arith.constant 63 : i32
    %52 = tpu.dynamic_rotate %50 by %c63_i32_26 dim 0 : vector<64x4xf32>, i32 -> vector<64x4xf32>
    %53 = arith.truncf %50 : vector<64x4xf32> to vector<64x4xbf16>
    %c0_27 = arith.constant 0 : index
    %c1_28 = arith.constant 1 : index
    %c0_29 = arith.constant 0 : index
    %c0_30 = arith.constant 0 : index
    %54 = vector.load %arg6[%c0_27, %c1_28, %c0_29, %c0_30] : memref<3x3x4x4xbf16, #tpu.memory_space<vmem>>, vector<1x1x4x4xbf16>
    %55 = vector.shape_cast %54 : vector<1x1x4x4xbf16> to vector<4x4xbf16>
    %cst_31 = arith.constant dense<0.000000e+00> : vector<64x4xf32>
    %56 = tpu.matmul %53, %55, %cst_31 {dimension_numbers = #tpu.dot_dimension_numbers<[1], [0], [0], [1], [0, 0, 1, 1], [], []>} : vector<64x4xbf16>, vector<4x4xbf16>, vector<64x4xf32> -> vector<64x4xf32>
    %57 = arith.truncf %51 : vector<64x4xf32> to vector<64x4xbf16>
    %c0_32 = arith.constant 0 : index
    %c0_33 = arith.constant 0 : index
    %c0_34 = arith.constant 0 : index
    %c0_35 = arith.constant 0 : index
    %58 = vector.load %arg6[%c0_32, %c0_33, %c0_34, %c0_35] : memref<3x3x4x4xbf16, #tpu.memory_space<vmem>>, vector<1x1x4x4xbf16>
    %59 = vector.shape_cast %58 : vector<1x1x4x4xbf16> to vector<4x4xbf16>
    %cst_36 = arith.constant dense<0.000000e+00> : vector<64x4xf32>
    %60 = tpu.matmul %57, %59, %cst_36 {dimension_numbers = #tpu.dot_dimension_numbers<[1], [0], [0], [1], [0, 0, 1, 1], [], []>} : vector<64x4xbf16>, vector<4x4xbf16>, vector<64x4xf32> -> vector<64x4xf32>
    %61 = arith.addf %56, %60 : vector<64x4xf32>
    %62 = arith.truncf %52 : vector<64x4xf32> to vector<64x4xbf16>
    %c0_37 = arith.constant 0 : index
    %c2_38 = arith.constant 2 : index
    %c0_39 = arith.constant 0 : index
    %c0_40 = arith.constant 0 : index
    %63 = vector.load %arg6[%c0_37, %c2_38, %c0_39, %c0_40] : memref<3x3x4x4xbf16, #tpu.memory_space<vmem>>, vector<1x1x4x4xbf16>
    %64 = vector.shape_cast %63 : vector<1x1x4x4xbf16> to vector<4x4xbf16>
    %cst_41 = arith.constant dense<0.000000e+00> : vector<64x4xf32>
    %65 = tpu.matmul %62, %64, %cst_41 {dimension_numbers = #tpu.dot_dimension_numbers<[1], [0], [0], [1], [0, 0, 1, 1], [], []>} : vector<64x4xbf16>, vector<4x4xbf16>, vector<64x4xf32> -> vector<64x4xf32>
    %66 = arith.addf %61, %65 : vector<64x4xf32>
    %c0_42 = arith.constant 0 : index
    %c0_43 = arith.constant 0 : index
    %c0_44 = arith.constant 0 : index
    %67 = vector.load %arg7[%c0_42, %c0_43, %c0_44] : memref<3x1x4xf32, #tpu.memory_space<vmem>>, vector<1x1x4xf32>
    %68 = vector.shape_cast %67 : vector<1x1x4xf32> to vector<1x4xf32>
    %69 = vector.broadcast %68 : vector<1x4xf32> to vector<64x4xf32>
    %70 = arith.addf %66, %69 : vector<64x4xf32>
    %71 = arith.addf %4, %70 : vector<64x4xf32>
    %cst_45 = arith.constant 0.000000e+00 : f32
    %72 = vector.broadcast %cst_45 : f32 to vector<64x4xf32>
    %73 = arith.cmpf oge, %71, %72 : vector<64x4xf32>
    %cst_46 = arith.constant 1.000000e-01 : f32
    %74 = vector.broadcast %cst_46 : f32 to vector<64x4xf32>
    %75 = arith.mulf %74, %71 : vector<64x4xf32>
    %76 = arith.select %73, %71, %75 : vector<64x4xi1>, vector<64x4xf32>
    %77 = arith.mulf %76, %18 : vector<64x4xf32>
    %c3_i32 = arith.constant 3 : i32
    %78 = tpu.dynamic_rotate %77 by %c3_i32 dim 0 : vector<64x4xf32>, i32 -> vector<64x4xf32>
    %c61_i32 = arith.constant 61 : i32
    %79 = tpu.dynamic_rotate %77 by %c61_i32 dim 0 : vector<64x4xf32>, i32 -> vector<64x4xf32>
    %80 = arith.truncf %77 : vector<64x4xf32> to vector<64x4xbf16>
    %c1_47 = arith.constant 1 : index
    %c1_48 = arith.constant 1 : index
    %c0_49 = arith.constant 0 : index
    %c0_50 = arith.constant 0 : index
    %81 = vector.load %arg4[%c1_47, %c1_48, %c0_49, %c0_50] : memref<3x3x4x4xbf16, #tpu.memory_space<vmem>>, vector<1x1x4x4xbf16>
    %82 = vector.shape_cast %81 : vector<1x1x4x4xbf16> to vector<4x4xbf16>
    %cst_51 = arith.constant dense<0.000000e+00> : vector<64x4xf32>
    %83 = tpu.matmul %80, %82, %cst_51 {dimension_numbers = #tpu.dot_dimension_numbers<[1], [0], [0], [1], [0, 0, 1, 1], [], []>} : vector<64x4xbf16>, vector<4x4xbf16>, vector<64x4xf32> -> vector<64x4xf32>
    %84 = arith.truncf %78 : vector<64x4xf32> to vector<64x4xbf16>
    %c1_52 = arith.constant 1 : index
    %c0_53 = arith.constant 0 : index
    %c0_54 = arith.constant 0 : index
    %c0_55 = arith.constant 0 : index
    %85 = vector.load %arg4[%c1_52, %c0_53, %c0_54, %c0_55] : memref<3x3x4x4xbf16, #tpu.memory_space<vmem>>, vector<1x1x4x4xbf16>
    %86 = vector.shape_cast %85 : vector<1x1x4x4xbf16> to vector<4x4xbf16>
    %cst_56 = arith.constant dense<0.000000e+00> : vector<64x4xf32>
    %87 = tpu.matmul %84, %86, %cst_56 {dimension_numbers = #tpu.dot_dimension_numbers<[1], [0], [0], [1], [0, 0, 1, 1], [], []>} : vector<64x4xbf16>, vector<4x4xbf16>, vector<64x4xf32> -> vector<64x4xf32>
    %88 = arith.addf %83, %87 : vector<64x4xf32>
    %89 = arith.truncf %79 : vector<64x4xf32> to vector<64x4xbf16>
    %c1_57 = arith.constant 1 : index
    %c2_58 = arith.constant 2 : index
    %c0_59 = arith.constant 0 : index
    %c0_60 = arith.constant 0 : index
    %90 = vector.load %arg4[%c1_57, %c2_58, %c0_59, %c0_60] : memref<3x3x4x4xbf16, #tpu.memory_space<vmem>>, vector<1x1x4x4xbf16>
    %91 = vector.shape_cast %90 : vector<1x1x4x4xbf16> to vector<4x4xbf16>
    %cst_61 = arith.constant dense<0.000000e+00> : vector<64x4xf32>
    %92 = tpu.matmul %89, %91, %cst_61 {dimension_numbers = #tpu.dot_dimension_numbers<[1], [0], [0], [1], [0, 0, 1, 1], [], []>} : vector<64x4xbf16>, vector<4x4xbf16>, vector<64x4xf32> -> vector<64x4xf32>
    %93 = arith.addf %88, %92 : vector<64x4xf32>
    %c1_62 = arith.constant 1 : index
    %c0_63 = arith.constant 0 : index
    %c0_64 = arith.constant 0 : index
    %94 = vector.load %arg5[%c1_62, %c0_63, %c0_64] : memref<3x1x4xf32, #tpu.memory_space<vmem>>, vector<1x1x4xf32>
    %95 = vector.shape_cast %94 : vector<1x1x4xf32> to vector<1x4xf32>
    %96 = vector.broadcast %95 : vector<1x4xf32> to vector<64x4xf32>
    %97 = arith.addf %93, %96 : vector<64x4xf32>
    %cst_65 = arith.constant 0.000000e+00 : f32
    %98 = vector.broadcast %cst_65 : f32 to vector<64x4xf32>
    %99 = arith.cmpf oge, %97, %98 : vector<64x4xf32>
    %cst_66 = arith.constant 1.000000e-01 : f32
    %100 = vector.broadcast %cst_66 : f32 to vector<64x4xf32>
    %101 = arith.mulf %100, %97 : vector<64x4xf32>
    %102 = arith.select %99, %97, %101 : vector<64x4xi1>, vector<64x4xf32>
    %103 = arith.mulf %102, %18 : vector<64x4xf32>
    %c1_i32_67 = arith.constant 1 : i32
    %104 = tpu.dynamic_rotate %103 by %c1_i32_67 dim 0 : vector<64x4xf32>, i32 -> vector<64x4xf32>
    %c63_i32_68 = arith.constant 63 : i32
    %105 = tpu.dynamic_rotate %103 by %c63_i32_68 dim 0 : vector<64x4xf32>, i32 -> vector<64x4xf32>
    %106 = arith.truncf %103 : vector<64x4xf32> to vector<64x4xbf16>
    %c1_69 = arith.constant 1 : index
    %c1_70 = arith.constant 1 : index
    %c0_71 = arith.constant 0 : index
    %c0_72 = arith.constant 0 : index
    %107 = vector.load %arg6[%c1_69, %c1_70, %c0_71, %c0_72] : memref<3x3x4x4xbf16, #tpu.memory_space<vmem>>, vector<1x1x4x4xbf16>
    %108 = vector.shape_cast %107 : vector<1x1x4x4xbf16> to vector<4x4xbf16>
    %cst_73 = arith.constant dense<0.000000e+00> : vector<64x4xf32>
    %109 = tpu.matmul %106, %108, %cst_73 {dimension_numbers = #tpu.dot_dimension_numbers<[1], [0], [0], [1], [0, 0, 1, 1], [], []>} : vector<64x4xbf16>, vector<4x4xbf16>, vector<64x4xf32> -> vector<64x4xf32>
    %110 = arith.truncf %104 : vector<64x4xf32> to vector<64x4xbf16>
    %c1_74 = arith.constant 1 : index
    %c0_75 = arith.constant 0 : index
    %c0_76 = arith.constant 0 : index
    %c0_77 = arith.constant 0 : index
    %111 = vector.load %arg6[%c1_74, %c0_75, %c0_76, %c0_77] : memref<3x3x4x4xbf16, #tpu.memory_space<vmem>>, vector<1x1x4x4xbf16>
    %112 = vector.shape_cast %111 : vector<1x1x4x4xbf16> to vector<4x4xbf16>
    %cst_78 = arith.constant dense<0.000000e+00> : vector<64x4xf32>
    %113 = tpu.matmul %110, %112, %cst_78 {dimension_numbers = #tpu.dot_dimension_numbers<[1], [0], [0], [1], [0, 0, 1, 1], [], []>} : vector<64x4xbf16>, vector<4x4xbf16>, vector<64x4xf32> -> vector<64x4xf32>
    %114 = arith.addf %109, %113 : vector<64x4xf32>
    %115 = arith.truncf %105 : vector<64x4xf32> to vector<64x4xbf16>
    %c1_79 = arith.constant 1 : index
    %c2_80 = arith.constant 2 : index
    %c0_81 = arith.constant 0 : index
    %c0_82 = arith.constant 0 : index
    %116 = vector.load %arg6[%c1_79, %c2_80, %c0_81, %c0_82] : memref<3x3x4x4xbf16, #tpu.memory_space<vmem>>, vector<1x1x4x4xbf16>
    %117 = vector.shape_cast %116 : vector<1x1x4x4xbf16> to vector<4x4xbf16>
    %cst_83 = arith.constant dense<0.000000e+00> : vector<64x4xf32>
    %118 = tpu.matmul %115, %117, %cst_83 {dimension_numbers = #tpu.dot_dimension_numbers<[1], [0], [0], [1], [0, 0, 1, 1], [], []>} : vector<64x4xbf16>, vector<4x4xbf16>, vector<64x4xf32> -> vector<64x4xf32>
    %119 = arith.addf %114, %118 : vector<64x4xf32>
    %c1_84 = arith.constant 1 : index
    %c0_85 = arith.constant 0 : index
    %c0_86 = arith.constant 0 : index
    %120 = vector.load %arg7[%c1_84, %c0_85, %c0_86] : memref<3x1x4xf32, #tpu.memory_space<vmem>>, vector<1x1x4xf32>
    %121 = vector.shape_cast %120 : vector<1x1x4xf32> to vector<1x4xf32>
    %122 = vector.broadcast %121 : vector<1x4xf32> to vector<64x4xf32>
    %123 = arith.addf %119, %122 : vector<64x4xf32>
    %124 = arith.addf %71, %123 : vector<64x4xf32>
    %cst_87 = arith.constant 0.000000e+00 : f32
    %125 = vector.broadcast %cst_87 : f32 to vector<64x4xf32>
    %126 = arith.cmpf oge, %124, %125 : vector<64x4xf32>
    %cst_88 = arith.constant 1.000000e-01 : f32
    %127 = vector.broadcast %cst_88 : f32 to vector<64x4xf32>
    %128 = arith.mulf %127, %124 : vector<64x4xf32>
    %129 = arith.select %126, %124, %128 : vector<64x4xi1>, vector<64x4xf32>
    %130 = arith.mulf %129, %18 : vector<64x4xf32>
    %c5_i32 = arith.constant 5 : i32
    %131 = tpu.dynamic_rotate %130 by %c5_i32 dim 0 : vector<64x4xf32>, i32 -> vector<64x4xf32>
    %c59_i32 = arith.constant 59 : i32
    %132 = tpu.dynamic_rotate %130 by %c59_i32 dim 0 : vector<64x4xf32>, i32 -> vector<64x4xf32>
    %133 = arith.truncf %130 : vector<64x4xf32> to vector<64x4xbf16>
    %c2_89 = arith.constant 2 : index
    %c1_90 = arith.constant 1 : index
    %c0_91 = arith.constant 0 : index
    %c0_92 = arith.constant 0 : index
    %134 = vector.load %arg4[%c2_89, %c1_90, %c0_91, %c0_92] : memref<3x3x4x4xbf16, #tpu.memory_space<vmem>>, vector<1x1x4x4xbf16>
    %135 = vector.shape_cast %134 : vector<1x1x4x4xbf16> to vector<4x4xbf16>
    %cst_93 = arith.constant dense<0.000000e+00> : vector<64x4xf32>
    %136 = tpu.matmul %133, %135, %cst_93 {dimension_numbers = #tpu.dot_dimension_numbers<[1], [0], [0], [1], [0, 0, 1, 1], [], []>} : vector<64x4xbf16>, vector<4x4xbf16>, vector<64x4xf32> -> vector<64x4xf32>
    %137 = arith.truncf %131 : vector<64x4xf32> to vector<64x4xbf16>
    %c2_94 = arith.constant 2 : index
    %c0_95 = arith.constant 0 : index
    %c0_96 = arith.constant 0 : index
    %c0_97 = arith.constant 0 : index
    %138 = vector.load %arg4[%c2_94, %c0_95, %c0_96, %c0_97] : memref<3x3x4x4xbf16, #tpu.memory_space<vmem>>, vector<1x1x4x4xbf16>
    %139 = vector.shape_cast %138 : vector<1x1x4x4xbf16> to vector<4x4xbf16>
    %cst_98 = arith.constant dense<0.000000e+00> : vector<64x4xf32>
    %140 = tpu.matmul %137, %139, %cst_98 {dimension_numbers = #tpu.dot_dimension_numbers<[1], [0], [0], [1], [0, 0, 1, 1], [], []>} : vector<64x4xbf16>, vector<4x4xbf16>, vector<64x4xf32> -> vector<64x4xf32>
    %141 = arith.addf %136, %140 : vector<64x4xf32>
    %142 = arith.truncf %132 : vector<64x4xf32> to vector<64x4xbf16>
    %c2_99 = arith.constant 2 : index
    %c2_100 = arith.constant 2 : index
    %c0_101 = arith.constant 0 : index
    %c0_102 = arith.constant 0 : index
    %143 = vector.load %arg4[%c2_99, %c2_100, %c0_101, %c0_102] : memref<3x3x4x4xbf16, #tpu.memory_space<vmem>>, vector<1x1x4x4xbf16>
    %144 = vector.shape_cast %143 : vector<1x1x4x4xbf16> to vector<4x4xbf16>
    %cst_103 = arith.constant dense<0.000000e+00> : vector<64x4xf32>
    %145 = tpu.matmul %142, %144, %cst_103 {dimension_numbers = #tpu.dot_dimension_numbers<[1], [0], [0], [1], [0, 0, 1, 1], [], []>} : vector<64x4xbf16>, vector<4x4xbf16>, vector<64x4xf32> -> vector<64x4xf32>
    %146 = arith.addf %141, %145 : vector<64x4xf32>
    %c2_104 = arith.constant 2 : index
    %c0_105 = arith.constant 0 : index
    %c0_106 = arith.constant 0 : index
    %147 = vector.load %arg5[%c2_104, %c0_105, %c0_106] : memref<3x1x4xf32, #tpu.memory_space<vmem>>, vector<1x1x4xf32>
    %148 = vector.shape_cast %147 : vector<1x1x4xf32> to vector<1x4xf32>
    %149 = vector.broadcast %148 : vector<1x4xf32> to vector<64x4xf32>
    %150 = arith.addf %146, %149 : vector<64x4xf32>
    %cst_107 = arith.constant 0.000000e+00 : f32
    %151 = vector.broadcast %cst_107 : f32 to vector<64x4xf32>
    %152 = arith.cmpf oge, %150, %151 : vector<64x4xf32>
    %cst_108 = arith.constant 1.000000e-01 : f32
    %153 = vector.broadcast %cst_108 : f32 to vector<64x4xf32>
    %154 = arith.mulf %153, %150 : vector<64x4xf32>
    %155 = arith.select %152, %150, %154 : vector<64x4xi1>, vector<64x4xf32>
    %156 = arith.mulf %155, %18 : vector<64x4xf32>
    %c1_i32_109 = arith.constant 1 : i32
    %157 = tpu.dynamic_rotate %156 by %c1_i32_109 dim 0 : vector<64x4xf32>, i32 -> vector<64x4xf32>
    %c63_i32_110 = arith.constant 63 : i32
    %158 = tpu.dynamic_rotate %156 by %c63_i32_110 dim 0 : vector<64x4xf32>, i32 -> vector<64x4xf32>
    %159 = arith.truncf %156 : vector<64x4xf32> to vector<64x4xbf16>
    %c2_111 = arith.constant 2 : index
    %c1_112 = arith.constant 1 : index
    %c0_113 = arith.constant 0 : index
    %c0_114 = arith.constant 0 : index
    %160 = vector.load %arg6[%c2_111, %c1_112, %c0_113, %c0_114] : memref<3x3x4x4xbf16, #tpu.memory_space<vmem>>, vector<1x1x4x4xbf16>
    %161 = vector.shape_cast %160 : vector<1x1x4x4xbf16> to vector<4x4xbf16>
    %cst_115 = arith.constant dense<0.000000e+00> : vector<64x4xf32>
    %162 = tpu.matmul %159, %161, %cst_115 {dimension_numbers = #tpu.dot_dimension_numbers<[1], [0], [0], [1], [0, 0, 1, 1], [], []>} : vector<64x4xbf16>, vector<4x4xbf16>, vector<64x4xf32> -> vector<64x4xf32>
    %163 = arith.truncf %157 : vector<64x4xf32> to vector<64x4xbf16>
    %c2_116 = arith.constant 2 : index
    %c0_117 = arith.constant 0 : index
    %c0_118 = arith.constant 0 : index
    %c0_119 = arith.constant 0 : index
    %164 = vector.load %arg6[%c2_116, %c0_117, %c0_118, %c0_119] : memref<3x3x4x4xbf16, #tpu.memory_space<vmem>>, vector<1x1x4x4xbf16>
    %165 = vector.shape_cast %164 : vector<1x1x4x4xbf16> to vector<4x4xbf16>
    %cst_120 = arith.constant dense<0.000000e+00> : vector<64x4xf32>
    %166 = tpu.matmul %163, %165, %cst_120 {dimension_numbers = #tpu.dot_dimension_numbers<[1], [0], [0], [1], [0, 0, 1, 1], [], []>} : vector<64x4xbf16>, vector<4x4xbf16>, vector<64x4xf32> -> vector<64x4xf32>
    %167 = arith.addf %162, %166 : vector<64x4xf32>
    %168 = arith.truncf %158 : vector<64x4xf32> to vector<64x4xbf16>
    %c2_121 = arith.constant 2 : index
    %c2_122 = arith.constant 2 : index
    %c0_123 = arith.constant 0 : index
    %c0_124 = arith.constant 0 : index
    %169 = vector.load %arg6[%c2_121, %c2_122, %c0_123, %c0_124] : memref<3x3x4x4xbf16, #tpu.memory_space<vmem>>, vector<1x1x4x4xbf16>
    %170 = vector.shape_cast %169 : vector<1x1x4x4xbf16> to vector<4x4xbf16>
    %cst_125 = arith.constant dense<0.000000e+00> : vector<64x4xf32>
    %171 = tpu.matmul %168, %170, %cst_125 {dimension_numbers = #tpu.dot_dimension_numbers<[1], [0], [0], [1], [0, 0, 1, 1], [], []>} : vector<64x4xbf16>, vector<4x4xbf16>, vector<64x4xf32> -> vector<64x4xf32>
    %172 = arith.addf %167, %171 : vector<64x4xf32>
    %c2_126 = arith.constant 2 : index
    %c0_127 = arith.constant 0 : index
    %c0_128 = arith.constant 0 : index
    %173 = vector.load %arg7[%c2_126, %c0_127, %c0_128] : memref<3x1x4xf32, #tpu.memory_space<vmem>>, vector<1x1x4xf32>
    %174 = vector.shape_cast %173 : vector<1x1x4xf32> to vector<1x4xf32>
    %175 = vector.broadcast %174 : vector<1x4xf32> to vector<64x4xf32>
    %176 = arith.addf %172, %175 : vector<64x4xf32>
    %177 = arith.addf %124, %176 : vector<64x4xf32>
    %178 = vector.extract_strided_slice %177 {offsets = [16, 0], sizes = [32, 4], strides = [1, 1]} : vector<64x4xf32> to vector<32x4xf32>
    %c0_129 = arith.constant 0 : index
    %c0_130 = arith.constant 0 : index
    %c0_131 = arith.constant 0 : index
    %179 = vector.load %arg8[%c0_129, %c0_130, %c0_131] : memref<1x32x4xf32, #tpu.memory_space<vmem>>, vector<1x32x4xf32>
    %180 = vector.shape_cast %179 : vector<1x32x4xf32> to vector<32x4xf32>
    %181 = vector.shape_cast %178 : vector<32x4xf32> to vector<1x32x4xf32>
    tpu.vector_store %arg8[%c0_129, %c0_130, %c0_131], %181 {strides = array<i32>} : memref<1x32x4xf32, #tpu.memory_space<vmem>>, vector<1x32x4xf32>,
    return
  }
  func.func @transform_0(%arg0: i32, %arg1: i32) -> (i32, i32, i32) {
    %c0_i32 = arith.constant 0 : i32
    %c0_i32_0 = arith.constant 0 : i32
    return %arg0, %arg1, %c0_i32 : i32, i32, i32
  }
  func.func @transform_1(%arg0: i32, %arg1: i32) -> (i32, i32, i32) {
    %c1_i32 = arith.constant 1 : i32
    %0 = arith.addi %arg1, %c1_i32 : i32
    %c1_i32_0 = arith.constant 1 : i32
    %1 = arith.muli %0, %c1_i32_0 : i32
    %c0_i32 = arith.constant 0 : i32
    %c0_i32_1 = arith.constant 0 : i32
    return %arg0, %1, %c0_i32 : i32, i32, i32
  }
  func.func @transform_2(%arg0: i32, %arg1: i32) -> (i32, i32, i32, i32) {
    %c0_i32 = arith.constant 0 : i32
    %c0_i32_0 = arith.constant 0 : i32
    %c0_i32_1 = arith.constant 0 : i32
    %c0_i32_2 = arith.constant 0 : i32
    %c0_i32_3 = arith.constant 0 : i32
    return %c0_i32, %c0_i32_0, %c0_i32_1, %c0_i32_2 : i32, i32, i32, i32
  }
  func.func @transform_3(%arg0: i32, %arg1: i32) -> (i32, i32, i32) {
    %c0_i32 = arith.constant 0 : i32
    %c0_i32_0 = arith.constant 0 : i32
    %c0_i32_1 = arith.constant 0 : i32
    %c0_i32_2 = arith.constant 0 : i32
    return %c0_i32, %c0_i32_0, %c0_i32_1 : i32, i32, i32
  }
  func.func @transform_4(%arg0: i32, %arg1: i32) -> (i32, i32, i32, i32) {
    %c0_i32 = arith.constant 0 : i32
    %c0_i32_0 = arith.constant 0 : i32
    %c0_i32_1 = arith.constant 0 : i32
    %c0_i32_2 = arith.constant 0 : i32
    %c0_i32_3 = arith.constant 0 : i32
    return %c0_i32, %c0_i32_0, %c0_i32_1, %c0_i32_2 : i32, i32, i32, i32
  }
  func.func @transform_5(%arg0: i32, %arg1: i32) -> (i32, i32, i32) {
    %c0_i32 = arith.constant 0 : i32
    %c0_i32_0 = arith.constant 0 : i32
    %c0_i32_1 = arith.constant 0 : i32
    %c0_i32_2 = arith.constant 0 : i32
    return %c0_i32, %c0_i32_0, %c0_i32_1 : i32, i32, i32
  }
  func.func @transform_6(%arg0: i32, %arg1: i32) -> (i32, i32, i32) {
    %c0_i32 = arith.constant 0 : i32
    %c0_i32_0 = arith.constant 0 : i32
    return %arg0, %arg1, %c0_i32 : i32, i32, i32
  }
}

</mosaic_0001>

<llo_original>
// kernel: tpu_custom_call.1
$region0: #{tpu_custom_call.1}
  #allocation0 [shape = 'u32[]', space=smem, size = 0x4, offset = 0x4, fixed_abs, tag = 'smem constant byte address 0x4 - core index']
  #allocation1 [shape = 'u32[144,128]{1,0:T(1,128)}', space=vmem, size = 0x12000, scoped, tag = 'internal scratch']
  %s0 = inlined_call_operand.hbm [shape: f32[8,128], index: 0, kind: input, shape index: {}]
  %s1 = inlined_call_operand.hbm [shape: f32[16,128], index: 1, kind: output, shape index: {}]
  %s2 = sld [smem:[#allocation0]]
  $region41: #{tpu_custom_call.1} parent=0
    _
  %s4 = ssub.s32 1, %s2
  %s5 = scalar_select 0, %s4, %s2
  $region1: #{tpu_custom_call.1} parent=0
    #allocation2 [shape = 'u8[4096]{0}', space=vmem, size = 0x1000, scoped, tag = 'input window, operand 0, single buffered']
    #allocation3 [shape = 's32[2]{0}', space=sflag, size = 0x8, scoped, tag = 'scoped memory for tpu_custom_call.1']
    #allocation4 [shape = 's32[2]{0}', space=sflag, size = 0x8, scoped, tag = 'scoped memory for tpu_custom_call.1']
    #allocation5 [shape = 'u8[8192]{0}', space=vmem, size = 0x2000, scoped, tag = 'output window, operand 0']
    %6 = vsyncpa [#allocation3], 0
    %7 = vsyncpa [#allocation4], 0
    %s8 = scalar_lea.sflag [#allocation4], 1
    %9 = vsyncpa %s8, 0
    loop: start=0, step=1, limit=4
    $region2: #{tpu_custom_call.1} parent=1 // loop_pre_header
      _
    $region3: #{tpu_custom_call.1} parent=1 // loop_header
      %s11 = sphi 0, %s15
      %p12 = scmp.ge.s32.totalorder %s11, 4
      %s19 = sphi 0, %s19
      %s21 = sphi 0, %s19
      %s22 = sphi 0, %s21
      %s36 = sphi 0, %s22
      %s42 = sphi 0, %s44
      %s45 = sphi 0, %s42
      %s46 = sphi 0, %s45
      %s62 = sphi 0, %s46
    $region4: #{tpu_custom_call.1} parent=1 // loop_header_branch
      %14 = sbr.rel (%p12) target = $region8
    $region5: #{tpu_custom_call.1} parent=1 // loop_body
      %s16 = ssub.s32 %s11, 1
      %s17 = ssub.s32 %s11, 2
      %s18 = sadd.s32 %s11, 1
      %s20 = sadd.s32 %s19, 1
      %p23 = scmp.eq.s32.totalorder %s11, 1
      %p24 = scmp.ne.s32.totalorder %s19, %s21
      %p25 = scmp.eq.s32.totalorder %s11, 0
      %p26 = por %p24, %p25
      %p27 = scmp.ne.s32.totalorder %s19, %s21
      %p28 = scmp.eq.s32.totalorder %s16, 1
      %p29 = por %p27, %p28
      %p30 = scmp.ne.s32.totalorder %s21, %s22
      %p31 = scmp.eq.s32.totalorder %s16, 0
      %p32 = por %p30, %p31
      %p33 = scmp.ne.s32.totalorder %s21, %s22
      %p34 = scmp.eq.s32.totalorder %s17, 1
      %p35 = por %p33, %p34
      %p37 = scmp.ne.s32.totalorder %s22, %s36
      %p38 = scmp.eq.s32.totalorder %s17, 0
      %p39 = por %p37, %p38
      %s40 = ssub.s32 %s11, %s18
      %p41 = scmp.eq.s32.totalorder %s40, 0
      %s43 = sadd.s32 %s42, 1
      %s44 = scalar_select %p41, %s42, %s43
      %p47 = pneg %p41
      %p48 = scmp.eq.s32.totalorder %s11, 1
      %p49 = por %p47, %p48
      %p50 = scmp.ne.s32.totalorder %s42, %s45
      %p51 = scmp.eq.s32.totalorder %s11, 0
      %p52 = por %p50, %p51
      %p53 = scmp.ne.s32.totalorder %s42, %s45
      %p54 = scmp.eq.s32.totalorder %s16, 1
      %p55 = por %p53, %p54
      %p56 = scmp.ne.s32.totalorder %s45, %s46
      %p57 = scmp.eq.s32.totalorder %s16, 0
      %p58 = por %p56, %p57
      %p59 = scmp.ne.s32.totalorder %s45, %s46
      %p60 = scmp.eq.s32.totalorder %s17, 1
      %p61 = por %p59, %p60
      %p63 = scmp.ne.s32.totalorder %s46, %s62
      %p64 = scmp.eq.s32.totalorder %s17, 0
      %p65 = por %p63, %p64
      %p66 = scmp.le.s32.totalorder 1, %s11
      %p67 = scmp.lt.s32.totalorder %s11, 3
      %p68 = pnand %p66, %p67
      %p69 = pneg %p68
      // Predicated region
      $region9: #{tpu_custom_call.1} parent=5 // pred_check
        _
      $region10: #{tpu_custom_call.1} parent=5 // pred_check_branch
        %71 = sbr.rel (%p68) target = $region12
      $region11: #{tpu_custom_call.1} parent=5 // pred_region
        %s72 = ssub.s32 %s11, 1
        // Predicated region
        $region13: #{tpu_custom_call.1} parent=11 // pred_check
          %p73 = pneg %p32
        $region14: #{tpu_custom_call.1} parent=11 // pred_check_branch
          %75 = sbr.rel (%p73) target = $region16
        $region15: #{tpu_custom_call.1} parent=11 // pred_region
          %s77 = ssub.s32 128, 128
          %78 = vsyncadd [#allocation3], %s77
          %s80 = sshll.u32 [#allocation2], 4
          %s81 = int_to_ptr.vmem [resolvable:$true] %s80
          %83 = dma.hbm_to_vmem [thread:$0]  %s0, 128, %s81, [#allocation3]
        $region16: #{tpu_custom_call.1} parent=11 // pred_fallthru
          _
      $region12: #{tpu_custom_call.1} parent=5 // pred_fallthru
        _
      %p84 = scmp.lt.s32.totalorder %s11, 2
      // Predicated region
      $region17: #{tpu_custom_call.1} parent=5 // pred_check
        %p85 = pneg %p84
      $region18: #{tpu_custom_call.1} parent=5 // pred_check_branch
        %87 = sbr.rel (%p85) target = $region20
      $region19: #{tpu_custom_call.1} parent=5 // pred_region
        _
      $region20: #{tpu_custom_call.1} parent=5 // pred_fallthru
        _
      %p88 = scmp.le.s32.totalorder 1, %s11
      %p89 = scmp.lt.s32.totalorder %s11, 3
      %p90 = pnand %p88, %p89
      %p91 = pneg %p90
      // Predicated region
      $region21: #{tpu_custom_call.1} parent=5 // pred_check
        _
      $region22: #{tpu_custom_call.1} parent=5 // pred_check_branch
        %93 = sbr.rel (%p90) target = $region24
      $region23: #{tpu_custom_call.1} parent=5 // pred_region
        %s94 = ssub.s32 %s11, 1
        // Predicated region
        $region25: #{tpu_custom_call.1} parent=23 // pred_check
          %p95 = pneg %p32
        $region26: #{tpu_custom_call.1} parent=23 // pred_check_branch
          %97 = sbr.rel (%p95) target = $region28
        $region27: #{tpu_custom_call.1} parent=23 // pred_region
          %98 = dma.done [#allocation3], 128
        $region28: #{tpu_custom_call.1} parent=23 // pred_fallthru
          _
        %p99 = pneg %p32
        %p100 = pneg %p29
        %p101 = pneg %p58
        %p102 = pneg %p55
        %s103 = sand.u32 %s45, 1
        %s104 = scalar_lea.sflag [#allocation4], %s103
        %s105 = sand.u32 %s45, 1
        %s106 = smul.addr %s105, 8
        %s107 = scalar_lea.vmem [#allocation5], %s106
        %v108 = vld [vmem:[#allocation2] sm:$0xff]
        %109 = vst [vmem:[%s107] sm:$0xff] %v108
        %s110 = sand.u32 %s45, 1
        %s111 = scalar_lea.sflag [#allocation4], %s110
        %s112 = sand.u32 %s45, 1
        %s113 = smul.addr %s112, 8
        %s114 = scalar_lea.vmem [#allocation5], %s113
        // Predicated region
        $region29: #{tpu_custom_call.1} parent=23 // pred_check
          %p115 = pneg %p55
        $region30: #{tpu_custom_call.1} parent=23 // pred_check_branch
          %117 = sbr.rel (%p115) target = $region32
        $region31: #{tpu_custom_call.1} parent=23 // pred_region
          %s119 = ssub.s32 128, 128
          %120 = vsyncadd %s111, %s119
          %s121 = smul.addr %s16, 128
          %s122 = scalar_lea.hbm %s1, %s121
          %s124 = sshll.u32 %s114, 4
          %s125 = int_to_ptr.vmem [resolvable:$true] %s124
          %127 = dma.vmem_to_hbm [thread:$0]  %s125, 128, %s122, %s111
        $region32: #{tpu_custom_call.1} parent=23 // pred_fallthru
          _
      $region24: #{tpu_custom_call.1} parent=5 // pred_fallthru
        _
      %p128 = scmp.le.s32.totalorder 2, %s11
      // Predicated region
      $region33: #{tpu_custom_call.1} parent=5 // pred_check
        %p129 = pneg %p128
      $region34: #{tpu_custom_call.1} parent=5 // pred_check_branch
        %131 = sbr.rel (%p129) target = $region36
      $region35: #{tpu_custom_call.1} parent=5 // pred_region
        %s132 = ssub.s32 %s11, 2
        // Predicated region
        $region37: #{tpu_custom_call.1} parent=35 // pred_check
          %p133 = pneg %p61
        $region38: #{tpu_custom_call.1} parent=35 // pred_check_branch
          %135 = sbr.rel (%p133) target = $region40
        $region39: #{tpu_custom_call.1} parent=35 // pred_region
          %s136 = sand.u32 %s46, 1
          %s137 = scalar_lea.sflag [#allocation4], %s136
          %s138 = sand.u32 %s46, 1
          %s139 = smul.addr %s138, 8
          %s140 = scalar_lea.vmem [#allocation5], %s139
          %141 = dma.done %s137, 128
        $region40: #{tpu_custom_call.1} parent=35 // pred_fallthru
          _
      $region36: #{tpu_custom_call.1} parent=5 // pred_fallthru
        _
    $region6: #{tpu_custom_call.1} parent=1 // loop_footer
      %s15 = sadd.s32 1, %s11
    $region7: #{tpu_custom_call.1} parent=1 // loop_footer_branch
      %10 = sbr.rel target = $region3
    $region8: #{tpu_custom_call.1} parent=1 // loop_exit
      _
    %142 = vsyncpa [#allocation3], 1
    %s143 = scalar_lea.sflag [#allocation3], 1
    %144 = vsyncpa %s143, 1
    %145 = vsyncpa [#allocation4], 1
    %s146 = scalar_lea.sflag [#allocation4], 1
    %147 = vsyncpa %s146, 1

// kernel: tpu_custom_call.1
$region0: #{tpu_custom_call.1}
  #allocation0 [shape = 'u32[]', space=smem, size = 0x4, offset = 0x4, fixed_abs, tag = 'smem constant byte address 0x4 - core index']
  #allocation1 [shape = 'u32[144,128]{1,0:T(1,128)}', space=vmem, size = 0x12000, scoped, tag = 'internal scratch']
  %s0 = inlined_call_operand.vmem [shape: f32[2,64,4], index: 0, kind: input, shape index: {}]
  %s1 = inlined_call_operand.vmem [shape: f32[2,64,4], index: 1, kind: input, shape index: {}]
  %s2 = inlined_call_operand.vmem [shape: bf16[3,3,4,4], index: 2, kind: input, shape index: {}]
  %s3 = inlined_call_operand.vmem [shape: f32[3,1,4], index: 3, kind: input, shape index: {}]
  %s4 = inlined_call_operand.vmem [shape: bf16[3,3,4,4], index: 4, kind: input, shape index: {}]
  %s5 = inlined_call_operand.vmem [shape: f32[3,1,4], index: 5, kind: input, shape index: {}]
  %s6 = inlined_call_operand.vmem [shape: f32[2,32,4], index: 6, kind: output, shape index: {}]
  %s7 = sld [smem:[#allocation0]]
  $region57: #{tpu_custom_call.1} parent=0
    _
  %s9 = ssub.s32 1, %s7
  %s10 = scalar_select 0, %s9, %s7
  loop: start=0, step=1, limit=4
  $region2: #{tpu_custom_call.1} parent=0 // loop_pre_header
    _
  $region3: #{tpu_custom_call.1} parent=0 // loop_header
    %s12 = sphi 0, %s16
    %p13 = scmp.ge.s32.totalorder %s12, 4
    %s19 = sphi 0, %s31
    %s20 = sphi 0, %s27
    %s21 = sphi 0, %s19
    %s22 = sphi 0, %s20
    %s23 = sphi 0, %s21
    %s24 = sphi 0, %s22
    %s36 = sphi 0, %s38
    %s39 = sphi 0, %s36
    %s40 = sphi 0, %s39
    %s56 = sphi 0, %s40
    %s66 = sphi 0, %s68
    %s69 = sphi 0, %s66
    %s70 = sphi 0, %s69
    %s86 = sphi 0, %s70
    %s90 = sphi 0, %s90
    %s92 = sphi 0, %s90
    %s93 = sphi 0, %s92
    %s107 = sphi 0, %s93
    %s111 = sphi 0, %s111
    %s113 = sphi 0, %s111
    %s114 = sphi 0, %s113
    %s128 = sphi 0, %s114
    %s132 = sphi 0, %s132
    %s134 = sphi 0, %s132
    %s135 = sphi 0, %s134
    %s149 = sphi 0, %s135
    %s153 = sphi 0, %s153
    %s155 = sphi 0, %s153
    %s156 = sphi 0, %s155
    %s170 = sphi 0, %s156
    %s178 = sphi 0, %s180
    %s181 = sphi 0, %s178
    %s182 = sphi 0, %s181
    %s198 = sphi 0, %s182
  $region4: #{tpu_custom_call.1} parent=0 // loop_header_branch
    %15 = sbr.rel (%p13) target = $region8
  $region5: #{tpu_custom_call.1} parent=0 // loop_body
    %s17 = ssub.s32 %s12, 1
    %s18 = ssub.s32 %s12, 2
    %s25 = sadd.s32 1, %s20
    %p26 = scmp.ge.s32.totalorder %s25, 1
    %s27 = scalar_select %p26, 0, %s25
    %s28 = sadd.s32 1, %s19
    %s29 = scalar_select %p26, %s28, %s19
    %p30 = scmp.ge.s32.totalorder %s29, 2
    %s31 = scalar_select %p30, 0, %s29
    %s32 = ssub.s32 %s19, %s31
    %s33 = ssub.s32 %s20, %s27
    %s34 = sor.u32 %s32, %s33
    %p35 = scmp.eq.s32.totalorder %s34, 0
    %s37 = sadd.s32 %s36, 1
    %s38 = scalar_select %p35, %s36, %s37
    %p41 = pneg %p35
    %p42 = scmp.eq.s32.totalorder %s12, 1
    %p43 = por %p41, %p42
    %p44 = scmp.ne.s32.totalorder %s36, %s39
    %p45 = scmp.eq.s32.totalorder %s12, 0
    %p46 = por %p44, %p45
    %p47 = scmp.ne.s32.totalorder %s36, %s39
    %p48 = scmp.eq.s32.totalorder %s17, 1
    %p49 = por %p47, %p48
    %p50 = scmp.ne.s32.totalorder %s39, %s40
    %p51 = scmp.eq.s32.totalorder %s17, 0
    %p52 = por %p50, %p51
    %p53 = scmp.ne.s32.totalorder %s39, %s40
    %p54 = scmp.eq.s32.totalorder %s18, 1
    %p55 = por %p53, %p54
    %p57 = scmp.ne.s32.totalorder %s40, %s56
    %p58 = scmp.eq.s32.totalorder %s18, 0
    %p59 = por %p57, %p58
    %s60 = sadd.s32 %s20, 1
    %s61 = sadd.s32 %s27, 1
    %s62 = ssub.s32 %s19, %s31
    %s63 = ssub.s32 %s60, %s61
    %s64 = sor.u32 %s62, %s63
    %p65 = scmp.eq.s32.totalorder %s64, 0
    %s67 = sadd.s32 %s66, 1
    %s68 = scalar_select %p65, %s66, %s67
    %p71 = pneg %p65
    %p72 = scmp.eq.s32.totalorder %s12, 1
    %p73 = por %p71, %p72
    %p74 = scmp.ne.s32.totalorder %s66, %s69
    %p75 = scmp.eq.s32.totalorder %s12, 0
    %p76 = por %p74, %p75
    %p77 = scmp.ne.s32.totalorder %s66, %s69
    %p78 = scmp.eq.s32.totalorder %s17, 1
    %p79 = por %p77, %p78
    %p80 = scmp.ne.s32.totalorder %s69, %s70
    %p81 = scmp.eq.s32.totalorder %s17, 0
    %p82 = por %p80, %p81
    %p83 = scmp.ne.s32.totalorder %s69, %s70
    %p84 = scmp.eq.s32.totalorder %s18, 1
    %p85 = por %p83, %p84
    %p87 = scmp.ne.s32.totalorder %s70, %s86
    %p88 = scmp.eq.s32.totalorder %s18, 0
    %p89 = por %p87, %p88
    %s91 = sadd.s32 %s90, 1
    %p94 = scmp.eq.s32.totalorder %s12, 1
    %p95 = scmp.ne.s32.totalorder %s90, %s92
    %p96 = scmp.eq.s32.totalorder %s12, 0
    %p97 = por %p95, %p96
    %p98 = scmp.ne.s32.totalorder %s90, %s92
    %p99 = scmp.eq.s32.totalorder %s17, 1
    %p100 = por %p98, %p99
    %p101 = scmp.ne.s32.totalorder %s92, %s93
    %p102 = scmp.eq.s32.totalorder %s17, 0
    %p103 = por %p101, %p102
    %p104 = scmp.ne.s32.totalorder %s92, %s93
    %p105 = scmp.eq.s32.totalorder %s18, 1
    %p106 = por %p104, %p105
    %p108 = scmp.ne.s32.totalorder %s93, %s107
    %p109 = scmp.eq.s32.totalorder %s18, 0
    %p110 = por %p108, %p109
    %s112 = sadd.s32 %s111, 1
    %p115 = scmp.eq.s32.totalorder %s12, 1
    %p116 = scmp.ne.s32.totalorder %s111, %s113
    %p117 = scmp.eq.s32.totalorder %s12, 0
    %p118 = por %p116, %p117
    %p119 = scmp.ne.s32.totalorder %s111, %s113
    %p120 = scmp.eq.s32.totalorder %s17, 1
    %p121 = por %p119, %p120
    %p122 = scmp.ne.s32.totalorder %s113, %s114
    %p123 = scmp.eq.s32.totalorder %s17, 0
    %p124 = por %p122, %p123
    %p125 = scmp.ne.s32.totalorder %s113, %s114
    %p126 = scmp.eq.s32.totalorder %s18, 1
    %p127 = por %p125, %p126
    %p129 = scmp.ne.s32.totalorder %s114, %s128
    %p130 = scmp.eq.s32.totalorder %s18, 0
    %p131 = por %p129, %p130
    %s133 = sadd.s32 %s132, 1
    %p136 = scmp.eq.s32.totalorder %s12, 1
    %p137 = scmp.ne.s32.totalorder %s132, %s134
    %p138 = scmp.eq.s32.totalorder %s12, 0
    %p139 = por %p137, %p138
    %p140 = scmp.ne.s32.totalorder %s132, %s134
    %p141 = scmp.eq.s32.totalorder %s17, 1
    %p142 = por %p140, %p141
    %p143 = scmp.ne.s32.totalorder %s134, %s135
    %p144 = scmp.eq.s32.totalorder %s17, 0
    %p145 = por %p143, %p144
    %p146 = scmp.ne.s32.totalorder %s134, %s135
    %p147 = scmp.eq.s32.totalorder %s18, 1
    %p148 = por %p146, %p147
    %p150 = scmp.ne.s32.totalorder %s135, %s149
    %p151 = scmp.eq.s32.totalorder %s18, 0
    %p152 = por %p150, %p151
    %s154 = sadd.s32 %s153, 1
    %p157 = scmp.eq.s32.totalorder %s12, 1
    %p158 = scmp.ne.s32.totalorder %s153, %s155
    %p159 = scmp.eq.s32.totalorder %s12, 0
    %p160 = por %p158, %p159
    %p161 = scmp.ne.s32.totalorder %s153, %s155
    %p162 = scmp.eq.s32.totalorder %s17, 1
    %p163 = por %p161, %p162
    %p164 = scmp.ne.s32.totalorder %s155, %s156
    %p165 = scmp.eq.s32.totalorder %s17, 0
    %p166 = por %p164, %p165
    %p167 = scmp.ne.s32.totalorder %s155, %s156
    %p168 = scmp.eq.s32.totalorder %s18, 1
    %p169 = por %p167, %p168
    %p171 = scmp.ne.s32.totalorder %s156, %s170
    %p172 = scmp.eq.s32.totalorder %s18, 0
    %p173 = por %p171, %p172
    %s174 = ssub.s32 %s19, %s31
    %s175 = ssub.s32 %s20, %s27
    %s176 = sor.u32 %s174, %s175
    %p177 = scmp.eq.s32.totalorder %s176, 0
    %s179 = sadd.s32 %s178, 1
    %s180 = scalar_select %p177, %s178, %s179
    %p183 = pneg %p177
    %p184 = scmp.eq.s32.totalorder %s12, 1
    %p185 = por %p183, %p184
    %p186 = scmp.ne.s32.totalorder %s178, %s181
    %p187 = scmp.eq.s32.totalorder %s12, 0
    %p188 = por %p186, %p187
    %p189 = scmp.ne.s32.totalorder %s178, %s181
    %p190 = scmp.eq.s32.totalorder %s17, 1
    %p191 = por %p189, %p190
    %p192 = scmp.ne.s32.totalorder %s181, %s182
    %p193 = scmp.eq.s32.totalorder %s17, 0
    %p194 = por %p192, %p193
    %p195 = scmp.ne.s32.totalorder %s181, %s182
    %p196 = scmp.eq.s32.totalorder %s18, 1
    %p197 = por %p195, %p196
    %p199 = scmp.ne.s32.totalorder %s182, %s198
    %p200 = scmp.eq.s32.totalorder %s18, 0
    %p201 = por %p199, %p200
    %p202 = scmp.le.s32.totalorder 1, %s12
    %p203 = scmp.lt.s32.totalorder %s12, 3
    %p204 = pnand %p202, %p203
    %p205 = pneg %p204
    // Predicated region
    $region9: #{tpu_custom_call.1} parent=5 // pred_check
      _
    $region10: #{tpu_custom_call.1} parent=5 // pred_check_branch
      %207 = sbr.rel (%p204) target = $region12
    $region11: #{tpu_custom_call.1} parent=5 // pred_region
      %s208 = ssub.s32 %s12, 1
      // Predicated region
      $region13: #{tpu_custom_call.1} parent=11 // pred_check
        %p209 = pneg %p103
      $region14: #{tpu_custom_call.1} parent=11 // pred_check_branch
        %211 = sbr.rel (%p209) target = $region16
      $region15: #{tpu_custom_call.1} parent=11 // pred_region
        _
      $region16: #{tpu_custom_call.1} parent=11 // pred_fallthru
        _
      // Predicated region
      $region17: #{tpu_custom_call.1} parent=11 // pred_check
        %p212 = pneg %p124
      $region18: #{tpu_custom_call.1} parent=11 // pred_check_branch
        %214 = sbr.rel (%p212) target = $region20
      $region19: #{tpu_custom_call.1} parent=11 // pred_region
        _
      $region20: #{tpu_custom_call.1} parent=11 // pred_fallthru
        _
      // Predicated region
      $region21: #{tpu_custom_call.1} parent=11 // pred_check
        %p215 = pneg %p145
      $region22: #{tpu_custom_call.1} parent=11 // pred_check_branch
        %217 = sbr.rel (%p215) target = $region24
      $region23: #{tpu_custom_call.1} parent=11 // pred_region
        _
      $region24: #{tpu_custom_call.1} parent=11 // pred_fallthru
        _
      // Predicated region
      $region25: #{tpu_custom_call.1} parent=11 // pred_check
        %p218 = pneg %p166
      $region26: #{tpu_custom_call.1} parent=11 // pred_check_branch
        %220 = sbr.rel (%p218) target = $region28
      $region27: #{tpu_custom_call.1} parent=11 // pred_region
        _
      $region28: #{tpu_custom_call.1} parent=11 // pred_fallthru
        _
    $region12: #{tpu_custom_call.1} parent=5 // pred_fallthru
      _
    %p221 = scmp.lt.s32.totalorder %s12, 2
    // Predicated region
    $region29: #{tpu_custom_call.1} parent=5 // pred_check
      %p222 = pneg %p221
    $region30: #{tpu_custom_call.1} parent=5 // pred_check_branch
      %224 = sbr.rel (%p222) target = $region32
    $region31: #{tpu_custom_call.1} parent=5 // pred_region
      // Predicated region
      $region33: #{tpu_custom_call.1} parent=31 // pred_check
        %p225 = pneg %p46
      $region34: #{tpu_custom_call.1} parent=31 // pred_check_branch
        %227 = sbr.rel (%p225) target = $region36
      $region35: #{tpu_custom_call.1} parent=31 // pred_region
        %s228 = smul.u32 4, %s20
        %p229 = scmp.lt.s32.totalorder %s19, 1
        %s230 = scalar_select %p229, %s19, 1
        %p231 = scmp.lt.s32.totalorder %s228, 7
        %s232 = scalar_select %p231, %s228, 7
        %s233 = smul.addr %s230, 8
        %s234 = sadd.s32 %s232, %s233
        %s235 = smul.addr %s234, 8
        %s236 = scalar_lea.vmem %s0, %s235
        %s237 = smul.u32 4, %s20
      $region36: #{tpu_custom_call.1} parent=31 // pred_fallthru
        _
      // Predicated region
      $region37: #{tpu_custom_call.1} parent=31 // pred_check
        %p238 = pneg %p76
      $region38: #{tpu_custom_call.1} parent=31 // pred_check_branch
        %240 = sbr.rel (%p238) target = $region40
      $region39: #{tpu_custom_call.1} parent=31 // pred_region
        %s241 = sadd.s32 %s20, 1
        %s242 = smul.u32 4, %s241
        %p243 = scmp.lt.s32.totalorder %s19, 1
        %s244 = scalar_select %p243, %s19, 1
        %p245 = scmp.lt.s32.totalorder %s242, 7
        %s246 = scalar_select %p245, %s242, 7
        %s247 = smul.addr %s244, 8
        %s248 = sadd.s32 %s246, %s247
        %s249 = smul.addr %s248, 8
        %s250 = scalar_lea.vmem %s1, %s249
        %s251 = sadd.s32 %s20, 1
        %s252 = smul.u32 4, %s251
      $region40: #{tpu_custom_call.1} parent=31 // pred_fallthru
        _
    $region32: #{tpu_custom_call.1} parent=5 // pred_fallthru
      _
    %p253 = scmp.le.s32.totalorder 1, %s12
    %p254 = scmp.lt.s32.totalorder %s12, 3
    %p255 = pnand %p253, %p254
    %p256 = pneg %p255
    // Predicated region
    $region41: #{tpu_custom_call.1} parent=5 // pred_check
      _
    $region42: #{tpu_custom_call.1} parent=5 // pred_check_branch
      %258 = sbr.rel (%p255) target = $region44
    $region43: #{tpu_custom_call.1} parent=5 // pred_region
      %s259 = ssub.s32 %s12, 1
      %s260 = smul.u32 4, %s22
      %p261 = scmp.lt.s32.totalorder %s21, 1
      %s262 = scalar_select %p261, %s21, 1
      %p263 = scmp.lt.s32.totalorder %s260, 7
      %s264 = scalar_select %p263, %s260, 7
      %s265 = smul.addr %s262, 8
      %s266 = sadd.s32 %s264, %s265
      %s267 = smul.addr %s266, 8
      %s268 = scalar_lea.vmem %s0, %s267
      %p269 = pneg %p52
      %p270 = pneg %p49
      %s271 = sadd.s32 %s22, 1
      %s272 = smul.u32 4, %s271
      %p273 = scmp.lt.s32.totalorder %s21, 1
      %s274 = scalar_select %p273, %s21, 1
      %p275 = scmp.lt.s32.totalorder %s272, 7
      %s276 = scalar_select %p275, %s272, 7
      %s277 = smul.addr %s274, 8
      %s278 = sadd.s32 %s276, %s277
      %s279 = smul.addr %s278, 8
      %s280 = scalar_lea.vmem %s1, %s279
      %p281 = pneg %p82
      %p282 = pneg %p79
      %p283 = pneg %p103
      %p284 = pneg %p100
      %p285 = pneg %p124
      %p286 = pneg %p121
      %p287 = pneg %p145
      %p288 = pneg %p142
      %p289 = pneg %p166
      %p290 = pneg %p163
      %p291 = pneg %p194
      %p292 = pneg %p191
      %s293 = smul.u32 4, %s22
      %p294 = scmp.lt.s32.totalorder %s21, 1
      %s295 = scalar_select %p294, %s21, 1
      %p296 = scmp.lt.s32.totalorder %s293, 3
      %s297 = scalar_select %p296, %s293, 3
      %s298 = smul.addr %s295, 4
      %s299 = sadd.s32 %s297, %s298
      %s300 = smul.addr %s299, 8
      %s301 = scalar_lea.vmem %s6, %s300
      %s302 = smul.u32 4, %s22
      %p303 = scmp.lt.s32.totalorder %s21, 1
      %s304 = scalar_select %p303, %s21, 1
      %p305 = scmp.lt.s32.totalorder %s302, 7
      %s306 = scalar_select %p305, %s302, 7
      %s307 = smul.addr %s304, 8
      %s308 = sadd.s32 %s306, %s307
      %s309 = smul.addr %s308, 8
      %s310 = scalar_lea.vmem %s0, %s309
      %s311 = smul.u32 4, %s22
      %s312 = sadd.s32 %s22, 1
      %s313 = smul.u32 4, %s312
      %p314 = scmp.lt.s32.totalorder %s21, 1
      %s315 = scalar_select %p314, %s21, 1
      %p316 = scmp.lt.s32.totalorder %s313, 7
      %s317 = scalar_select %p316, %s313, 7
      %s318 = smul.addr %s315, 8
      %s319 = sadd.s32 %s317, %s318
      %s320 = smul.addr %s319, 8
      %s321 = scalar_lea.vmem %s1, %s320
      %s322 = sadd.s32 %s22, 1
      %s323 = smul.u32 4, %s322
      %s324 = smul.u32 4, %s22
      %p325 = scmp.lt.s32.totalorder %s21, 1
      %s326 = scalar_select %p325, %s21, 1
      %p327 = scmp.lt.s32.totalorder %s324, 3
      %s328 = scalar_select %p327, %s324, 3
      %s329 = smul.addr %s326, 4
      %s330 = sadd.s32 %s328, %s329
      %s331 = smul.addr %s330, 8
      %s332 = scalar_lea.vmem %s6, %s331
      %s333 = smul.u32 4, %s22
      %v335 = vld [vmem:[%s310] sm:$0xff]
      %v336 = vld [vmem:[%s310 + $0x8] sm:$0xff]
      %v337 = vld [vmem:[%s310 + $0x10] sm:$0xff]
      %v338 = vld [vmem:[%s310 + $0x18] sm:$0xff]
      %v339 = vld [vmem:[%s321] sm:$0xff]
      %v340 = vld [vmem:[%s321 + $0x8] sm:$0xff]
      %v341 = vld [vmem:[%s321 + $0x10] sm:$0xff]
      %v342 = vld [vmem:[%s321 + $0x18] sm:$0xff]
      %v343 = vlaneseq
      %v344 = vshrl.u32 %v343, 7
      %v345 = vadd.s32 %v344, 8
      %v346 = vadd.s32 %v344, 16
      %v347 = vadd.s32 %v344, 24
      %v348 = vadd.s32 %v344, 32
      %v349 = vadd.s32 %v344, 40
      %v350 = vadd.s32 %v344, 48
      %v351 = vadd.s32 %v344, 56
      %s352 = smul.u32 %s22, 32
      %s353 = ssub.s32 %s352, 16
      %v354 = vstv %s353
      %v355 = vadd.s32 %v344, %v354
      %v356 = vadd.s32 %v345, %v354
      %v357 = vadd.s32 %v346, %v354
      %v358 = vadd.s32 %v347, %v354
      %v359 = vadd.s32 %v348, %v354
      %v360 = vadd.s32 %v349, %v354
      %v361 = vadd.s32 %v350, %v354
      %v362 = vadd.s32 %v351, %v354
      %vm363 = vcmp.ge.s32.totalorder %v355, 0
      %vm364 = vcmp.ge.s32.totalorder %v356, 0
      %vm365 = vcmp.ge.s32.totalorder %v357, 0
      %vm366 = vcmp.ge.s32.totalorder %v358, 0
      %vm367 = vcmp.ge.s32.totalorder %v359, 0
      %vm368 = vcmp.ge.s32.totalorder %v360, 0
      %vm369 = vcmp.ge.s32.totalorder %v361, 0
      %vm370 = vcmp.ge.s32.totalorder %v362, 0
      %vm371 = vcmp.lt.s32.totalorder %v355, 16
      %vm372 = vcmp.lt.s32.totalorder %v356, 16
      %vm373 = vcmp.lt.s32.totalorder %v357, 16
      %vm374 = vcmp.lt.s32.totalorder %v358, 16
      %vm375 = vcmp.lt.s32.totalorder %v359, 16
      %vm376 = vcmp.lt.s32.totalorder %v360, 16
      %vm377 = vcmp.lt.s32.totalorder %v361, 16
      %vm378 = vcmp.lt.s32.totalorder %v362, 16
      %vm379 = vmand %vm363, %vm371
      %vm380 = vmand %vm364, %vm372
      %vm381 = vmand %vm365, %vm373
      %vm382 = vmand %vm366, %vm374
      %vm383 = vmand %vm367, %vm375
      %vm384 = vmand %vm368, %vm376
      %vm385 = vmand %vm369, %vm377
      %vm386 = vmand %vm370, %vm378
      %v387 = vsel %vm379, 1, 0
      %v388 = vsel %vm380, 1, 0
      %v389 = vsel %vm381, 1, 0
      %v390 = vsel %vm382, 1, 0
      %v391 = vsel %vm383, 1, 0
      %v392 = vsel %vm384, 1, 0
      %v393 = vsel %vm385, 1, 0
      %v394 = vsel %vm386, 1, 0
      %v395 = vcvt.s32.f32 %v387
      %v396 = vcvt.s32.f32 %v388
      %v397 = vcvt.s32.f32 %v389
      %v398 = vcvt.s32.f32 %v390
      %v399 = vcvt.s32.f32 %v391
      %v400 = vcvt.s32.f32 %v392
      %v401 = vcvt.s32.f32 %v393
      %v402 = vcvt.s32.f32 %v394
      %vm403 = vcmp.ge.f32.partialorder %v335, 0.0
      %vm404 = vcmp.ge.f32.partialorder %v336, 0.0
      %vm405 = vcmp.ge.f32.partialorder %v337, 0.0
      %vm406 = vcmp.ge.f32.partialorder %v338, 0.0
      %vm407 = vcmp.ge.f32.partialorder %v339, 0.0
      %vm408 = vcmp.ge.f32.partialorder %v340, 0.0
      %vm409 = vcmp.ge.f32.partialorder %v341, 0.0
      %vm410 = vcmp.ge.f32.partialorder %v342, 0.0
      %v411 = vmul.f32 %v335, 0.1
      %v412 = vmul.f32 %v336, 0.1
      %v413 = vmul.f32 %v337, 0.1
      %v414 = vmul.f32 %v338, 0.1
      %v415 = vmul.f32 %v339, 0.1
      %v416 = vmul.f32 %v340, 0.1
      %v417 = vmul.f32 %v341, 0.1
      %v418 = vmul.f32 %v342, 0.1
      %v419 = vsel %vm403, %v335, %v411
      %v420 = vsel %vm404, %v336, %v412
      %v421 = vsel %vm405, %v337, %v413
      %v422 = vsel %vm406, %v338, %v414
      %v423 = vsel %vm407, %v339, %v415
      %v424 = vsel %vm408, %v340, %v416
      %v425 = vsel %vm409, %v341, %v417
      %v426 = vsel %vm410, %v342, %v418
      %v427 = vmul.f32 %v419, %v395
      %v428 = vmul.f32 %v420, %v396
      %v429 = vmul.f32 %v421, %v397
      %v430 = vmul.f32 %v422, %v398
      %v431 = vmul.f32 %v423, %v399
      %v432 = vmul.f32 %v424, %v400
      %v433 = vmul.f32 %v425, %v401
      %v434 = vmul.f32 %v426, %v402
      %v435 = vrot.slane %v427, 7
      %v436 = vrot.slane %v428, 7
      %v437 = vrot.slane %v429, 7
      %v438 = vrot.slane %v430, 7
      %v439 = vrot.slane %v431, 7
      %v440 = vrot.slane %v432, 7
      %v441 = vrot.slane %v433, 7
      %v442 = vrot.slane %v434, 7
      %vm443 = vcmp.lt.s32.totalorder %v344, 1
      %v444 = vsel %vm443, %v441, %v442
      %v445 = vsel %vm443, %v440, %v441
      %v446 = vsel %vm443, %v439, %v440
      %v447 = vsel %vm443, %v438, %v439
      %v448 = vsel %vm443, %v437, %v438
      %v449 = vsel %vm443, %v436, %v437
      %v450 = vsel %vm443, %v435, %v436
      %v451 = vsel %vm443, %v442, %v435
      %v452 = vrot.slane %v427, 1
      %v453 = vrot.slane %v428, 1
      %v454 = vrot.slane %v429, 1
      %v455 = vrot.slane %v430, 1
      %v456 = vrot.slane %v431, 1
      %v457 = vrot.slane %v432, 1
      %v458 = vrot.slane %v433, 1
      %v459 = vrot.slane %v434, 1
      %vm460 = vcmp.lt.s32.totalorder %v344, 7
      %v461 = vsel %vm460, %v458, %v459
      %v462 = vsel %vm460, %v457, %v458
      %v463 = vsel %vm460, %v456, %v457
      %v464 = vsel %vm460, %v455, %v456
      %v465 = vsel %vm460, %v454, %v455
      %v466 = vsel %vm460, %v453, %v454
      %v467 = vsel %vm460, %v452, %v453
      %v468 = vsel %vm460, %v459, %v452
      %v469 = vpack.c.bf16 %v428, %v427
      %v470 = vpack.c.bf16 %v430, %v429
      %v471 = vpack.c.bf16 %v432, %v431
      %v472 = vpack.c.bf16 %v434, %v433
      %s473 = scalar_lea.vmem %s2, 2
      %v474 = vld [vmem:[%s473] sm:$0x3]
      %v475 = vpack.c.bf16 %v450, %v451
      %v476 = vpack.c.bf16 %v448, %v449
      %v477 = vpack.c.bf16 %v446, %v447
      %v478 = vpack.c.bf16 %v444, %v445
      %v479 = vld [vmem:[%s2] sm:$0x3]
      %vm480 = vcmask 31744
      %v482 = vsel %vm480, %v475, 0
      %v485 = vsel %vm480, %v476, 0
      %v488 = vsel %vm480, %v477, 0
      %v491 = vsel %vm480, %v478, 0
      %vm493 = vcmask 1041408
      %v495 = vsel %vm493, %v479, 0
      %497 = vmatprep.subr.bf16.mxu0 0
      %498 = vmatpush1.bf16.msra.mxu0 %v495
      %499 = vmatprep.subr.bf16.mxu0 0
      %500 = vmatpush1.bf16.msra.mxu0 0
      %501 = vmatprep.subr.bf16.mxu0 0
      %502 = vmatpush1.bf16.msra.mxu0 0
      %503 = vmatprep.subr.bf16.mxu0 0
      %504 = vmatpush1.bf16.msra.mxu0 0
      %505 = vmatprep.subr.bf16.mxu0 0
      %506 = vmatpush1.bf16.msra.mxu0 0
      %507 = vmatprep.subr.bf16.mxu0 0
      %508 = vmatpush1.bf16.msra.mxu0 0
      %509 = vmatprep.subr.bf16.mxu0 0
      %510 = vmatpush1.bf16.msra.mxu0 0
      %511 = vmatprep.subr.bf16.mxu0 0
      %512 = vmatpush1.bf16.msra.mxu0 0
      %513 = vmatprep.subr.bf16.mxu0 0
      %514 = vmatpush1.bf16.msra.mxu0 0
      %515 = vmatprep.subr.bf16.mxu0 0
      %516 = vmatpush1.bf16.msra.mxu0 0
      %517 = vmatprep.subr.bf16.mxu0 0
      %518 = vmatpush1.bf16.msra.mxu0 0
      %519 = vmatprep.subr.bf16.mxu0 0
      %520 = vmatpush1.bf16.msra.mxu0 0
      %521 = vmatprep.subr.bf16.mxu0 0
      %522 = vmatpush1.bf16.msra.mxu0 0
      %523 = vmatprep.subr.bf16.mxu0 0
      %524 = vmatpush1.bf16.msra.mxu0 0
      %525 = vmatprep.subr.bf16.mxu0 0
      %526 = vmatpush1.bf16.msra.mxu0 0
      %527 = vmatprep.subr.bf16.mxu0 0
      %528 = vmatpush1.bf16.msra.mxu0 0
      %529 = vmatprep.mubr.bf16.mxu0 0
      %530 = vmatmul.mubr.bf16.gmra.mrb[0].mxu0 %v482
      %v531 = vpop.f32.mrb[0].mxu0
      %v532 = vadd.f32 0.0, %v531
      %v533 = vpop.f32.mrb[0].mxu0
      %v534 = vpop.f32.mrb[0].mxu0
      %v535 = vadd.f32 0.0, %v534
      %v536 = vpop.f32.mrb[0].mxu0
      %537 = vmatprep.mubr.bf16.mxu0 0
      %538 = vmatmul.mubr.bf16.gmra.mrb[0].mxu0 %v485
      %v539 = vpop.f32.mrb[0].mxu0
      %v540 = vadd.f32 0.0, %v539
      %v541 = vpop.f32.mrb[0].mxu0
      %v542 = vpop.f32.mrb[0].mxu0
      %v543 = vadd.f32 0.0, %v542
      %v544 = vpop.f32.mrb[0].mxu0
      %545 = vmatprep.mubr.bf16.mxu0 0
      %546 = vmatmul.mubr.bf16.gmra.mrb[0].mxu0 %v488
      %v547 = vpop.f32.mrb[0].mxu0
      %v548 = vadd.f32 0.0, %v547
      %v549 = vpop.f32.mrb[0].mxu0
      %v550 = vpop.f32.mrb[0].mxu0
      %v551 = vadd.f32 0.0, %v550
      %v552 = vpop.f32.mrb[0].mxu0
      %553 = vmatprep.mubr.bf16.mxu0 0
      %554 = vmatmul.mubr.bf16.gmra.mrb[0].mxu0 %v491
      %v555 = vpop.f32.mrb[0].mxu0
      %v556 = vadd.f32 0.0, %v555
      %v557 = vpop.f32.mrb[0].mxu0
      %v558 = vpop.f32.mrb[0].mxu0
      %v559 = vadd.f32 0.0, %v558
      %v560 = vpop.f32.mrb[0].mxu0
      %561 = vdwg.mxu0
      %v563 = vsel %vm480, %v469, 0
      %v566 = vsel %vm480, %v470, 0
      %v569 = vsel %vm480, %v471, 0
      %v572 = vsel %vm480, %v472, 0
      %v575 = vsel %vm493, %v474, 0
      %577 = vmatprep.subr.bf16.mxu0 0
      %578 = vmatpush1.bf16.msra.mxu0 %v575
      %579 = vmatprep.subr.bf16.mxu0 0
      %580 = vmatpush1.bf16.msra.mxu0 0
      %581 = vmatprep.subr.bf16.mxu0 0
      %582 = vmatpush1.bf16.msra.mxu0 0
      %583 = vmatprep.subr.bf16.mxu0 0
      %584 = vmatpush1.bf16.msra.mxu0 0
      %585 = vmatprep.subr.bf16.mxu0 0
      %586 = vmatpush1.bf16.msra.mxu0 0
      %587 = vmatprep.subr.bf16.mxu0 0
      %588 = vmatpush1.bf16.msra.mxu0 0
      %589 = vmatprep.subr.bf16.mxu0 0
      %590 = vmatpush1.bf16.msra.mxu0 0
      %591 = vmatprep.subr.bf16.mxu0 0
      %592 = vmatpush1.bf16.msra.mxu0 0
      %593 = vmatprep.subr.bf16.mxu0 0
      %594 = vmatpush1.bf16.msra.mxu0 0
      %595 = vmatprep.subr.bf16.mxu0 0
      %596 = vmatpush1.bf16.msra.mxu0 0
      %597 = vmatprep.subr.bf16.mxu0 0
      %598 = vmatpush1.bf16.msra.mxu0 0
      %599 = vmatprep.subr.bf16.mxu0 0
      %600 = vmatpush1.bf16.msra.mxu0 0
      %601 = vmatprep.subr.bf16.mxu0 0
      %602 = vmatpush1.bf16.msra.mxu0 0
      %603 = vmatprep.subr.bf16.mxu0 0
      %604 = vmatpush1.bf16.msra.mxu0 0
      %605 = vmatprep.subr.bf16.mxu0 0
      %606 = vmatpush1.bf16.msra.mxu0 0
      %607 = vmatprep.subr.bf16.mxu0 0
      %608 = vmatpush1.bf16.msra.mxu0 0
      %609 = vmatprep.mubr.bf16.mxu0 0
      %610 = vmatmul.mubr.bf16.gmra.mrb[0].mxu0 %v563
      %v611 = vpop.f32.mrb[0].mxu0
      %v612 = vadd.f32 %v532, %v611
      %v613 = vpop.f32.mrb[0].mxu0
      %v614 = vpop.f32.mrb[0].mxu0
      %v615 = vadd.f32 %v535, %v614
      %v616 = vpop.f32.mrb[0].mxu0
      %617 = vmatprep.mubr.bf16.mxu0 0
      %618 = vmatmul.mubr.bf16.gmra.mrb[0].mxu0 %v566
      %v619 = vpop.f32.mrb[0].mxu0
      %v620 = vadd.f32 %v540, %v619
      %v621 = vpop.f32.mrb[0].mxu0
      %v622 = vpop.f32.mrb[0].mxu0
      %v623 = vadd.f32 %v543, %v622
      %v624 = vpop.f32.mrb[0].mxu0
      %625 = vmatprep.mubr.bf16.mxu0 0
      %626 = vmatmul.mubr.bf16.gmra.mrb[0].mxu0 %v569
      %v627 = vpop.f32.mrb[0].mxu0
      %v628 = vadd.f32 %v548, %v627
      %v629 = vpop.f32.mrb[0].mxu0
      %v630 = vpop.f32.mrb[0].mxu0
      %v631 = vadd.f32 %v551, %v630
      %v632 = vpop.f32.mrb[0].mxu0
      %633 = vmatprep.mubr.bf16.mxu0 0
      %634 = vmatmul.mubr.bf16.gmra.mrb[0].mxu0 %v572
      %v635 = vpop.f32.mrb[0].mxu0
      %v636 = vadd.f32 %v556, %v635
      %v637 = vpop.f32.mrb[0].mxu0
      %v638 = vpop.f32.mrb[0].mxu0
      %v639 = vadd.f32 %v559, %v638
      %v640 = vpop.f32.mrb[0].mxu0
      %641 = vdwg.mxu0
      %v642 = vpack.c.bf16 %v466, %v467
      %v643 = vpack.c.bf16 %v464, %v465
      %v644 = vpack.c.bf16 %v462, %v463
      %v645 = vpack.c.bf16 %v468, %v461
      %s646 = scalar_lea.vmem %s2, 4
      %v647 = vld [vmem:[%s646] sm:$0x3]
      %v649 = vsel %vm480, %v642, 0
      %v652 = vsel %vm480, %v643, 0
      %v655 = vsel %vm480, %v644, 0
      %v658 = vsel %vm480, %v645, 0
      %v661 = vsel %vm493, %v647, 0
      %663 = vmatprep.subr.bf16.mxu0 0
      %664 = vmatpush1.bf16.msra.mxu0 %v661
      %665 = vmatprep.subr.bf16.mxu0 0
      %666 = vmatpush1.bf16.msra.mxu0 0
      %667 = vmatprep.subr.bf16.mxu0 0
      %668 = vmatpush1.bf16.msra.mxu0 0
      %669 = vmatprep.subr.bf16.mxu0 0
      %670 = vmatpush1.bf16.msra.mxu0 0
      %671 = vmatprep.subr.bf16.mxu0 0
      %672 = vmatpush1.bf16.msra.mxu0 0
      %673 = vmatprep.subr.bf16.mxu0 0
      %674 = vmatpush1.bf16.msra.mxu0 0
      %675 = vmatprep.subr.bf16.mxu0 0
      %676 = vmatpush1.bf16.msra.mxu0 0
      %677 = vmatprep.subr.bf16.mxu0 0
      %678 = vmatpush1.bf16.msra.mxu0 0
      %679 = vmatprep.subr.bf16.mxu0 0
      %680 = vmatpush1.bf16.msra.mxu0 0
      %681 = vmatprep.subr.bf16.mxu0 0
      %682 = vmatpush1.bf16.msra.mxu0 0
      %683 = vmatprep.subr.bf16.mxu0 0
      %684 = vmatpush1.bf16.msra.mxu0 0
      %685 = vmatprep.subr.bf16.mxu0 0
      %686 = vmatpush1.bf16.msra.mxu0 0
      %687 = vmatprep.subr.bf16.mxu0 0
      %688 = vmatpush1.bf16.msra.mxu0 0
      %689 = vmatprep.subr.bf16.mxu0 0
      %690 = vmatpush1.bf16.msra.mxu0 0
      %691 = vmatprep.subr.bf16.mxu0 0
      %692 = vmatpush1.bf16.msra.mxu0 0
      %693 = vmatprep.subr.bf16.mxu0 0
      %694 = vmatpush1.bf16.msra.mxu0 0
      %695 = vmatprep.mubr.bf16.mxu0 0
      %696 = vmatmul.mubr.bf16.gmra.mrb[0].mxu0 %v649
      %v697 = vpop.f32.mrb[0].mxu0
      %v698 = vadd.f32 0.0, %v697
      %v699 = vpop.f32.mrb[0].mxu0
      %v700 = vpop.f32.mrb[0].mxu0
      %v701 = vadd.f32 0.0, %v700
      %v702 = vpop.f32.mrb[0].mxu0
      %703 = vmatprep.mubr.bf16.mxu0 0
      %704 = vmatmul.mubr.bf16.gmra.mrb[0].mxu0 %v652
      %v705 = vpop.f32.mrb[0].mxu0
      %v706 = vadd.f32 0.0, %v705
      %v707 = vpop.f32.mrb[0].mxu0
      %v708 = vpop.f32.mrb[0].mxu0
      %v709 = vadd.f32 0.0, %v708
      %v710 = vpop.f32.mrb[0].mxu0
      %711 = vmatprep.mubr.bf16.mxu0 0
      %712 = vmatmul.mubr.bf16.gmra.mrb[0].mxu0 %v655
      %v713 = vpop.f32.mrb[0].mxu0
      %v714 = vadd.f32 0.0, %v713
      %v715 = vpop.f32.mrb[0].mxu0
      %v716 = vpop.f32.mrb[0].mxu0
      %v717 = vadd.f32 0.0, %v716
      %v718 = vpop.f32.mrb[0].mxu0
      %719 = vmatprep.mubr.bf16.mxu0 0
      %720 = vmatmul.mubr.bf16.gmra.mrb[0].mxu0 %v658
      %v721 = vpop.f32.mrb[0].mxu0
      %v722 = vadd.f32 0.0, %v721
      %v723 = vpop.f32.mrb[0].mxu0
      %v724 = vpop.f32.mrb[0].mxu0
      %v725 = vadd.f32 0.0, %v724
      %v726 = vpop.f32.mrb[0].mxu0
      %727 = vdwg.mxu0
      %v728 = vadd.f32 %v612, %v698
      %v729 = vadd.f32 %v615, %v701
      %v730 = vadd.f32 %v620, %v706
      %v731 = vadd.f32 %v623, %v709
      %v732 = vadd.f32 %v628, %v714
      %v733 = vadd.f32 %v631, %v717
      %v734 = vadd.f32 %v636, %v722
      %v735 = vadd.f32 %v639, %v725
      %v736 = vld [vmem:[%s3] sm:$0x1]
      %v738 = vlaneseq
      %v739 = vshrl.u32 %v738, 7
      %v740 = vsub.s32 0, %v739
      %v741 = vrot.slane %v736, %v740
      %v743 = vadd.f32 %v728, %v741
      %v744 = vadd.f32 %v729, %v741
      %v745 = vadd.f32 %v730, %v741
      %v746 = vadd.f32 %v731, %v741
      %v747 = vadd.f32 %v732, %v741
      %v748 = vadd.f32 %v733, %v741
      %v749 = vadd.f32 %v734, %v741
      %v750 = vadd.f32 %v735, %v741
      %vm751 = vcmp.ge.f32.partialorder %v743, 0.0
      %vm752 = vcmp.ge.f32.partialorder %v744, 0.0
      %vm753 = vcmp.ge.f32.partialorder %v745, 0.0
      %vm754 = vcmp.ge.f32.partialorder %v746, 0.0
      %vm755 = vcmp.ge.f32.partialorder %v747, 0.0
      %vm756 = vcmp.ge.f32.partialorder %v748, 0.0
      %vm757 = vcmp.ge.f32.partialorder %v749, 0.0
      %vm758 = vcmp.ge.f32.partialorder %v750, 0.0
      %v759 = vmul.f32 %v743, 0.1
      %v760 = vmul.f32 %v744, 0.1
      %v761 = vmul.f32 %v745, 0.1
      %v762 = vmul.f32 %v746, 0.1
      %v763 = vmul.f32 %v747, 0.1
      %v764 = vmul.f32 %v748, 0.1
      %v765 = vmul.f32 %v749, 0.1
      %v766 = vmul.f32 %v750, 0.1
      %v767 = vsel %vm751, %v743, %v759
      %v768 = vsel %vm752, %v744, %v760
      %v769 = vsel %vm753, %v745, %v761
      %v770 = vsel %vm754, %v746, %v762
      %v771 = vsel %vm755, %v747, %v763
      %v772 = vsel %vm756, %v748, %v764
      %v773 = vsel %vm757, %v749, %v765
      %v774 = vsel %vm758, %v750, %v766
      %v775 = vmul.f32 %v767, %v395
      %v776 = vmul.f32 %v768, %v396
      %v777 = vmul.f32 %v769, %v397
      %v778 = vmul.f32 %v770, %v398
      %v779 = vmul.f32 %v771, %v399
      %v780 = vmul.f32 %v772, %v400
      %v781 = vmul.f32 %v773, %v401
      %v782 = vmul.f32 %v774, %v402
      %v783 = vrot.slane %v775, 7
      %v784 = vrot.slane %v776, 7
      %v785 = vrot.slane %v777, 7
      %v786 = vrot.slane %v778, 7
      %v787 = vrot.slane %v779, 7
      %v788 = vrot.slane %v780, 7
      %v789 = vrot.slane %v781, 7
      %v790 = vrot.slane %v782, 7
      %v791 = vsel %vm443, %v789, %v790
      %v792 = vsel %vm443, %v788, %v789
      %v793 = vsel %vm443, %v787, %v788
      %v794 = vsel %vm443, %v786, %v787
      %v795 = vsel %vm443, %v785, %v786
      %v796 = vsel %vm443, %v784, %v785
      %v797 = vsel %vm443, %v783, %v784
      %v798 = vsel %vm443, %v790, %v783
      %v799 = vrot.slane %v775, 1
      %v800 = vrot.slane %v776, 1
      %v801 = vrot.slane %v777, 1
      %v802 = vrot.slane %v778, 1
      %v803 = vrot.slane %v779, 1
      %v804 = vrot.slane %v780, 1
      %v805 = vrot.slane %v781, 1
      %v806 = vrot.slane %v782, 1
      %v807 = vsel %vm460, %v805, %v806
      %v808 = vsel %vm460, %v804, %v805
      %v809 = vsel %vm460, %v803, %v804
      %v810 = vsel %vm460, %v802, %v803
      %v811 = vsel %vm460, %v801, %v802
      %v812 = vsel %vm460, %v800, %v801
      %v813 = vsel %vm460, %v799, %v800
      %v814 = vsel %vm460, %v806, %v799
      %v815 = vpack.c.bf16 %v776, %v775
      %v816 = vpack.c.bf16 %v778, %v777
      %v817 = vpack.c.bf16 %v780, %v779
      %v818 = vpack.c.bf16 %v782, %v781
      %s819 = scalar_lea.vmem %s4, 2
      %v820 = vld [vmem:[%s819] sm:$0x3]
      %v821 = vpack.c.bf16 %v797, %v798
      %v822 = vpack.c.bf16 %v795, %v796
      %v823 = vpack.c.bf16 %v793, %v794
      %v824 = vpack.c.bf16 %v791, %v792
      %v825 = vld [vmem:[%s4] sm:$0x3]
      %v827 = vsel %vm480, %v821, 0
      %v830 = vsel %vm480, %v822, 0
      %v833 = vsel %vm480, %v823, 0
      %v836 = vsel %vm480, %v824, 0
      %v839 = vsel %vm493, %v825, 0
      %841 = vmatprep.subr.bf16.mxu0 0
      %842 = vmatpush1.bf16.msra.mxu0 %v839
      %843 = vmatprep.subr.bf16.mxu0 0
      %844 = vmatpush1.bf16.msra.mxu0 0
      %845 = vmatprep.subr.bf16.mxu0 0
      %846 = vmatpush1.bf16.msra.mxu0 0
      %847 = vmatprep.subr.bf16.mxu0 0
      %848 = vmatpush1.bf16.msra.mxu0 0
      %849 = vmatprep.subr.bf16.mxu0 0
      %850 = vmatpush1.bf16.msra.mxu0 0
      %851 = vmatprep.subr.bf16.mxu0 0
      %852 = vmatpush1.bf16.msra.mxu0 0
      %853 = vmatprep.subr.bf16.mxu0 0
      %854 = vmatpush1.bf16.msra.mxu0 0
      %855 = vmatprep.subr.bf16.mxu0 0
      %856 = vmatpush1.bf16.msra.mxu0 0
      %857 = vmatprep.subr.bf16.mxu0 0
      %858 = vmatpush1.bf16.msra.mxu0 0
      %859 = vmatprep.subr.bf16.mxu0 0
      %860 = vmatpush1.bf16.msra.mxu0 0
      %861 = vmatprep.subr.bf16.mxu0 0
      %862 = vmatpush1.bf16.msra.mxu0 0
      %863 = vmatprep.subr.bf16.mxu0 0
      %864 = vmatpush1.bf16.msra.mxu0 0
      %865 = vmatprep.subr.bf16.mxu0 0
      %866 = vmatpush1.bf16.msra.mxu0 0
      %867 = vmatprep.subr.bf16.mxu0 0
      %868 = vmatpush1.bf16.msra.mxu0 0
      %869 = vmatprep.subr.bf16.mxu0 0
      %870 = vmatpush1.bf16.msra.mxu0 0
      %871 = vmatprep.subr.bf16.mxu0 0
      %872 = vmatpush1.bf16.msra.mxu0 0
      %873 = vmatprep.mubr.bf16.mxu0 0
      %874 = vmatmul.mubr.bf16.gmra.mrb[0].mxu0 %v827
      %v875 = vpop.f32.mrb[0].mxu0
      %v876 = vadd.f32 0.0, %v875
      %v877 = vpop.f32.mrb[0].mxu0
      %v878 = vpop.f32.mrb[0].mxu0
      %v879 = vadd.f32 0.0, %v878
      %v880 = vpop.f32.mrb[0].mxu0
      %881 = vmatprep.mubr.bf16.mxu0 0
      %882 = vmatmul.mubr.bf16.gmra.mrb[0].mxu0 %v830
      %v883 = vpop.f32.mrb[0].mxu0
      %v884 = vadd.f32 0.0, %v883
      %v885 = vpop.f32.mrb[0].mxu0
      %v886 = vpop.f32.mrb[0].mxu0
      %v887 = vadd.f32 0.0, %v886
      %v888 = vpop.f32.mrb[0].mxu0
      %889 = vmatprep.mubr.bf16.mxu0 0
      %890 = vmatmul.mubr.bf16.gmra.mrb[0].mxu0 %v833
      %v891 = vpop.f32.mrb[0].mxu0
      %v892 = vadd.f32 0.0, %v891
      %v893 = vpop.f32.mrb[0].mxu0
      %v894 = vpop.f32.mrb[0].mxu0
      %v895 = vadd.f32 0.0, %v894
      %v896 = vpop.f32.mrb[0].mxu0
      %897 = vmatprep.mubr.bf16.mxu0 0
      %898 = vmatmul.mubr.bf16.gmra.mrb[0].mxu0 %v836
      %v899 = vpop.f32.mrb[0].mxu0
      %v900 = vadd.f32 0.0, %v899
      %v901 = vpop.f32.mrb[0].mxu0
      %v902 = vpop.f32.mrb[0].mxu0
      %v903 = vadd.f32 0.0, %v902
      %v904 = vpop.f32.mrb[0].mxu0
      %905 = vdwg.mxu0
      %v907 = vsel %vm480, %v815, 0
      %v910 = vsel %vm480, %v816, 0
      %v913 = vsel %vm480, %v817, 0
      %v916 = vsel %vm480, %v818, 0
      %v919 = vsel %vm493, %v820, 0
      %921 = vmatprep.subr.bf16.mxu0 0
      %922 = vmatpush1.bf16.msra.mxu0 %v919
      %923 = vmatprep.subr.bf16.mxu0 0
      %924 = vmatpush1.bf16.msra.mxu0 0
      %925 = vmatprep.subr.bf16.mxu0 0
      %926 = vmatpush1.bf16.msra.mxu0 0
      %927 = vmatprep.subr.bf16.mxu0 0
      %928 = vmatpush1.bf16.msra.mxu0 0
      %929 = vmatprep.subr.bf16.mxu0 0
      %930 = vmatpush1.bf16.msra.mxu0 0
      %931 = vmatprep.subr.bf16.mxu0 0
      %932 = vmatpush1.bf16.msra.mxu0 0
      %933 = vmatprep.subr.bf16.mxu0 0
      %934 = vmatpush1.bf16.msra.mxu0 0
      %935 = vmatprep.subr.bf16.mxu0 0
      %936 = vmatpush1.bf16.msra.mxu0 0
      %937 = vmatprep.subr.bf16.mxu0 0
      %938 = vmatpush1.bf16.msra.mxu0 0
      %939 = vmatprep.subr.bf16.mxu0 0
      %940 = vmatpush1.bf16.msra.mxu0 0
      %941 = vmatprep.subr.bf16.mxu0 0
      %942 = vmatpush1.bf16.msra.mxu0 0
      %943 = vmatprep.subr.bf16.mxu0 0
      %944 = vmatpush1.bf16.msra.mxu0 0
      %945 = vmatprep.subr.bf16.mxu0 0
      %946 = vmatpush1.bf16.msra.mxu0 0
      %947 = vmatprep.subr.bf16.mxu0 0
      %948 = vmatpush1.bf16.msra.mxu0 0
      %949 = vmatprep.subr.bf16.mxu0 0
      %950 = vmatpush1.bf16.msra.mxu0 0
      %951 = vmatprep.subr.bf16.mxu0 0
      %952 = vmatpush1.bf16.msra.mxu0 0
      %953 = vmatprep.mubr.bf16.mxu0 0
      %954 = vmatmul.mubr.bf16.gmra.mrb[0].mxu0 %v907
      %v955 = vpop.f32.mrb[0].mxu0
      %v956 = vadd.f32 %v876, %v955
      %v957 = vpop.f32.mrb[0].mxu0
      %v958 = vpop.f32.mrb[0].mxu0
      %v959 = vadd.f32 %v879, %v958
      %v960 = vpop.f32.mrb[0].mxu0
      %961 = vmatprep.mubr.bf16.mxu0 0
      %962 = vmatmul.mubr.bf16.gmra.mrb[0].mxu0 %v910
      %v963 = vpop.f32.mrb[0].mxu0
      %v964 = vadd.f32 %v884, %v963
      %v965 = vpop.f32.mrb[0].mxu0
      %v966 = vpop.f32.mrb[0].mxu0
      %v967 = vadd.f32 %v887, %v966
      %v968 = vpop.f32.mrb[0].mxu0
      %969 = vmatprep.mubr.bf16.mxu0 0
      %970 = vmatmul.mubr.bf16.gmra.mrb[0].mxu0 %v913
      %v971 = vpop.f32.mrb[0].mxu0
      %v972 = vadd.f32 %v892, %v971
      %v973 = vpop.f32.mrb[0].mxu0
      %v974 = vpop.f32.mrb[0].mxu0
      %v975 = vadd.f32 %v895, %v974
      %v976 = vpop.f32.mrb[0].mxu0
      %977 = vmatprep.mubr.bf16.mxu0 0
      %978 = vmatmul.mubr.bf16.gmra.mrb[0].mxu0 %v916
      %v979 = vpop.f32.mrb[0].mxu0
      %v980 = vadd.f32 %v900, %v979
      %v981 = vpop.f32.mrb[0].mxu0
      %v982 = vpop.f32.mrb[0].mxu0
      %v983 = vadd.f32 %v903, %v982
      %v984 = vpop.f32.mrb[0].mxu0
      %985 = vdwg.mxu0
      %v986 = vpack.c.bf16 %v812, %v813
      %v987 = vpack.c.bf16 %v810, %v811
      %v988 = vpack.c.bf16 %v808, %v809
      %v989 = vpack.c.bf16 %v814, %v807
      %s990 = scalar_lea.vmem %s4, 4
      %v991 = vld [vmem:[%s990] sm:$0x3]
      %v993 = vsel %vm480, %v986, 0
      %v996 = vsel %vm480, %v987, 0
      %v999 = vsel %vm480, %v988, 0
      %v1002 = vsel %vm480, %v989, 0
      %v1005 = vsel %vm493, %v991, 0
      %1007 = vmatprep.subr.bf16.mxu0 0
      %1008 = vmatpush1.bf16.msra.mxu0 %v1005
      %1009 = vmatprep.subr.bf16.mxu0 0
      %1010 = vmatpush1.bf16.msra.mxu0 0
      %1011 = vmatprep.subr.bf16.mxu0 0
      %1012 = vmatpush1.bf16.msra.mxu0 0
      %1013 = vmatprep.subr.bf16.mxu0 0
      %1014 = vmatpush1.bf16.msra.mxu0 0
      %1015 = vmatprep.subr.bf16.mxu0 0
      %1016 = vmatpush1.bf16.msra.mxu0 0
      %1017 = vmatprep.subr.bf16.mxu0 0
      %1018 = vmatpush1.bf16.msra.mxu0 0
      %1019 = vmatprep.subr.bf16.mxu0 0
      %1020 = vmatpush1.bf16.msra.mxu0 0
      %1021 = vmatprep.subr.bf16.mxu0 0
      %1022 = vmatpush1.bf16.msra.mxu0 0
      %1023 = vmatprep.subr.bf16.mxu0 0
      %1024 = vmatpush1.bf16.msra.mxu0 0
      %1025 = vmatprep.subr.bf16.mxu0 0
      %1026 = vmatpush1.bf16.msra.mxu0 0
      %1027 = vmatprep.subr.bf16.mxu0 0
      %1028 = vmatpush1.bf16.msra.mxu0 0
      %1029 = vmatprep.subr.bf16.mxu0 0
      %1030 = vmatpush1.bf16.msra.mxu0 0
      %1031 = vmatprep.subr.bf16.mxu0 0
      %1032 = vmatpush1.bf16.msra.mxu0 0
      %1033 = vmatprep.subr.bf16.mxu0 0
      %1034 = vmatpush1.bf16.msra.mxu0 0
      %1035 = vmatprep.subr.bf16.mxu0 0
      %1036 = vmatpush1.bf16.msra.mxu0 0
      %1037 = vmatprep.subr.bf16.mxu0 0
      %1038 = vmatpush1.bf16.msra.mxu0 0
      %1039 = vmatprep.mubr.bf16.mxu0 0
      %1040 = vmatmul.mubr.bf16.gmra.mrb[0].mxu0 %v993
      %v1041 = vpop.f32.mrb[0].mxu0
      %v1042 = vadd.f32 0.0, %v1041
      %v1043 = vpop.f32.mrb[0].mxu0
      %v1044 = vpop.f32.mrb[0].mxu0
      %v1045 = vadd.f32 0.0, %v1044
      %v1046 = vpop.f32.mrb[0].mxu0
      %1047 = vmatprep.mubr.bf16.mxu0 0
      %1048 = vmatmul.mubr.bf16.gmra.mrb[0].mxu0 %v996
      %v1049 = vpop.f32.mrb[0].mxu0
      %v1050 = vadd.f32 0.0, %v1049
      %v1051 = vpop.f32.mrb[0].mxu0
      %v1052 = vpop.f32.mrb[0].mxu0
      %v1053 = vadd.f32 0.0, %v1052
      %v1054 = vpop.f32.mrb[0].mxu0
      %1055 = vmatprep.mubr.bf16.mxu0 0
      %1056 = vmatmul.mubr.bf16.gmra.mrb[0].mxu0 %v999
      %v1057 = vpop.f32.mrb[0].mxu0
      %v1058 = vadd.f32 0.0, %v1057
      %v1059 = vpop.f32.mrb[0].mxu0
      %v1060 = vpop.f32.mrb[0].mxu0
      %v1061 = vadd.f32 0.0, %v1060
      %v1062 = vpop.f32.mrb[0].mxu0
      %1063 = vmatprep.mubr.bf16.mxu0 0
      %1064 = vmatmul.mubr.bf16.gmra.mrb[0].mxu0 %v1002
      %v1065 = vpop.f32.mrb[0].mxu0
      %v1066 = vadd.f32 0.0, %v1065
      %v1067 = vpop.f32.mrb[0].mxu0
      %v1068 = vpop.f32.mrb[0].mxu0
      %v1069 = vadd.f32 0.0, %v1068
      %v1070 = vpop.f32.mrb[0].mxu0
      %1071 = vdwg.mxu0
      %v1072 = vadd.f32 %v956, %v1042
      %v1073 = vadd.f32 %v959, %v1045
      %v1074 = vadd.f32 %v964, %v1050
      %v1075 = vadd.f32 %v967, %v1053
      %v1076 = vadd.f32 %v972, %v1058
      %v1077 = vadd.f32 %v975, %v1061
      %v1078 = vadd.f32 %v980, %v1066
      %v1079 = vadd.f32 %v983, %v1069
      %v1080 = vld [vmem:[%s5] sm:$0x1]
      %v1082 = vlaneseq
      %v1083 = vshrl.u32 %v1082, 7
      %v1084 = vsub.s32 0, %v1083
      %v1085 = vrot.slane %v1080, %v1084
      %v1087 = vadd.f32 %v1072, %v1085
      %v1088 = vadd.f32 %v1073, %v1085
      %v1089 = vadd.f32 %v1074, %v1085
      %v1090 = vadd.f32 %v1075, %v1085
      %v1091 = vadd.f32 %v1076, %v1085
      %v1092 = vadd.f32 %v1077, %v1085
      %v1093 = vadd.f32 %v1078, %v1085
      %v1094 = vadd.f32 %v1079, %v1085
      %v1095 = vadd.f32 %v335, %v1087
      %v1096 = vadd.f32 %v336, %v1088
      %v1097 = vadd.f32 %v337, %v1089
      %v1098 = vadd.f32 %v338, %v1090
      %v1099 = vadd.f32 %v339, %v1091
      %v1100 = vadd.f32 %v340, %v1092
      %v1101 = vadd.f32 %v341, %v1093
      %v1102 = vadd.f32 %v342, %v1094
      %vm1103 = vcmp.ge.f32.partialorder %v1095, 0.0
      %vm1104 = vcmp.ge.f32.partialorder %v1096, 0.0
      %vm1105 = vcmp.ge.f32.partialorder %v1097, 0.0
      %vm1106 = vcmp.ge.f32.partialorder %v1098, 0.0
      %vm1107 = vcmp.ge.f32.partialorder %v1099, 0.0
      %vm1108 = vcmp.ge.f32.partialorder %v1100, 0.0
      %vm1109 = vcmp.ge.f32.partialorder %v1101, 0.0
      %vm1110 = vcmp.ge.f32.partialorder %v1102, 0.0
      %v1111 = vmul.f32 %v1095, 0.1
      %v1112 = vmul.f32 %v1096, 0.1
      %v1113 = vmul.f32 %v1097, 0.1
      %v1114 = vmul.f32 %v1098, 0.1
      %v1115 = vmul.f32 %v1099, 0.1
      %v1116 = vmul.f32 %v1100, 0.1
      %v1117 = vmul.f32 %v1101, 0.1
      %v1118 = vmul.f32 %v1102, 0.1
      %v1119 = vsel %vm1103, %v1095, %v1111
      %v1120 = vsel %vm1104, %v1096, %v1112
      %v1121 = vsel %vm1105, %v1097, %v1113
      %v1122 = vsel %vm1106, %v1098, %v1114
      %v1123 = vsel %vm1107, %v1099, %v1115
      %v1124 = vsel %vm1108, %v1100, %v1116
      %v1125 = vsel %vm1109, %v1101, %v1117
      %v1126 = vsel %vm1110, %v1102, %v1118
      %v1127 = vmul.f32 %v1119, %v395
      %v1128 = vmul.f32 %v1120, %v396
      %v1129 = vmul.f32 %v1121, %v397
      %v1130 = vmul.f32 %v1122, %v398
      %v1131 = vmul.f32 %v1123, %v399
      %v1132 = vmul.f32 %v1124, %v400
      %v1133 = vmul.f32 %v1125, %v401
      %v1134 = vmul.f32 %v1126, %v402
      %v1135 = vrot.slane %v1127, 5
      %v1136 = vrot.slane %v1128, 5
      %v1137 = vrot.slane %v1129, 5
      %v1138 = vrot.slane %v1130, 5
      %v1139 = vrot.slane %v1131, 5
      %v1140 = vrot.slane %v1132, 5
      %v1141 = vrot.slane %v1133, 5
      %v1142 = vrot.slane %v1134, 5
      %vm1143 = vcmp.lt.s32.totalorder %v344, 3
      %v1144 = vsel %vm1143, %v1141, %v1142
      %v1145 = vsel %vm1143, %v1140, %v1141
      %v1146 = vsel %vm1143, %v1139, %v1140
      %v1147 = vsel %vm1143, %v1138, %v1139
      %v1148 = vsel %vm1143, %v1137, %v1138
      %v1149 = vsel %vm1143, %v1136, %v1137
      %v1150 = vsel %vm1143, %v1135, %v1136
      %v1151 = vsel %vm1143, %v1142, %v1135
      %v1152 = vrot.slane %v1127, 3
      %v1153 = vrot.slane %v1128, 3
      %v1154 = vrot.slane %v1129, 3
      %v1155 = vrot.slane %v1130, 3
      %v1156 = vrot.slane %v1131, 3
      %v1157 = vrot.slane %v1132, 3
      %v1158 = vrot.slane %v1133, 3
      %v1159 = vrot.slane %v1134, 3
      %vm1160 = vcmp.lt.s32.totalorder %v344, 5
      %v1161 = vsel %vm1160, %v1158, %v1159
      %v1162 = vsel %vm1160, %v1157, %v1158
      %v1163 = vsel %vm1160, %v1156, %v1157
      %v1164 = vsel %vm1160, %v1155, %v1156
      %v1165 = vsel %vm1160, %v1154, %v1155
      %v1166 = vsel %vm1160, %v1153, %v1154
      %v1167 = vsel %vm1160, %v1152, %v1153
      %v1168 = vsel %vm1160, %v1159, %v1152
      %v1169 = vpack.c.bf16 %v1128, %v1127
      %v1170 = vpack.c.bf16 %v1130, %v1129
      %v1171 = vpack.c.bf16 %v1132, %v1131
      %v1172 = vpack.c.bf16 %v1134, %v1133
      %s1173 = scalar_lea.vmem %s2, 8
      %v1174 = vld [vmem:[%s1173] sm:$0x3]
      %v1175 = vpack.c.bf16 %v1150, %v1151
      %v1176 = vpack.c.bf16 %v1148, %v1149
      %v1177 = vpack.c.bf16 %v1146, %v1147
      %v1178 = vpack.c.bf16 %v1144, %v1145
      %s1179 = scalar_lea.vmem %s2, 6
      %v1180 = vld [vmem:[%s1179] sm:$0x3]
      %v1182 = vsel %vm480, %v1175, 0
      %v1185 = vsel %vm480, %v1176, 0
      %v1188 = vsel %vm480, %v1177, 0
      %v1191 = vsel %vm480, %v1178, 0
      %v1194 = vsel %vm493, %v1180, 0
      %1196 = vmatprep.subr.bf16.mxu0 0
      %1197 = vmatpush1.bf16.msra.mxu0 %v1194
      %1198 = vmatprep.subr.bf16.mxu0 0
      %1199 = vmatpush1.bf16.msra.mxu0 0
      %1200 = vmatprep.subr.bf16.mxu0 0
      %1201 = vmatpush1.bf16.msra.mxu0 0
      %1202 = vmatprep.subr.bf16.mxu0 0
      %1203 = vmatpush1.bf16.msra.mxu0 0
      %1204 = vmatprep.subr.bf16.mxu0 0
      %1205 = vmatpush1.bf16.msra.mxu0 0
      %1206 = vmatprep.subr.bf16.mxu0 0
      %1207 = vmatpush1.bf16.msra.mxu0 0
      %1208 = vmatprep.subr.bf16.mxu0 0
      %1209 = vmatpush1.bf16.msra.mxu0 0
      %1210 = vmatprep.subr.bf16.mxu0 0
      %1211 = vmatpush1.bf16.msra.mxu0 0
      %1212 = vmatprep.subr.bf16.mxu0 0
      %1213 = vmatpush1.bf16.msra.mxu0 0
      %1214 = vmatprep.subr.bf16.mxu0 0
      %1215 = vmatpush1.bf16.msra.mxu0 0
      %1216 = vmatprep.subr.bf16.mxu0 0
      %1217 = vmatpush1.bf16.msra.mxu0 0
      %1218 = vmatprep.subr.bf16.mxu0 0
      %1219 = vmatpush1.bf16.msra.mxu0 0
      %1220 = vmatprep.subr.bf16.mxu0 0
      %1221 = vmatpush1.bf16.msra.mxu0 0
      %1222 = vmatprep.subr.bf16.mxu0 0
      %1223 = vmatpush1.bf16.msra.mxu0 0
      %1224 = vmatprep.subr.bf16.mxu0 0
      %1225 = vmatpush1.bf16.msra.mxu0 0
      %1226 = vmatprep.subr.bf16.mxu0 0
      %1227 = vmatpush1.bf16.msra.mxu0 0
      %1228 = vmatprep.mubr.bf16.mxu0 0
      %1229 = vmatmul.mubr.bf16.gmra.mrb[0].mxu0 %v1182
      %v1230 = vpop.f32.mrb[0].mxu0
      %v1231 = vadd.f32 0.0, %v1230
      %v1232 = vpop.f32.mrb[0].mxu0
      %v1233 = vpop.f32.mrb[0].mxu0
      %v1234 = vadd.f32 0.0, %v1233
      %v1235 = vpop.f32.mrb[0].mxu0
      %1236 = vmatprep.mubr.bf16.mxu0 0
      %1237 = vmatmul.mubr.bf16.gmra.mrb[0].mxu0 %v1185
      %v1238 = vpop.f32.mrb[0].mxu0
      %v1239 = vadd.f32 0.0, %v1238
      %v1240 = vpop.f32.mrb[0].mxu0
      %v1241 = vpop.f32.mrb[0].mxu0
      %v1242 = vadd.f32 0.0, %v1241
      %v1243 = vpop.f32.mrb[0].mxu0
      %1244 = vmatprep.mubr.bf16.mxu0 0
      %1245 = vmatmul.mubr.bf16.gmra.mrb[0].mxu0 %v1188
      %v1246 = vpop.f32.mrb[0].mxu0
      %v1247 = vadd.f32 0.0, %v1246
      %v1248 = vpop.f32.mrb[0].mxu0
      %v1249 = vpop.f32.mrb[0].mxu0
      %v1250 = vadd.f32 0.0, %v1249
      %v1251 = vpop.f32.mrb[0].mxu0
      %1252 = vmatprep.mubr.bf16.mxu0 0
      %1253 = vmatmul.mubr.bf16.gmra.mrb[0].mxu0 %v1191
      %v1254 = vpop.f32.mrb[0].mxu0
      %v1255 = vadd.f32 0.0, %v1254
      %v1256 = vpop.f32.mrb[0].mxu0
      %v1257 = vpop.f32.mrb[0].mxu0
      %v1258 = vadd.f32 0.0, %v1257
      %v1259 = vpop.f32.mrb[0].mxu0
      %1260 = vdwg.mxu0
      %v1262 = vsel %vm480, %v1169, 0
      %v1265 = vsel %vm480, %v1170, 0
      %v1268 = vsel %vm480, %v1171, 0
      %v1271 = vsel %vm480, %v1172, 0
      %v1274 = vsel %vm493, %v1174, 0
      %1276 = vmatprep.subr.bf16.mxu0 0
      %1277 = vmatpush1.bf16.msra.mxu0 %v1274
      %1278 = vmatprep.subr.bf16.mxu0 0
      %1279 = vmatpush1.bf16.msra.mxu0 0
      %1280 = vmatprep.subr.bf16.mxu0 0
      %1281 = vmatpush1.bf16.msra.mxu0 0
      %1282 = vmatprep.subr.bf16.mxu0 0
      %1283 = vmatpush1.bf16.msra.mxu0 0
      %1284 = vmatprep.subr.bf16.mxu0 0
      %1285 = vmatpush1.bf16.msra.mxu0 0
      %1286 = vmatprep.subr.bf16.mxu0 0
      %1287 = vmatpush1.bf16.msra.mxu0 0
      %1288 = vmatprep.subr.bf16.mxu0 0
      %1289 = vmatpush1.bf16.msra.mxu0 0
      %1290 = vmatprep.subr.bf16.mxu0 0
      %1291 = vmatpush1.bf16.msra.mxu0 0
      %1292 = vmatprep.subr.bf16.mxu0 0
      %1293 = vmatpush1.bf16.msra.mxu0 0
      %1294 = vmatprep.subr.bf16.mxu0 0
      %1295 = vmatpush1.bf16.msra.mxu0 0
      %1296 = vmatprep.subr.bf16.mxu0 0
      %1297 = vmatpush1.bf16.msra.mxu0 0
      %1298 = vmatprep.subr.bf16.mxu0 0
      %1299 = vmatpush1.bf16.msra.mxu0 0
      %1300 = vmatprep.subr.bf16.mxu0 0
      %1301 = vmatpush1.bf16.msra.mxu0 0
      %1302 = vmatprep.subr.bf16.mxu0 0
      %1303 = vmatpush1.bf16.msra.mxu0 0
      %1304 = vmatprep.subr.bf16.mxu0 0
      %1305 = vmatpush1.bf16.msra.mxu0 0
      %1306 = vmatprep.subr.bf16.mxu0 0
      %1307 = vmatpush1.bf16.msra.mxu0 0
      %1308 = vmatprep.mubr.bf16.mxu0 0
      %1309 = vmatmul.mubr.bf16.gmra.mrb[0].mxu0 %v1262
      %v1310 = vpop.f32.mrb[0].mxu0
      %v1311 = vadd.f32 %v1231, %v1310
      %v1312 = vpop.f32.mrb[0].mxu0
      %v1313 = vpop.f32.mrb[0].mxu0
      %v1314 = vadd.f32 %v1234, %v1313
      %v1315 = vpop.f32.mrb[0].mxu0
      %1316 = vmatprep.mubr.bf16.mxu0 0
      %1317 = vmatmul.mubr.bf16.gmra.mrb[0].mxu0 %v1265
      %v1318 = vpop.f32.mrb[0].mxu0
      %v1319 = vadd.f32 %v1239, %v1318
      %v1320 = vpop.f32.mrb[0].mxu0
      %v1321 = vpop.f32.mrb[0].mxu0
      %v1322 = vadd.f32 %v1242, %v1321
      %v1323 = vpop.f32.mrb[0].mxu0
      %1324 = vmatprep.mubr.bf16.mxu0 0
      %1325 = vmatmul.mubr.bf16.gmra.mrb[0].mxu0 %v1268
      %v1326 = vpop.f32.mrb[0].mxu0
      %v1327 = vadd.f32 %v1247, %v1326
      %v1328 = vpop.f32.mrb[0].mxu0
      %v1329 = vpop.f32.mrb[0].mxu0
      %v1330 = vadd.f32 %v1250, %v1329
      %v1331 = vpop.f32.mrb[0].mxu0
      %1332 = vmatprep.mubr.bf16.mxu0 0
      %1333 = vmatmul.mubr.bf16.gmra.mrb[0].mxu0 %v1271
      %v1334 = vpop.f32.mrb[0].mxu0
      %v1335 = vadd.f32 %v1255, %v1334
      %v1336 = vpop.f32.mrb[0].mxu0
      %v1337 = vpop.f32.mrb[0].mxu0
      %v1338 = vadd.f32 %v1258, %v1337
      %v1339 = vpop.f32.mrb[0].mxu0
      %1340 = vdwg.mxu0
      %v1341 = vpack.c.bf16 %v1166, %v1167
      %v1342 = vpack.c.bf16 %v1164, %v1165
      %v1343 = vpack.c.bf16 %v1162, %v1163
      %v1344 = vpack.c.bf16 %v1168, %v1161
      %s1345 = scalar_lea.vmem %s2, 10
      %v1346 = vld [vmem:[%s1345] sm:$0x3]
      %v1348 = vsel %vm480, %v1341, 0
      %v1351 = vsel %vm480, %v1342, 0
      %v1354 = vsel %vm480, %v1343, 0
      %v1357 = vsel %vm480, %v1344, 0
      %v1360 = vsel %vm493, %v1346, 0
      %1362 = vmatprep.subr.bf16.mxu0 0
      %1363 = vmatpush1.bf16.msra.mxu0 %v1360
      %1364 = vmatprep.subr.bf16.mxu0 0
      %1365 = vmatpush1.bf16.msra.mxu0 0
      %1366 = vmatprep.subr.bf16.mxu0 0
      %1367 = vmatpush1.bf16.msra.mxu0 0
      %1368 = vmatprep.subr.bf16.mxu0 0
      %1369 = vmatpush1.bf16.msra.mxu0 0
      %1370 = vmatprep.subr.bf16.mxu0 0
      %1371 = vmatpush1.bf16.msra.mxu0 0
      %1372 = vmatprep.subr.bf16.mxu0 0
      %1373 = vmatpush1.bf16.msra.mxu0 0
      %1374 = vmatprep.subr.bf16.mxu0 0
      %1375 = vmatpush1.bf16.msra.mxu0 0
      %1376 = vmatprep.subr.bf16.mxu0 0
      %1377 = vmatpush1.bf16.msra.mxu0 0
      %1378 = vmatprep.subr.bf16.mxu0 0
      %1379 = vmatpush1.bf16.msra.mxu0 0
      %1380 = vmatprep.subr.bf16.mxu0 0
      %1381 = vmatpush1.bf16.msra.mxu0 0
      %1382 = vmatprep.subr.bf16.mxu0 0
      %1383 = vmatpush1.bf16.msra.mxu0 0
      %1384 = vmatprep.subr.bf16.mxu0 0
      %1385 = vmatpush1.bf16.msra.mxu0 0
      %1386 = vmatprep.subr.bf16.mxu0 0
      %1387 = vmatpush1.bf16.msra.mxu0 0
      %1388 = vmatprep.subr.bf16.mxu0 0
      %1389 = vmatpush1.bf16.msra.mxu0 0
      %1390 = vmatprep.subr.bf16.mxu0 0
      %1391 = vmatpush1.bf16.msra.mxu0 0
      %1392 = vmatprep.subr.bf16.mxu0 0
      %1393 = vmatpush1.bf16.msra.mxu0 0
      %1394 = vmatprep.mubr.bf16.mxu0 0
      %1395 = vmatmul.mubr.bf16.gmra.mrb[0].mxu0 %v1348
      %v1396 = vpop.f32.mrb[0].mxu0
      %v1397 = vadd.f32 0.0, %v1396
      %v1398 = vpop.f32.mrb[0].mxu0
      %v1399 = vpop.f32.mrb[0].mxu0
      %v1400 = vadd.f32 0.0, %v1399
      %v1401 = vpop.f32.mrb[0].mxu0
      %1402 = vmatprep.mubr.bf16.mxu0 0
      %1403 = vmatmul.mubr.bf16.gmra.mrb[0].mxu0 %v1351
      %v1404 = vpop.f32.mrb[0].mxu0
      %v1405 = vadd.f32 0.0, %v1404
      %v1406 = vpop.f32.mrb[0].mxu0
      %v1407 = vpop.f32.mrb[0].mxu0
      %v1408 = vadd.f32 0.0, %v1407
      %v1409 = vpop.f32.mrb[0].mxu0
      %1410 = vmatprep.mubr.bf16.mxu0 0
      %1411 = vmatmul.mubr.bf16.gmra.mrb[0].mxu0 %v1354
      %v1412 = vpop.f32.mrb[0].mxu0
      %v1413 = vadd.f32 0.0, %v1412
      %v1414 = vpop.f32.mrb[0].mxu0
      %v1415 = vpop.f32.mrb[0].mxu0
      %v1416 = vadd.f32 0.0, %v1415
      %v1417 = vpop.f32.mrb[0].mxu0
      %1418 = vmatprep.mubr.bf16.mxu0 0
      %1419 = vmatmul.mubr.bf16.gmra.mrb[0].mxu0 %v1357
      %v1420 = vpop.f32.mrb[0].mxu0
      %v1421 = vadd.f32 0.0, %v1420
      %v1422 = vpop.f32.mrb[0].mxu0
      %v1423 = vpop.f32.mrb[0].mxu0
      %v1424 = vadd.f32 0.0, %v1423
      %v1425 = vpop.f32.mrb[0].mxu0
      %1426 = vdwg.mxu0
      %v1427 = vadd.f32 %v1311, %v1397
      %v1428 = vadd.f32 %v1314, %v1400
      %v1429 = vadd.f32 %v1319, %v1405
      %v1430 = vadd.f32 %v1322, %v1408
      %v1431 = vadd.f32 %v1327, %v1413
      %v1432 = vadd.f32 %v1330, %v1416
      %v1433 = vadd.f32 %v1335, %v1421
      %v1434 = vadd.f32 %v1338, %v1424
      %s1435 = scalar_lea.vmem %s3, 1
      %v1436 = vld [vmem:[%s1435] sm:$0x1]
      %v1438 = vlaneseq
      %v1439 = vshrl.u32 %v1438, 7
      %v1440 = vsub.s32 0, %v1439
      %v1441 = vrot.slane %v1436, %v1440
      %v1443 = vadd.f32 %v1427, %v1441
      %v1444 = vadd.f32 %v1428, %v1441
      %v1445 = vadd.f32 %v1429, %v1441
      %v1446 = vadd.f32 %v1430, %v1441
      %v1447 = vadd.f32 %v1431, %v1441
      %v1448 = vadd.f32 %v1432, %v1441
      %v1449 = vadd.f32 %v1433, %v1441
      %v1450 = vadd.f32 %v1434, %v1441
      %vm1451 = vcmp.ge.f32.partialorder %v1443, 0.0
      %vm1452 = vcmp.ge.f32.partialorder %v1444, 0.0
      %vm1453 = vcmp.ge.f32.partialorder %v1445, 0.0
      %vm1454 = vcmp.ge.f32.partialorder %v1446, 0.0
      %vm1455 = vcmp.ge.f32.partialorder %v1447, 0.0
      %vm1456 = vcmp.ge.f32.partialorder %v1448, 0.0
      %vm1457 = vcmp.ge.f32.partialorder %v1449, 0.0
      %vm1458 = vcmp.ge.f32.partialorder %v1450, 0.0
      %v1459 = vmul.f32 %v1443, 0.1
      %v1460 = vmul.f32 %v1444, 0.1
      %v1461 = vmul.f32 %v1445, 0.1
      %v1462 = vmul.f32 %v1446, 0.1
      %v1463 = vmul.f32 %v1447, 0.1
      %v1464 = vmul.f32 %v1448, 0.1
      %v1465 = vmul.f32 %v1449, 0.1
      %v1466 = vmul.f32 %v1450, 0.1
      %v1467 = vsel %vm1451, %v1443, %v1459
      %v1468 = vsel %vm1452, %v1444, %v1460
      %v1469 = vsel %vm1453, %v1445, %v1461
      %v1470 = vsel %vm1454, %v1446, %v1462
      %v1471 = vsel %vm1455, %v1447, %v1463
      %v1472 = vsel %vm1456, %v1448, %v1464
      %v1473 = vsel %vm1457, %v1449, %v1465
      %v1474 = vsel %vm1458, %v1450, %v1466
      %v1475 = vmul.f32 %v1467, %v395
      %v1476 = vmul.f32 %v1468, %v396
      %v1477 = vmul.f32 %v1469, %v397
      %v1478 = vmul.f32 %v1470, %v398
      %v1479 = vmul.f32 %v1471, %v399
      %v1480 = vmul.f32 %v1472, %v400
      %v1481 = vmul.f32 %v1473, %v401
      %v1482 = vmul.f32 %v1474, %v402
      %v1483 = vrot.slane %v1475, 7
      %v1484 = vrot.slane %v1476, 7
      %v1485 = vrot.slane %v1477, 7
      %v1486 = vrot.slane %v1478, 7
      %v1487 = vrot.slane %v1479, 7
      %v1488 = vrot.slane %v1480, 7
      %v1489 = vrot.slane %v1481, 7
      %v1490 = vrot.slane %v1482, 7
      %v1491 = vsel %vm443, %v1489, %v1490
      %v1492 = vsel %vm443, %v1488, %v1489
      %v1493 = vsel %vm443, %v1487, %v1488
      %v1494 = vsel %vm443, %v1486, %v1487
      %v1495 = vsel %vm443, %v1485, %v1486
      %v1496 = vsel %vm443, %v1484, %v1485
      %v1497 = vsel %vm443, %v1483, %v1484
      %v1498 = vsel %vm443, %v1490, %v1483
      %v1499 = vrot.slane %v1475, 1
      %v1500 = vrot.slane %v1476, 1
      %v1501 = vrot.slane %v1477, 1
      %v1502 = vrot.slane %v1478, 1
      %v1503 = vrot.slane %v1479, 1
      %v1504 = vrot.slane %v1480, 1
      %v1505 = vrot.slane %v1481, 1
      %v1506 = vrot.slane %v1482, 1
      %v1507 = vsel %vm460, %v1505, %v1506
      %v1508 = vsel %vm460, %v1504, %v1505
      %v1509 = vsel %vm460, %v1503, %v1504
      %v1510 = vsel %vm460, %v1502, %v1503
      %v1511 = vsel %vm460, %v1501, %v1502
      %v1512 = vsel %vm460, %v1500, %v1501
      %v1513 = vsel %vm460, %v1499, %v1500
      %v1514 = vsel %vm460, %v1506, %v1499
      %v1515 = vpack.c.bf16 %v1476, %v1475
      %v1516 = vpack.c.bf16 %v1478, %v1477
      %v1517 = vpack.c.bf16 %v1480, %v1479
      %v1518 = vpack.c.bf16 %v1482, %v1481
      %s1519 = scalar_lea.vmem %s4, 8
      %v1520 = vld [vmem:[%s1519] sm:$0x3]
      %v1521 = vpack.c.bf16 %v1497, %v1498
      %v1522 = vpack.c.bf16 %v1495, %v1496
      %v1523 = vpack.c.bf16 %v1493, %v1494
      %v1524 = vpack.c.bf16 %v1491, %v1492
      %s1525 = scalar_lea.vmem %s4, 6
      %v1526 = vld [vmem:[%s1525] sm:$0x3]
      %v1528 = vsel %vm480, %v1521, 0
      %v1531 = vsel %vm480, %v1522, 0
      %v1534 = vsel %vm480, %v1523, 0
      %v1537 = vsel %vm480, %v1524, 0
      %v1540 = vsel %vm493, %v1526, 0
      %1542 = vmatprep.subr.bf16.mxu0 0
      %1543 = vmatpush1.bf16.msra.mxu0 %v1540
      %1544 = vmatprep.subr.bf16.mxu0 0
      %1545 = vmatpush1.bf16.msra.mxu0 0
      %1546 = vmatprep.subr.bf16.mxu0 0
      %1547 = vmatpush1.bf16.msra.mxu0 0
      %1548 = vmatprep.subr.bf16.mxu0 0
      %1549 = vmatpush1.bf16.msra.mxu0 0
      %1550 = vmatprep.subr.bf16.mxu0 0
      %1551 = vmatpush1.bf16.msra.mxu0 0
      %1552 = vmatprep.subr.bf16.mxu0 0
      %1553 = vmatpush1.bf16.msra.mxu0 0
      %1554 = vmatprep.subr.bf16.mxu0 0
      %1555 = vmatpush1.bf16.msra.mxu0 0
      %1556 = vmatprep.subr.bf16.mxu0 0
      %1557 = vmatpush1.bf16.msra.mxu0 0
      %1558 = vmatprep.subr.bf16.mxu0 0
      %1559 = vmatpush1.bf16.msra.mxu0 0
      %1560 = vmatprep.subr.bf16.mxu0 0
      %1561 = vmatpush1.bf16.msra.mxu0 0
      %1562 = vmatprep.subr.bf16.mxu0 0
      %1563 = vmatpush1.bf16.msra.mxu0 0
      %1564 = vmatprep.subr.bf16.mxu0 0
      %1565 = vmatpush1.bf16.msra.mxu0 0
      %1566 = vmatprep.subr.bf16.mxu0 0
      %1567 = vmatpush1.bf16.msra.mxu0 0
      %1568 = vmatprep.subr.bf16.mxu0 0
      %1569 = vmatpush1.bf16.msra.mxu0 0
      %1570 = vmatprep.subr.bf16.mxu0 0
      %1571 = vmatpush1.bf16.msra.mxu0 0
      %1572 = vmatprep.subr.bf16.mxu0 0
      %1573 = vmatpush1.bf16.msra.mxu0 0
      %1574 = vmatprep.mubr.bf16.mxu0 0
      %1575 = vmatmul.mubr.bf16.gmra.mrb[0].mxu0 %v1528
      %v1576 = vpop.f32.mrb[0].mxu0
      %v1577 = vadd.f32 0.0, %v1576
      %v1578 = vpop.f32.mrb[0].mxu0
      %v1579 = vpop.f32.mrb[0].mxu0
      %v1580 = vadd.f32 0.0, %v1579
      %v1581 = vpop.f32.mrb[0].mxu0
      %1582 = vmatprep.mubr.bf16.mxu0 0
      %1583 = vmatmul.mubr.bf16.gmra.mrb[0].mxu0 %v1531
      %v1584 = vpop.f32.mrb[0].mxu0
      %v1585 = vadd.f32 0.0, %v1584
      %v1586 = vpop.f32.mrb[0].mxu0
      %v1587 = vpop.f32.mrb[0].mxu0
      %v1588 = vadd.f32 0.0, %v1587
      %v1589 = vpop.f32.mrb[0].mxu0
      %1590 = vmatprep.mubr.bf16.mxu0 0
      %1591 = vmatmul.mubr.bf16.gmra.mrb[0].mxu0 %v1534
      %v1592 = vpop.f32.mrb[0].mxu0
      %v1593 = vadd.f32 0.0, %v1592
      %v1594 = vpop.f32.mrb[0].mxu0
      %v1595 = vpop.f32.mrb[0].mxu0
      %v1596 = vadd.f32 0.0, %v1595
      %v1597 = vpop.f32.mrb[0].mxu0
      %1598 = vmatprep.mubr.bf16.mxu0 0
      %1599 = vmatmul.mubr.bf16.gmra.mrb[0].mxu0 %v1537
      %v1600 = vpop.f32.mrb[0].mxu0
      %v1601 = vadd.f32 0.0, %v1600
      %v1602 = vpop.f32.mrb[0].mxu0
      %v1603 = vpop.f32.mrb[0].mxu0
      %v1604 = vadd.f32 0.0, %v1603
      %v1605 = vpop.f32.mrb[0].mxu0
      %1606 = vdwg.mxu0
      %v1608 = vsel %vm480, %v1515, 0
      %v1611 = vsel %vm480, %v1516, 0
      %v1614 = vsel %vm480, %v1517, 0
      %v1617 = vsel %vm480, %v1518, 0
      %v1620 = vsel %vm493, %v1520, 0
      %1622 = vmatprep.subr.bf16.mxu0 0
      %1623 = vmatpush1.bf16.msra.mxu0 %v1620
      %1624 = vmatprep.subr.bf16.mxu0 0
      %1625 = vmatpush1.bf16.msra.mxu0 0
      %1626 = vmatprep.subr.bf16.mxu0 0
      %1627 = vmatpush1.bf16.msra.mxu0 0
      %1628 = vmatprep.subr.bf16.mxu0 0
      %1629 = vmatpush1.bf16.msra.mxu0 0
      %1630 = vmatprep.subr.bf16.mxu0 0
      %1631 = vmatpush1.bf16.msra.mxu0 0
      %1632 = vmatprep.subr.bf16.mxu0 0
      %1633 = vmatpush1.bf16.msra.mxu0 0
      %1634 = vmatprep.subr.bf16.mxu0 0
      %1635 = vmatpush1.bf16.msra.mxu0 0
      %1636 = vmatprep.subr.bf16.mxu0 0
      %1637 = vmatpush1.bf16.msra.mxu0 0
      %1638 = vmatprep.subr.bf16.mxu0 0
      %1639 = vmatpush1.bf16.msra.mxu0 0
      %1640 = vmatprep.subr.bf16.mxu0 0
      %1641 = vmatpush1.bf16.msra.mxu0 0
      %1642 = vmatprep.subr.bf16.mxu0 0
      %1643 = vmatpush1.bf16.msra.mxu0 0
      %1644 = vmatprep.subr.bf16.mxu0 0
      %1645 = vmatpush1.bf16.msra.mxu0 0
      %1646 = vmatprep.subr.bf16.mxu0 0
      %1647 = vmatpush1.bf16.msra.mxu0 0
      %1648 = vmatprep.subr.bf16.mxu0 0
      %1649 = vmatpush1.bf16.msra.mxu0 0
      %1650 = vmatprep.subr.bf16.mxu0 0
      %1651 = vmatpush1.bf16.msra.mxu0 0
      %1652 = vmatprep.subr.bf16.mxu0 0
      %1653 = vmatpush1.bf16.msra.mxu0 0
      %1654 = vmatprep.mubr.bf16.mxu0 0
      %1655 = vmatmul.mubr.bf16.gmra.mrb[0].mxu0 %v1608
      %v1656 = vpop.f32.mrb[0].mxu0
      %v1657 = vadd.f32 %v1577, %v1656
      %v1658 = vpop.f32.mrb[0].mxu0
      %v1659 = vpop.f32.mrb[0].mxu0
      %v1660 = vadd.f32 %v1580, %v1659
      %v1661 = vpop.f32.mrb[0].mxu0
      %1662 = vmatprep.mubr.bf16.mxu0 0
      %1663 = vmatmul.mubr.bf16.gmra.mrb[0].mxu0 %v1611
      %v1664 = vpop.f32.mrb[0].mxu0
      %v1665 = vadd.f32 %v1585, %v1664
      %v1666 = vpop.f32.mrb[0].mxu0
      %v1667 = vpop.f32.mrb[0].mxu0
      %v1668 = vadd.f32 %v1588, %v1667
      %v1669 = vpop.f32.mrb[0].mxu0
      %1670 = vmatprep.mubr.bf16.mxu0 0
      %1671 = vmatmul.mubr.bf16.gmra.mrb[0].mxu0 %v1614
      %v1672 = vpop.f32.mrb[0].mxu0
      %v1673 = vadd.f32 %v1593, %v1672
      %v1674 = vpop.f32.mrb[0].mxu0
      %v1675 = vpop.f32.mrb[0].mxu0
      %v1676 = vadd.f32 %v1596, %v1675
      %v1677 = vpop.f32.mrb[0].mxu0
      %1678 = vmatprep.mubr.bf16.mxu0 0
      %1679 = vmatmul.mubr.bf16.gmra.mrb[0].mxu0 %v1617
      %v1680 = vpop.f32.mrb[0].mxu0
      %v1681 = vadd.f32 %v1601, %v1680
      %v1682 = vpop.f32.mrb[0].mxu0
      %v1683 = vpop.f32.mrb[0].mxu0
      %v1684 = vadd.f32 %v1604, %v1683
      %v1685 = vpop.f32.mrb[0].mxu0
      %1686 = vdwg.mxu0
      %v1687 = vpack.c.bf16 %v1512, %v1513
      %v1688 = vpack.c.bf16 %v1510, %v1511
      %v1689 = vpack.c.bf16 %v1508, %v1509
      %v1690 = vpack.c.bf16 %v1514, %v1507
      %s1691 = scalar_lea.vmem %s4, 10
      %v1692 = vld [vmem:[%s1691] sm:$0x3]
      %v1694 = vsel %vm480, %v1687, 0
      %v1697 = vsel %vm480, %v1688, 0
      %v1700 = vsel %vm480, %v1689, 0
      %v1703 = vsel %vm480, %v1690, 0
      %v1706 = vsel %vm493, %v1692, 0
      %1708 = vmatprep.subr.bf16.mxu0 0
      %1709 = vmatpush1.bf16.msra.mxu0 %v1706
      %1710 = vmatprep.subr.bf16.mxu0 0
      %1711 = vmatpush1.bf16.msra.mxu0 0
      %1712 = vmatprep.subr.bf16.mxu0 0
      %1713 = vmatpush1.bf16.msra.mxu0 0
      %1714 = vmatprep.subr.bf16.mxu0 0
      %1715 = vmatpush1.bf16.msra.mxu0 0
      %1716 = vmatprep.subr.bf16.mxu0 0
      %1717 = vmatpush1.bf16.msra.mxu0 0
      %1718 = vmatprep.subr.bf16.mxu0 0
      %1719 = vmatpush1.bf16.msra.mxu0 0
      %1720 = vmatprep.subr.bf16.mxu0 0
      %1721 = vmatpush1.bf16.msra.mxu0 0
      %1722 = vmatprep.subr.bf16.mxu0 0
      %1723 = vmatpush1.bf16.msra.mxu0 0
      %1724 = vmatprep.subr.bf16.mxu0 0
      %1725 = vmatpush1.bf16.msra.mxu0 0
      %1726 = vmatprep.subr.bf16.mxu0 0
      %1727 = vmatpush1.bf16.msra.mxu0 0
      %1728 = vmatprep.subr.bf16.mxu0 0
      %1729 = vmatpush1.bf16.msra.mxu0 0
      %1730 = vmatprep.subr.bf16.mxu0 0
      %1731 = vmatpush1.bf16.msra.mxu0 0
      %1732 = vmatprep.subr.bf16.mxu0 0
      %1733 = vmatpush1.bf16.msra.mxu0 0
      %1734 = vmatprep.subr.bf16.mxu0 0
      %1735 = vmatpush1.bf16.msra.mxu0 0
      %1736 = vmatprep.subr.bf16.mxu0 0
      %1737 = vmatpush1.bf16.msra.mxu0 0
      %1738 = vmatprep.subr.bf16.mxu0 0
      %1739 = vmatpush1.bf16.msra.mxu0 0
      %1740 = vmatprep.mubr.bf16.mxu0 0
      %1741 = vmatmul.mubr.bf16.gmra.mrb[0].mxu0 %v1694
      %v1742 = vpop.f32.mrb[0].mxu0
      %v1743 = vadd.f32 0.0, %v1742
      %v1744 = vpop.f32.mrb[0].mxu0
      %v1745 = vpop.f32.mrb[0].mxu0
      %v1746 = vadd.f32 0.0, %v1745
      %v1747 = vpop.f32.mrb[0].mxu0
      %1748 = vmatprep.mubr.bf16.mxu0 0
      %1749 = vmatmul.mubr.bf16.gmra.mrb[0].mxu0 %v1697
      %v1750 = vpop.f32.mrb[0].mxu0
      %v1751 = vadd.f32 0.0, %v1750
      %v1752 = vpop.f32.mrb[0].mxu0
      %v1753 = vpop.f32.mrb[0].mxu0
      %v1754 = vadd.f32 0.0, %v1753
      %v1755 = vpop.f32.mrb[0].mxu0
      %1756 = vmatprep.mubr.bf16.mxu0 0
      %1757 = vmatmul.mubr.bf16.gmra.mrb[0].mxu0 %v1700
      %v1758 = vpop.f32.mrb[0].mxu0
      %v1759 = vadd.f32 0.0, %v1758
      %v1760 = vpop.f32.mrb[0].mxu0
      %v1761 = vpop.f32.mrb[0].mxu0
      %v1762 = vadd.f32 0.0, %v1761
      %v1763 = vpop.f32.mrb[0].mxu0
      %1764 = vmatprep.mubr.bf16.mxu0 0
      %1765 = vmatmul.mubr.bf16.gmra.mrb[0].mxu0 %v1703
      %v1766 = vpop.f32.mrb[0].mxu0
      %v1767 = vadd.f32 0.0, %v1766
      %v1768 = vpop.f32.mrb[0].mxu0
      %v1769 = vpop.f32.mrb[0].mxu0
      %v1770 = vadd.f32 0.0, %v1769
      %v1771 = vpop.f32.mrb[0].mxu0
      %1772 = vdwg.mxu0
      %v1773 = vadd.f32 %v1657, %v1743
      %v1774 = vadd.f32 %v1660, %v1746
      %v1775 = vadd.f32 %v1665, %v1751
      %v1776 = vadd.f32 %v1668, %v1754
      %v1777 = vadd.f32 %v1673, %v1759
      %v1778 = vadd.f32 %v1676, %v1762
      %v1779 = vadd.f32 %v1681, %v1767
      %v1780 = vadd.f32 %v1684, %v1770
      %s1781 = scalar_lea.vmem %s5, 1
      %v1782 = vld [vmem:[%s1781] sm:$0x1]
      %v1784 = vlaneseq
      %v1785 = vshrl.u32 %v1784, 7
      %v1786 = vsub.s32 0, %v1785
      %v1787 = vrot.slane %v1782, %v1786
      %v1789 = vadd.f32 %v1773, %v1787
      %v1790 = vadd.f32 %v1774, %v1787
      %v1791 = vadd.f32 %v1775, %v1787
      %v1792 = vadd.f32 %v1776, %v1787
      %v1793 = vadd.f32 %v1777, %v1787
      %v1794 = vadd.f32 %v1778, %v1787
      %v1795 = vadd.f32 %v1779, %v1787
      %v1796 = vadd.f32 %v1780, %v1787
      %v1797 = vadd.f32 %v1095, %v1789
      %v1798 = vadd.f32 %v1096, %v1790
      %v1799 = vadd.f32 %v1097, %v1791
      %v1800 = vadd.f32 %v1098, %v1792
      %v1801 = vadd.f32 %v1099, %v1793
      %v1802 = vadd.f32 %v1100, %v1794
      %v1803 = vadd.f32 %v1101, %v1795
      %v1804 = vadd.f32 %v1102, %v1796
      %vm1805 = vcmp.ge.f32.partialorder %v1797, 0.0
      %vm1806 = vcmp.ge.f32.partialorder %v1798, 0.0
      %vm1807 = vcmp.ge.f32.partialorder %v1799, 0.0
      %vm1808 = vcmp.ge.f32.partialorder %v1800, 0.0
      %vm1809 = vcmp.ge.f32.partialorder %v1801, 0.0
      %vm1810 = vcmp.ge.f32.partialorder %v1802, 0.0
      %vm1811 = vcmp.ge.f32.partialorder %v1803, 0.0
      %vm1812 = vcmp.ge.f32.partialorder %v1804, 0.0
      %v1813 = vmul.f32 %v1797, 0.1
      %v1814 = vmul.f32 %v1798, 0.1
      %v1815 = vmul.f32 %v1799, 0.1
      %v1816 = vmul.f32 %v1800, 0.1
      %v1817 = vmul.f32 %v1801, 0.1
      %v1818 = vmul.f32 %v1802, 0.1
      %v1819 = vmul.f32 %v1803, 0.1
      %v1820 = vmul.f32 %v1804, 0.1
      %v1821 = vsel %vm1805, %v1797, %v1813
      %v1822 = vsel %vm1806, %v1798, %v1814
      %v1823 = vsel %vm1807, %v1799, %v1815
      %v1824 = vsel %vm1808, %v1800, %v1816
      %v1825 = vsel %vm1809, %v1801, %v1817
      %v1826 = vsel %vm1810, %v1802, %v1818
      %v1827 = vsel %vm1811, %v1803, %v1819
      %v1828 = vsel %vm1812, %v1804, %v1820
      %v1829 = vmul.f32 %v1821, %v395
      %v1830 = vmul.f32 %v1822, %v396
      %v1831 = vmul.f32 %v1823, %v397
      %v1832 = vmul.f32 %v1824, %v398
      %v1833 = vmul.f32 %v1825, %v399
      %v1834 = vmul.f32 %v1826, %v400
      %v1835 = vmul.f32 %v1827, %v401
      %v1836 = vmul.f32 %v1828, %v402
      %v1837 = vrot.slane %v1829, 3
      %v1838 = vrot.slane %v1830, 3
      %v1839 = vrot.slane %v1831, 3
      %v1840 = vrot.slane %v1832, 3
      %v1841 = vrot.slane %v1833, 3
      %v1842 = vrot.slane %v1834, 3
      %v1843 = vrot.slane %v1835, 3
      %v1844 = vrot.slane %v1836, 3
      %v1845 = vsel %vm1160, %v1843, %v1844
      %v1846 = vsel %vm1160, %v1842, %v1843
      %v1847 = vsel %vm1160, %v1841, %v1842
      %v1848 = vsel %vm1160, %v1840, %v1841
      %v1849 = vsel %vm1160, %v1839, %v1840
      %v1850 = vsel %vm1160, %v1838, %v1839
      %v1851 = vsel %vm1160, %v1837, %v1838
      %v1852 = vsel %vm1160, %v1844, %v1837
      %v1853 = vrot.slane %v1829, 5
      %v1854 = vrot.slane %v1830, 5
      %v1855 = vrot.slane %v1831, 5
      %v1856 = vrot.slane %v1832, 5
      %v1857 = vrot.slane %v1833, 5
      %v1858 = vrot.slane %v1834, 5
      %v1859 = vrot.slane %v1835, 5
      %v1860 = vrot.slane %v1836, 5
      %v1861 = vsel %vm1143, %v1859, %v1860
      %v1862 = vsel %vm1143, %v1858, %v1859
      %v1863 = vsel %vm1143, %v1857, %v1858
      %v1864 = vsel %vm1143, %v1856, %v1857
      %v1865 = vsel %vm1143, %v1855, %v1856
      %v1866 = vsel %vm1143, %v1854, %v1855
      %v1867 = vsel %vm1143, %v1853, %v1854
      %v1868 = vsel %vm1143, %v1860, %v1853
      %v1869 = vpack.c.bf16 %v1830, %v1829
      %v1870 = vpack.c.bf16 %v1832, %v1831
      %v1871 = vpack.c.bf16 %v1834, %v1833
      %v1872 = vpack.c.bf16 %v1836, %v1835
      %s1873 = scalar_lea.vmem %s2, 14
      %v1874 = vld [vmem:[%s1873] sm:$0x3]
      %v1875 = vpack.c.bf16 %v1851, %v1852
      %v1876 = vpack.c.bf16 %v1849, %v1850
      %v1877 = vpack.c.bf16 %v1847, %v1848
      %v1878 = vpack.c.bf16 %v1845, %v1846
      %s1879 = scalar_lea.vmem %s2, 12
      %v1880 = vld [vmem:[%s1879] sm:$0x3]
      %v1882 = vsel %vm480, %v1875, 0
      %v1885 = vsel %vm480, %v1876, 0
      %v1888 = vsel %vm480, %v1877, 0
      %v1891 = vsel %vm480, %v1878, 0
      %v1894 = vsel %vm493, %v1880, 0
      %1896 = vmatprep.subr.bf16.mxu0 0
      %1897 = vmatpush1.bf16.msra.mxu0 %v1894
      %1898 = vmatprep.subr.bf16.mxu0 0
      %1899 = vmatpush1.bf16.msra.mxu0 0
      %1900 = vmatprep.subr.bf16.mxu0 0
      %1901 = vmatpush1.bf16.msra.mxu0 0
      %1902 = vmatprep.subr.bf16.mxu0 0
      %1903 = vmatpush1.bf16.msra.mxu0 0
      %1904 = vmatprep.subr.bf16.mxu0 0
      %1905 = vmatpush1.bf16.msra.mxu0 0
      %1906 = vmatprep.subr.bf16.mxu0 0
      %1907 = vmatpush1.bf16.msra.mxu0 0
      %1908 = vmatprep.subr.bf16.mxu0 0
      %1909 = vmatpush1.bf16.msra.mxu0 0
      %1910 = vmatprep.subr.bf16.mxu0 0
      %1911 = vmatpush1.bf16.msra.mxu0 0
      %1912 = vmatprep.subr.bf16.mxu0 0
      %1913 = vmatpush1.bf16.msra.mxu0 0
      %1914 = vmatprep.subr.bf16.mxu0 0
      %1915 = vmatpush1.bf16.msra.mxu0 0
      %1916 = vmatprep.subr.bf16.mxu0 0
      %1917 = vmatpush1.bf16.msra.mxu0 0
      %1918 = vmatprep.subr.bf16.mxu0 0
      %1919 = vmatpush1.bf16.msra.mxu0 0
      %1920 = vmatprep.subr.bf16.mxu0 0
      %1921 = vmatpush1.bf16.msra.mxu0 0
      %1922 = vmatprep.subr.bf16.mxu0 0
      %1923 = vmatpush1.bf16.msra.mxu0 0
      %1924 = vmatprep.subr.bf16.mxu0 0
      %1925 = vmatpush1.bf16.msra.mxu0 0
      %1926 = vmatprep.subr.bf16.mxu0 0
      %1927 = vmatpush1.bf16.msra.mxu0 0
      %1928 = vmatprep.mubr.bf16.mxu0 0
      %1929 = vmatmul.mubr.bf16.gmra.mrb[0].mxu0 %v1882
      %v1930 = vpop.f32.mrb[0].mxu0
      %v1931 = vadd.f32 0.0, %v1930
      %v1932 = vpop.f32.mrb[0].mxu0
      %v1933 = vpop.f32.mrb[0].mxu0
      %v1934 = vadd.f32 0.0, %v1933
      %v1935 = vpop.f32.mrb[0].mxu0
      %1936 = vmatprep.mubr.bf16.mxu0 0
      %1937 = vmatmul.mubr.bf16.gmra.mrb[0].mxu0 %v1885
      %v1938 = vpop.f32.mrb[0].mxu0
      %v1939 = vadd.f32 0.0, %v1938
      %v1940 = vpop.f32.mrb[0].mxu0
      %v1941 = vpop.f32.mrb[0].mxu0
      %v1942 = vadd.f32 0.0, %v1941
      %v1943 = vpop.f32.mrb[0].mxu0
      %1944 = vmatprep.mubr.bf16.mxu0 0
      %1945 = vmatmul.mubr.bf16.gmra.mrb[0].mxu0 %v1888
      %v1946 = vpop.f32.mrb[0].mxu0
      %v1947 = vadd.f32 0.0, %v1946
      %v1948 = vpop.f32.mrb[0].mxu0
      %v1949 = vpop.f32.mrb[0].mxu0
      %v1950 = vadd.f32 0.0, %v1949
      %v1951 = vpop.f32.mrb[0].mxu0
      %1952 = vmatprep.mubr.bf16.mxu0 0
      %1953 = vmatmul.mubr.bf16.gmra.mrb[0].mxu0 %v1891
      %v1954 = vpop.f32.mrb[0].mxu0
      %v1955 = vadd.f32 0.0, %v1954
      %v1956 = vpop.f32.mrb[0].mxu0
      %v1957 = vpop.f32.mrb[0].mxu0
      %v1958 = vadd.f32 0.0, %v1957
      %v1959 = vpop.f32.mrb[0].mxu0
      %1960 = vdwg.mxu0
      %v1962 = vsel %vm480, %v1869, 0
      %v1965 = vsel %vm480, %v1870, 0
      %v1968 = vsel %vm480, %v1871, 0
      %v1971 = vsel %vm480, %v1872, 0
      %v1974 = vsel %vm493, %v1874, 0
      %1976 = vmatprep.subr.bf16.mxu0 0
      %1977 = vmatpush1.bf16.msra.mxu0 %v1974
      %1978 = vmatprep.subr.bf16.mxu0 0
      %1979 = vmatpush1.bf16.msra.mxu0 0
      %1980 = vmatprep.subr.bf16.mxu0 0
      %1981 = vmatpush1.bf16.msra.mxu0 0
      %1982 = vmatprep.subr.bf16.mxu0 0
      %1983 = vmatpush1.bf16.msra.mxu0 0
      %1984 = vmatprep.subr.bf16.mxu0 0
      %1985 = vmatpush1.bf16.msra.mxu0 0
      %1986 = vmatprep.subr.bf16.mxu0 0
      %1987 = vmatpush1.bf16.msra.mxu0 0
      %1988 = vmatprep.subr.bf16.mxu0 0
      %1989 = vmatpush1.bf16.msra.mxu0 0
      %1990 = vmatprep.subr.bf16.mxu0 0
      %1991 = vmatpush1.bf16.msra.mxu0 0
      %1992 = vmatprep.subr.bf16.mxu0 0
      %1993 = vmatpush1.bf16.msra.mxu0 0
      %1994 = vmatprep.subr.bf16.mxu0 0
      %1995 = vmatpush1.bf16.msra.mxu0 0
      %1996 = vmatprep.subr.bf16.mxu0 0
      %1997 = vmatpush1.bf16.msra.mxu0 0
      %1998 = vmatprep.subr.bf16.mxu0 0
      %1999 = vmatpush1.bf16.msra.mxu0 0
      %2000 = vmatprep.subr.bf16.mxu0 0
      %2001 = vmatpush1.bf16.msra.mxu0 0
      %2002 = vmatprep.subr.bf16.mxu0 0
      %2003 = vmatpush1.bf16.msra.mxu0 0
      %2004 = vmatprep.subr.bf16.mxu0 0
      %2005 = vmatpush1.bf16.msra.mxu0 0
      %2006 = vmatprep.subr.bf16.mxu0 0
      %2007 = vmatpush1.bf16.msra.mxu0 0
      %2008 = vmatprep.mubr.bf16.mxu0 0
      %2009 = vmatmul.mubr.bf16.gmra.mrb[0].mxu0 %v1962
      %v2010 = vpop.f32.mrb[0].mxu0
      %v2011 = vadd.f32 %v1931, %v2010
      %v2012 = vpop.f32.mrb[0].mxu0
      %v2013 = vpop.f32.mrb[0].mxu0
      %v2014 = vadd.f32 %v1934, %v2013
      %v2015 = vpop.f32.mrb[0].mxu0
      %2016 = vmatprep.mubr.bf16.mxu0 0
      %2017 = vmatmul.mubr.bf16.gmra.mrb[0].mxu0 %v1965
      %v2018 = vpop.f32.mrb[0].mxu0
      %v2019 = vadd.f32 %v1939, %v2018
      %v2020 = vpop.f32.mrb[0].mxu0
      %v2021 = vpop.f32.mrb[0].mxu0
      %v2022 = vadd.f32 %v1942, %v2021
      %v2023 = vpop.f32.mrb[0].mxu0
      %2024 = vmatprep.mubr.bf16.mxu0 0
      %2025 = vmatmul.mubr.bf16.gmra.mrb[0].mxu0 %v1968
      %v2026 = vpop.f32.mrb[0].mxu0
      %v2027 = vadd.f32 %v1947, %v2026
      %v2028 = vpop.f32.mrb[0].mxu0
      %v2029 = vpop.f32.mrb[0].mxu0
      %v2030 = vadd.f32 %v1950, %v2029
      %v2031 = vpop.f32.mrb[0].mxu0
      %2032 = vmatprep.mubr.bf16.mxu0 0
      %2033 = vmatmul.mubr.bf16.gmra.mrb[0].mxu0 %v1971
      %v2034 = vpop.f32.mrb[0].mxu0
      %v2035 = vadd.f32 %v1955, %v2034
      %v2036 = vpop.f32.mrb[0].mxu0
      %v2037 = vpop.f32.mrb[0].mxu0
      %v2038 = vadd.f32 %v1958, %v2037
      %v2039 = vpop.f32.mrb[0].mxu0
      %2040 = vdwg.mxu0
      %v2041 = vpack.c.bf16 %v1866, %v1867
      %v2042 = vpack.c.bf16 %v1864, %v1865
      %v2043 = vpack.c.bf16 %v1862, %v1863
      %v2044 = vpack.c.bf16 %v1868, %v1861
      %s2045 = scalar_lea.vmem %s2, 16
      %v2046 = vld [vmem:[%s2045] sm:$0x3]
      %v2048 = vsel %vm480, %v2041, 0
      %v2051 = vsel %vm480, %v2042, 0
      %v2054 = vsel %vm480, %v2043, 0
      %v2057 = vsel %vm480, %v2044, 0
      %v2060 = vsel %vm493, %v2046, 0
      %2062 = vmatprep.subr.bf16.mxu0 0
      %2063 = vmatpush1.bf16.msra.mxu0 %v2060
      %2064 = vmatprep.subr.bf16.mxu0 0
      %2065 = vmatpush1.bf16.msra.mxu0 0
      %2066 = vmatprep.subr.bf16.mxu0 0
      %2067 = vmatpush1.bf16.msra.mxu0 0
      %2068 = vmatprep.subr.bf16.mxu0 0
      %2069 = vmatpush1.bf16.msra.mxu0 0
      %2070 = vmatprep.subr.bf16.mxu0 0
      %2071 = vmatpush1.bf16.msra.mxu0 0
      %2072 = vmatprep.subr.bf16.mxu0 0
      %2073 = vmatpush1.bf16.msra.mxu0 0
      %2074 = vmatprep.subr.bf16.mxu0 0
      %2075 = vmatpush1.bf16.msra.mxu0 0
      %2076 = vmatprep.subr.bf16.mxu0 0
      %2077 = vmatpush1.bf16.msra.mxu0 0
      %2078 = vmatprep.subr.bf16.mxu0 0
      %2079 = vmatpush1.bf16.msra.mxu0 0
      %2080 = vmatprep.subr.bf16.mxu0 0
      %2081 = vmatpush1.bf16.msra.mxu0 0
      %2082 = vmatprep.subr.bf16.mxu0 0
      %2083 = vmatpush1.bf16.msra.mxu0 0
      %2084 = vmatprep.subr.bf16.mxu0 0
      %2085 = vmatpush1.bf16.msra.mxu0 0
      %2086 = vmatprep.subr.bf16.mxu0 0
      %2087 = vmatpush1.bf16.msra.mxu0 0
      %2088 = vmatprep.subr.bf16.mxu0 0
      %2089 = vmatpush1.bf16.msra.mxu0 0
      %2090 = vmatprep.subr.bf16.mxu0 0
      %2091 = vmatpush1.bf16.msra.mxu0 0
      %2092 = vmatprep.subr.bf16.mxu0 0
      %2093 = vmatpush1.bf16.msra.mxu0 0
      %2094 = vmatprep.mubr.bf16.mxu0 0
      %2095 = vmatmul.mubr.bf16.gmra.mrb[0].mxu0 %v2048
      %v2096 = vpop.f32.mrb[0].mxu0
      %v2097 = vadd.f32 0.0, %v2096
      %v2098 = vpop.f32.mrb[0].mxu0
      %v2099 = vpop.f32.mrb[0].mxu0
      %v2100 = vadd.f32 0.0, %v2099
      %v2101 = vpop.f32.mrb[0].mxu0
      %2102 = vmatprep.mubr.bf16.mxu0 0
      %2103 = vmatmul.mubr.bf16.gmra.mrb[0].mxu0 %v2051
      %v2104 = vpop.f32.mrb[0].mxu0
      %v2105 = vadd.f32 0.0, %v2104
      %v2106 = vpop.f32.mrb[0].mxu0
      %v2107 = vpop.f32.mrb[0].mxu0
      %v2108 = vadd.f32 0.0, %v2107
      %v2109 = vpop.f32.mrb[0].mxu0
      %2110 = vmatprep.mubr.bf16.mxu0 0
      %2111 = vmatmul.mubr.bf16.gmra.mrb[0].mxu0 %v2054
      %v2112 = vpop.f32.mrb[0].mxu0
      %v2113 = vadd.f32 0.0, %v2112
      %v2114 = vpop.f32.mrb[0].mxu0
      %v2115 = vpop.f32.mrb[0].mxu0
      %v2116 = vadd.f32 0.0, %v2115
      %v2117 = vpop.f32.mrb[0].mxu0
      %2118 = vmatprep.mubr.bf16.mxu0 0
      %2119 = vmatmul.mubr.bf16.gmra.mrb[0].mxu0 %v2057
      %v2120 = vpop.f32.mrb[0].mxu0
      %v2121 = vadd.f32 0.0, %v2120
      %v2122 = vpop.f32.mrb[0].mxu0
      %v2123 = vpop.f32.mrb[0].mxu0
      %v2124 = vadd.f32 0.0, %v2123
      %v2125 = vpop.f32.mrb[0].mxu0
      %2126 = vdwg.mxu0
      %v2127 = vadd.f32 %v2011, %v2097
      %v2128 = vadd.f32 %v2014, %v2100
      %v2129 = vadd.f32 %v2019, %v2105
      %v2130 = vadd.f32 %v2022, %v2108
      %v2131 = vadd.f32 %v2027, %v2113
      %v2132 = vadd.f32 %v2030, %v2116
      %v2133 = vadd.f32 %v2035, %v2121
      %v2134 = vadd.f32 %v2038, %v2124
      %s2135 = scalar_lea.vmem %s3, 2
      %v2136 = vld [vmem:[%s2135] sm:$0x1]
      %v2138 = vlaneseq
      %v2139 = vshrl.u32 %v2138, 7
      %v2140 = vsub.s32 0, %v2139
      %v2141 = vrot.slane %v2136, %v2140
      %v2143 = vadd.f32 %v2127, %v2141
      %v2144 = vadd.f32 %v2128, %v2141
      %v2145 = vadd.f32 %v2129, %v2141
      %v2146 = vadd.f32 %v2130, %v2141
      %v2147 = vadd.f32 %v2131, %v2141
      %v2148 = vadd.f32 %v2132, %v2141
      %v2149 = vadd.f32 %v2133, %v2141
      %v2150 = vadd.f32 %v2134, %v2141
      %vm2151 = vcmp.ge.f32.partialorder %v2143, 0.0
      %vm2152 = vcmp.ge.f32.partialorder %v2144, 0.0
      %vm2153 = vcmp.ge.f32.partialorder %v2145, 0.0
      %vm2154 = vcmp.ge.f32.partialorder %v2146, 0.0
      %vm2155 = vcmp.ge.f32.partialorder %v2147, 0.0
      %vm2156 = vcmp.ge.f32.partialorder %v2148, 0.0
      %vm2157 = vcmp.ge.f32.partialorder %v2149, 0.0
      %vm2158 = vcmp.ge.f32.partialorder %v2150, 0.0
      %v2159 = vmul.f32 %v2143, 0.1
      %v2160 = vmul.f32 %v2144, 0.1
      %v2161 = vmul.f32 %v2145, 0.1
      %v2162 = vmul.f32 %v2146, 0.1
      %v2163 = vmul.f32 %v2147, 0.1
      %v2164 = vmul.f32 %v2148, 0.1
      %v2165 = vmul.f32 %v2149, 0.1
      %v2166 = vmul.f32 %v2150, 0.1
      %v2167 = vsel %vm2151, %v2143, %v2159
      %v2168 = vsel %vm2152, %v2144, %v2160
      %v2169 = vsel %vm2153, %v2145, %v2161
      %v2170 = vsel %vm2154, %v2146, %v2162
      %v2171 = vsel %vm2155, %v2147, %v2163
      %v2172 = vsel %vm2156, %v2148, %v2164
      %v2173 = vsel %vm2157, %v2149, %v2165
      %v2174 = vsel %vm2158, %v2150, %v2166
      %v2175 = vmul.f32 %v2167, %v395
      %v2176 = vmul.f32 %v2168, %v396
      %v2177 = vmul.f32 %v2169, %v397
      %v2178 = vmul.f32 %v2170, %v398
      %v2179 = vmul.f32 %v2171, %v399
      %v2180 = vmul.f32 %v2172, %v400
      %v2181 = vmul.f32 %v2173, %v401
      %v2182 = vmul.f32 %v2174, %v402
      %v2183 = vrot.slane %v2175, 7
      %v2184 = vrot.slane %v2176, 7
      %v2185 = vrot.slane %v2177, 7
      %v2186 = vrot.slane %v2178, 7
      %v2187 = vrot.slane %v2179, 7
      %v2188 = vrot.slane %v2180, 7
      %v2189 = vrot.slane %v2181, 7
      %v2190 = vrot.slane %v2182, 7
      %v2191 = vsel %vm443, %v2189, %v2190
      %v2192 = vsel %vm443, %v2188, %v2189
      %v2193 = vsel %vm443, %v2187, %v2188
      %v2194 = vsel %vm443, %v2186, %v2187
      %v2195 = vsel %vm443, %v2185, %v2186
      %v2196 = vsel %vm443, %v2184, %v2185
      %v2197 = vsel %vm443, %v2183, %v2184
      %v2198 = vsel %vm443, %v2190, %v2183
      %v2199 = vrot.slane %v2175, 1
      %v2200 = vrot.slane %v2176, 1
      %v2201 = vrot.slane %v2177, 1
      %v2202 = vrot.slane %v2178, 1
      %v2203 = vrot.slane %v2179, 1
      %v2204 = vrot.slane %v2180, 1
      %v2205 = vrot.slane %v2181, 1
      %v2206 = vrot.slane %v2182, 1
      %v2207 = vsel %vm460, %v2205, %v2206
      %v2208 = vsel %vm460, %v2204, %v2205
      %v2209 = vsel %vm460, %v2203, %v2204
      %v2210 = vsel %vm460, %v2202, %v2203
      %v2211 = vsel %vm460, %v2201, %v2202
      %v2212 = vsel %vm460, %v2200, %v2201
      %v2213 = vsel %vm460, %v2199, %v2200
      %v2214 = vsel %vm460, %v2206, %v2199
      %v2215 = vpack.c.bf16 %v2176, %v2175
      %v2216 = vpack.c.bf16 %v2178, %v2177
      %v2217 = vpack.c.bf16 %v2180, %v2179
      %v2218 = vpack.c.bf16 %v2182, %v2181
      %s2219 = scalar_lea.vmem %s4, 14
      %v2220 = vld [vmem:[%s2219] sm:$0x3]
      %v2221 = vpack.c.bf16 %v2197, %v2198
      %v2222 = vpack.c.bf16 %v2195, %v2196
      %v2223 = vpack.c.bf16 %v2193, %v2194
      %v2224 = vpack.c.bf16 %v2191, %v2192
      %s2225 = scalar_lea.vmem %s4, 12
      %v2226 = vld [vmem:[%s2225] sm:$0x3]
      %v2228 = vsel %vm480, %v2221, 0
      %v2231 = vsel %vm480, %v2222, 0
      %v2234 = vsel %vm480, %v2223, 0
      %v2237 = vsel %vm480, %v2224, 0
      %v2240 = vsel %vm493, %v2226, 0
      %2242 = vmatprep.subr.bf16.mxu0 0
      %2243 = vmatpush1.bf16.msra.mxu0 %v2240
      %2244 = vmatprep.subr.bf16.mxu0 0
      %2245 = vmatpush1.bf16.msra.mxu0 0
      %2246 = vmatprep.subr.bf16.mxu0 0
      %2247 = vmatpush1.bf16.msra.mxu0 0
      %2248 = vmatprep.subr.bf16.mxu0 0
      %2249 = vmatpush1.bf16.msra.mxu0 0
      %2250 = vmatprep.subr.bf16.mxu0 0
      %2251 = vmatpush1.bf16.msra.mxu0 0
      %2252 = vmatprep.subr.bf16.mxu0 0
      %2253 = vmatpush1.bf16.msra.mxu0 0
      %2254 = vmatprep.subr.bf16.mxu0 0
      %2255 = vmatpush1.bf16.msra.mxu0 0
      %2256 = vmatprep.subr.bf16.mxu0 0
      %2257 = vmatpush1.bf16.msra.mxu0 0
      %2258 = vmatprep.subr.bf16.mxu0 0
      %2259 = vmatpush1.bf16.msra.mxu0 0
      %2260 = vmatprep.subr.bf16.mxu0 0
      %2261 = vmatpush1.bf16.msra.mxu0 0
      %2262 = vmatprep.subr.bf16.mxu0 0
      %2263 = vmatpush1.bf16.msra.mxu0 0
      %2264 = vmatprep.subr.bf16.mxu0 0
      %2265 = vmatpush1.bf16.msra.mxu0 0
      %2266 = vmatprep.subr.bf16.mxu0 0
      %2267 = vmatpush1.bf16.msra.mxu0 0
      %2268 = vmatprep.subr.bf16.mxu0 0
      %2269 = vmatpush1.bf16.msra.mxu0 0
      %2270 = vmatprep.subr.bf16.mxu0 0
      %2271 = vmatpush1.bf16.msra.mxu0 0
      %2272 = vmatprep.subr.bf16.mxu0 0
      %2273 = vmatpush1.bf16.msra.mxu0 0
      %2274 = vmatprep.mubr.bf16.mxu0 0
      %2275 = vmatmul.mubr.bf16.gmra.mrb[0].mxu0 %v2228
      %v2276 = vpop.f32.mrb[0].mxu0
      %v2277 = vpop.f32.mrb[0].mxu0
      %v2278 = vpop.f32.mrb[0].mxu0
      %v2279 = vpop.f32.mrb[0].mxu0
      %2280 = vmatprep.mubr.bf16.mxu0 0
      %2281 = vmatmul.mubr.bf16.gmra.mrb[0].mxu0 %v2231
      %v2282 = vpop.f32.mrb[0].mxu0
      %v2283 = vadd.f32 0.0, %v2282
      %v2284 = vpop.f32.mrb[0].mxu0
      %v2285 = vpop.f32.mrb[0].mxu0
      %v2286 = vadd.f32 0.0, %v2285
      %v2287 = vpop.f32.mrb[0].mxu0
      %2288 = vmatprep.mubr.bf16.mxu0 0
      %2289 = vmatmul.mubr.bf16.gmra.mrb[0].mxu0 %v2234
      %v2290 = vpop.f32.mrb[0].mxu0
      %v2291 = vadd.f32 0.0, %v2290
      %v2292 = vpop.f32.mrb[0].mxu0
      %v2293 = vpop.f32.mrb[0].mxu0
      %v2294 = vadd.f32 0.0, %v2293
      %v2295 = vpop.f32.mrb[0].mxu0
      %2296 = vmatprep.mubr.bf16.mxu0 0
      %2297 = vmatmul.mubr.bf16.gmra.mrb[0].mxu0 %v2237
      %v2298 = vpop.f32.mrb[0].mxu0
      %v2299 = vpop.f32.mrb[0].mxu0
      %v2300 = vpop.f32.mrb[0].mxu0
      %v2301 = vpop.f32.mrb[0].mxu0
      %2302 = vdwg.mxu0
      %v2304 = vsel %vm480, %v2215, 0
      %v2307 = vsel %vm480, %v2216, 0
      %v2310 = vsel %vm480, %v2217, 0
      %v2313 = vsel %vm480, %v2218, 0
      %v2316 = vsel %vm493, %v2220, 0
      %2318 = vmatprep.subr.bf16.mxu0 0
      %2319 = vmatpush1.bf16.msra.mxu0 %v2316
      %2320 = vmatprep.subr.bf16.mxu0 0
      %2321 = vmatpush1.bf16.msra.mxu0 0
      %2322 = vmatprep.subr.bf16.mxu0 0
      %2323 = vmatpush1.bf16.msra.mxu0 0
      %2324 = vmatprep.subr.bf16.mxu0 0
      %2325 = vmatpush1.bf16.msra.mxu0 0
      %2326 = vmatprep.subr.bf16.mxu0 0
      %2327 = vmatpush1.bf16.msra.mxu0 0
      %2328 = vmatprep.subr.bf16.mxu0 0
      %2329 = vmatpush1.bf16.msra.mxu0 0
      %2330 = vmatprep.subr.bf16.mxu0 0
      %2331 = vmatpush1.bf16.msra.mxu0 0
      %2332 = vmatprep.subr.bf16.mxu0 0
      %2333 = vmatpush1.bf16.msra.mxu0 0
      %2334 = vmatprep.subr.bf16.mxu0 0
      %2335 = vmatpush1.bf16.msra.mxu0 0
      %2336 = vmatprep.subr.bf16.mxu0 0
      %2337 = vmatpush1.bf16.msra.mxu0 0
      %2338 = vmatprep.subr.bf16.mxu0 0
      %2339 = vmatpush1.bf16.msra.mxu0 0
      %2340 = vmatprep.subr.bf16.mxu0 0
      %2341 = vmatpush1.bf16.msra.mxu0 0
      %2342 = vmatprep.subr.bf16.mxu0 0
      %2343 = vmatpush1.bf16.msra.mxu0 0
      %2344 = vmatprep.subr.bf16.mxu0 0
      %2345 = vmatpush1.bf16.msra.mxu0 0
      %2346 = vmatprep.subr.bf16.mxu0 0
      %2347 = vmatpush1.bf16.msra.mxu0 0
      %2348 = vmatprep.subr.bf16.mxu0 0
      %2349 = vmatpush1.bf16.msra.mxu0 0
      %2350 = vmatprep.mubr.bf16.mxu0 0
      %2351 = vmatmul.mubr.bf16.gmra.mrb[0].mxu0 %v2304
      %v2352 = vpop.f32.mrb[0].mxu0
      %v2353 = vpop.f32.mrb[0].mxu0
      %v2354 = vpop.f32.mrb[0].mxu0
      %v2355 = vpop.f32.mrb[0].mxu0
      %2356 = vmatprep.mubr.bf16.mxu0 0
      %2357 = vmatmul.mubr.bf16.gmra.mrb[0].mxu0 %v2307
      %v2358 = vpop.f32.mrb[0].mxu0
      %v2359 = vadd.f32 %v2283, %v2358
      %v2360 = vpop.f32.mrb[0].mxu0
      %v2361 = vpop.f32.mrb[0].mxu0
      %v2362 = vadd.f32 %v2286, %v2361
      %v2363 = vpop.f32.mrb[0].mxu0
      %2364 = vmatprep.mubr.bf16.mxu0 0
      %2365 = vmatmul.mubr.bf16.gmra.mrb[0].mxu0 %v2310
      %v2366 = vpop.f32.mrb[0].mxu0
      %v2367 = vadd.f32 %v2291, %v2366
      %v2368 = vpop.f32.mrb[0].mxu0
      %v2369 = vpop.f32.mrb[0].mxu0
      %v2370 = vadd.f32 %v2294, %v2369
      %v2371 = vpop.f32.mrb[0].mxu0
      %2372 = vmatprep.mubr.bf16.mxu0 0
      %2373 = vmatmul.mubr.bf16.gmra.mrb[0].mxu0 %v2313
      %v2374 = vpop.f32.mrb[0].mxu0
      %v2375 = vpop.f32.mrb[0].mxu0
      %v2376 = vpop.f32.mrb[0].mxu0
      %v2377 = vpop.f32.mrb[0].mxu0
      %2378 = vdwg.mxu0
      %v2379 = vpack.c.bf16 %v2212, %v2213
      %v2380 = vpack.c.bf16 %v2210, %v2211
      %v2381 = vpack.c.bf16 %v2208, %v2209
      %v2382 = vpack.c.bf16 %v2214, %v2207
      %s2383 = scalar_lea.vmem %s4, 16
      %v2384 = vld [vmem:[%s2383] sm:$0x3]
      %v2386 = vsel %vm480, %v2379, 0
      %v2389 = vsel %vm480, %v2380, 0
      %v2392 = vsel %vm480, %v2381, 0
      %v2395 = vsel %vm480, %v2382, 0
      %v2398 = vsel %vm493, %v2384, 0
      %2400 = vmatprep.subr.bf16.mxu0 0
      %2401 = vmatpush1.bf16.msra.mxu0 %v2398
      %2402 = vmatprep.subr.bf16.mxu0 0
      %2403 = vmatpush1.bf16.msra.mxu0 0
      %2404 = vmatprep.subr.bf16.mxu0 0
      %2405 = vmatpush1.bf16.msra.mxu0 0
      %2406 = vmatprep.subr.bf16.mxu0 0
      %2407 = vmatpush1.bf16.msra.mxu0 0
      %2408 = vmatprep.subr.bf16.mxu0 0
      %2409 = vmatpush1.bf16.msra.mxu0 0
      %2410 = vmatprep.subr.bf16.mxu0 0
      %2411 = vmatpush1.bf16.msra.mxu0 0
      %2412 = vmatprep.subr.bf16.mxu0 0
      %2413 = vmatpush1.bf16.msra.mxu0 0
      %2414 = vmatprep.subr.bf16.mxu0 0
      %2415 = vmatpush1.bf16.msra.mxu0 0
      %2416 = vmatprep.subr.bf16.mxu0 0
      %2417 = vmatpush1.bf16.msra.mxu0 0
      %2418 = vmatprep.subr.bf16.mxu0 0
      %2419 = vmatpush1.bf16.msra.mxu0 0
      %2420 = vmatprep.subr.bf16.mxu0 0
      %2421 = vmatpush1.bf16.msra.mxu0 0
      %2422 = vmatprep.subr.bf16.mxu0 0
      %2423 = vmatpush1.bf16.msra.mxu0 0
      %2424 = vmatprep.subr.bf16.mxu0 0
      %2425 = vmatpush1.bf16.msra.mxu0 0
      %2426 = vmatprep.subr.bf16.mxu0 0
      %2427 = vmatpush1.bf16.msra.mxu0 0
      %2428 = vmatprep.subr.bf16.mxu0 0
      %2429 = vmatpush1.bf16.msra.mxu0 0
      %2430 = vmatprep.subr.bf16.mxu0 0
      %2431 = vmatpush1.bf16.msra.mxu0 0
      %2432 = vmatprep.mubr.bf16.mxu0 0
      %2433 = vmatmul.mubr.bf16.gmra.mrb[0].mxu0 %v2386
      %v2434 = vpop.f32.mrb[0].mxu0
      %v2435 = vpop.f32.mrb[0].mxu0
      %v2436 = vpop.f32.mrb[0].mxu0
      %v2437 = vpop.f32.mrb[0].mxu0
      %2438 = vmatprep.mubr.bf16.mxu0 0
      %2439 = vmatmul.mubr.bf16.gmra.mrb[0].mxu0 %v2389
      %v2440 = vpop.f32.mrb[0].mxu0
      %v2441 = vadd.f32 0.0, %v2440
      %v2442 = vpop.f32.mrb[0].mxu0
      %v2443 = vpop.f32.mrb[0].mxu0
      %v2444 = vadd.f32 0.0, %v2443
      %v2445 = vpop.f32.mrb[0].mxu0
      %2446 = vmatprep.mubr.bf16.mxu0 0
      %2447 = vmatmul.mubr.bf16.gmra.mrb[0].mxu0 %v2392
      %v2448 = vpop.f32.mrb[0].mxu0
      %v2449 = vadd.f32 0.0, %v2448
      %v2450 = vpop.f32.mrb[0].mxu0
      %v2451 = vpop.f32.mrb[0].mxu0
      %v2452 = vadd.f32 0.0, %v2451
      %v2453 = vpop.f32.mrb[0].mxu0
      %2454 = vmatprep.mubr.bf16.mxu0 0
      %2455 = vmatmul.mubr.bf16.gmra.mrb[0].mxu0 %v2395
      %v2456 = vpop.f32.mrb[0].mxu0
      %v2457 = vpop.f32.mrb[0].mxu0
      %v2458 = vpop.f32.mrb[0].mxu0
      %v2459 = vpop.f32.mrb[0].mxu0
      %2460 = vdwg.mxu0
      %v2461 = vadd.f32 %v2359, %v2441
      %v2462 = vadd.f32 %v2362, %v2444
      %v2463 = vadd.f32 %v2367, %v2449
      %v2464 = vadd.f32 %v2370, %v2452
      %s2465 = scalar_lea.vmem %s5, 2
      %v2466 = vld [vmem:[%s2465] sm:$0x1]
      %v2468 = vlaneseq
      %v2469 = vshrl.u32 %v2468, 7
      %v2470 = vsub.s32 0, %v2469
      %v2471 = vrot.slane %v2466, %v2470
      %v2473 = vadd.f32 %v2461, %v2471
      %v2474 = vadd.f32 %v2462, %v2471
      %v2475 = vadd.f32 %v2463, %v2471
      %v2476 = vadd.f32 %v2464, %v2471
      %v2477 = vadd.f32 %v1799, %v2473
      %v2478 = vadd.f32 %v1800, %v2474
      %v2479 = vadd.f32 %v1801, %v2475
      %v2480 = vadd.f32 %v1802, %v2476
      %2481 = vst.msk [vmem:[%s332] sm:$0xff] %vm480, %v2477
      %2482 = vst.msk [vmem:[%s332 + $0x8] sm:$0xff] %vm480, %v2478
      %2483 = vst.msk [vmem:[%s332 + $0x10] sm:$0xff] %vm480, %v2479
      %2484 = vst.msk [vmem:[%s332 + $0x18] sm:$0xff] %vm480, %v2480
      %s2485 = smul.u32 4, %s22
      %p2486 = scmp.lt.s32.totalorder %s21, 1
      %s2487 = scalar_select %p2486, %s21, 1
      %p2488 = scmp.lt.s32.totalorder %s2485, 3
      %s2489 = scalar_select %p2488, %s2485, 3
      %s2490 = smul.addr %s2487, 4
      %s2491 = sadd.s32 %s2489, %s2490
      %s2492 = smul.addr %s2491, 8
      %s2493 = scalar_lea.vmem %s6, %s2492
      // Predicated region
      $region45: #{tpu_custom_call.1} parent=43 // pred_check
        %p2494 = pneg %p191
      $region46: #{tpu_custom_call.1} parent=43 // pred_check_branch
        %2496 = sbr.rel (%p2494) target = $region48
      $region47: #{tpu_custom_call.1} parent=43 // pred_region
        %s2497 = smul.u32 4, %s22
      $region48: #{tpu_custom_call.1} parent=43 // pred_fallthru
        _
    $region44: #{tpu_custom_call.1} parent=5 // pred_fallthru
      _
    %p2498 = scmp.le.s32.totalorder 2, %s12
    // Predicated region
    $region49: #{tpu_custom_call.1} parent=5 // pred_check
      %p2499 = pneg %p2498
    $region50: #{tpu_custom_call.1} parent=5 // pred_check_branch
      %2501 = sbr.rel (%p2499) target = $region52
    $region51: #{tpu_custom_call.1} parent=5 // pred_region
      %s2502 = ssub.s32 %s12, 2
      // Predicated region
      $region53: #{tpu_custom_call.1} parent=51 // pred_check
        %p2503 = pneg %p197
      $region54: #{tpu_custom_call.1} parent=51 // pred_check_branch
        %2505 = sbr.rel (%p2503) target = $region56
      $region55: #{tpu_custom_call.1} parent=51 // pred_region
        %s2506 = smul.u32 4, %s24
        %p2507 = scmp.lt.s32.totalorder %s23, 1
        %s2508 = scalar_select %p2507, %s23, 1
        %p2509 = scmp.lt.s32.totalorder %s2506, 3
        %s2510 = scalar_select %p2509, %s2506, 3
        %s2511 = smul.addr %s2508, 4
        %s2512 = sadd.s32 %s2510, %s2511
        %s2513 = smul.addr %s2512, 8
        %s2514 = scalar_lea.vmem %s6, %s2513
      $region56: #{tpu_custom_call.1} parent=51 // pred_fallthru
        _
    $region52: #{tpu_custom_call.1} parent=5 // pred_fallthru
      _
  $region6: #{tpu_custom_call.1} parent=0 // loop_footer
    %s16 = sadd.s32 1, %s12
  $region7: #{tpu_custom_call.1} parent=0 // loop_footer_branch
    %11 = sbr.rel target = $region3
  $region8: #{tpu_custom_call.1} parent=0 // loop_exit
    _

</llo_original>
